<compile_context>
chip_gen: v7x
topology: tpu7x:2x2x1
jax: 0.10.0
libtpu: 0.0.40
codegen_flags: <defaults>
</compile_context>

<pallas_src>
import functools

import jax
import jax.numpy as jnp
from jax.experimental import pallas as pl
from jax.experimental.pallas import tpu as pltpu

LN_EPS = 1e-5                     # torch.nn.LayerNorm default
_INV_SQRT2 = 0.7071067811865476   # hoisted GELU constant


def _layernorm_f32(x, gamma, beta):
    # two-pass statistics (mean, then variance of the centered values), biased var like torch
    mu = jnp.mean(x, axis=-1, keepdims=True)
    xc = x - mu
    var = jnp.mean(xc * xc, axis=-1, keepdims=True)
    return xc * jax.lax.rsqrt(var + LN_EPS) * gamma + beta


# --------------------------- fused layer kernel ------------------------------
def layer_kernel(x_ref,
                 ag_ref, ab_ref, wqkv_ref, cosf_ref, sinf_ref, wo_ref,
                 fg_ref, fb_ref, w1a_ref, b1a_ref, w1g_ref, b1g_ref, w2_ref, b2_ref,
                 o_ref, *attn_out_ref, heads, dim_head, q_tile):
    x = x_ref[0].astype(jnp.float32)                          # (N, D) residual stream, f32
    N, D = x.shape
    inner = heads * dim_head

    # ----------------------------- attention ---------------------------------
    xn = _layernorm_f32(x, ag_ref[...], ab_ref[...]).astype(jnp.bfloat16)

    # single lane-dense projection: (N, D) @ (D, 5*inner)
    #   columns: [ q (scaled, rope layout) | q sin-partner | k (rope layout) | k sin-partner | v ]
    p = jnp.dot(xn, wqkv_ref[...], preferred_element_type=jnp.float32)
    cosf = cosf_ref[...]
    sinf = sinf_ref[...]
    # RoPE as pure elementwise full-width VPU work (sign of the partner folded into the weight)
    q = p[:, 0 * inner:1 * inner] * cosf + p[:, 1 * inner:2 * inner] * sinf
    k = p[:, 2 * inner:3 * inner] * cosf + p[:, 3 * inner:4 * inner] * sinf
    v = p[:, 4 * inner:5 * inner]

    def heads_major(t):  # (N, inner) -> (heads, N, dim_head) bf16 (pure relayout, no matmul)
        return jnp.stack(
            [t[:, h * dim_head:(h + 1) * dim_head] for h in range(heads)], axis=0
        ).astype(jnp.bfloat16)

    qh = heads_major(q)
    kh = heads_major(k)
    vh = heads_major(v)

    # query-tiled attention: live score tile is (heads, q_tile, N) instead of (heads, N, N)
    n_tiles = pl.cdiv(N, q_tile)
    ctx_tiles = []
    for t in range(n_tiles):
        lo = t * q_tile
        hi = min(N, lo + q_tile)
        qt = qh[:, lo:hi, :]                                            # (heads, tq, dh)
        sim = jnp.einsum('hnd,hmd->hnm', qt, kh,
                         preferred_element_type=jnp.float32)            # (heads, tq, N)
        sim = sim - jnp.max(sim, axis=-1, keepdims=True)
        e = jnp.exp(sim)
        attn = e * pl.reciprocal(jnp.sum(e, axis=-1, keepdims=True), approx=True)
        if attn_out_ref:                                                # static: only if requested
            attn_out_ref[0][0, :, lo:hi, :] = attn.astype(attn_out_ref[0].dtype)
        # attn dropout is identity (eval / p = 0.0)
        ctx = jnp.einsum('hnm,hmd->hnd', attn.astype(jnp.bfloat16), vh,
                         preferred_element_type=jnp.float32)            # (heads, tq, dh)
        # fold heads back into the lane dim for the 2-D out-projection
        ctx_tiles.append(jnp.concatenate([ctx[h] for h in range(heads)], axis=-1))
    ctx2d = ctx_tiles[0] if n_tiles == 1 else jnp.concatenate(ctx_tiles, axis=0)   # (N, inner)

    # out-projection: head-sum fused into the MXU contraction, + residual
    x = jnp.dot(ctx2d.astype(jnp.bfloat16), wo_ref[...],
                preferred_element_type=jnp.float32) + x                 # (N, D)

    # ------------------------- feed-forward (GEGLU) ---------------------------
    yn = _layernorm_f32(x, fg_ref[...], fb_ref[...]).astype(jnp.bfloat16)
    a = jnp.dot(yn, w1a_ref[...], preferred_element_type=jnp.float32) + b1a_ref[...]
    g = jnp.dot(yn, w1g_ref[...], preferred_element_type=jnp.float32) + b1g_ref[...]
    gelu_g = 0.5 * g * (1.0 + jax.lax.erf(g * _INV_SQRT2))              # exact erf GELU
    # ff dropout is identity (eval / p = 0.0)
    h = (a * gelu_g).astype(jnp.bfloat16)
    y = jnp.dot(h, w2_ref[...], preferred_element_type=jnp.float32) + b2_ref[...]
    o_ref[0] = (y + x).astype(o_ref.dtype)                              # + residual


# ----------------------------- Pallas wrapper --------------------------------
def _const_spec(shape):
    """Grid-invariant (weight / table) BlockSpec, single-buffered if supported."""
    idx = lambda b: (0,) * len(shape)
    if hasattr(pl, "Buffered"):
        try:
            return pl.BlockSpec(shape, idx, pipeline_mode=pl.Buffered(1))
        except TypeError:
            pass
    return pl.BlockSpec(shape, idx)


def _vmem_limit_bytes():
    # generation-aware scoped-VMEM limit: ~85% of physical (108 MiB v5e/v6e, ~54 MiB v7x)
    try:
        cap = pltpu.get_tpu_info().vmem_capacity_bytes
    except Exception:
        cap = 64 * 1024 * 1024
    return int(cap * 0.85)


def transformer_layer(x, ap, fp, cosf, sinf, *, heads, dim_head, return_attn):
    B, N, D = x.shape
    inner = heads * dim_head
    hidden = fp["w1a"].shape[1]
    q_tile = min(N, 256)

    kern = functools.partial(layer_kernel, heads=heads, dim_head=dim_head, q_tile=q_tile)

    in_specs = [
        pl.BlockSpec((1, N, D), lambda b: (b, 0, 0)),                  # x
        _const_spec((1, D)), _const_spec((1, D)),                      # attn LN gamma/beta
        _const_spec((D, 5 * inner)),                                   # fused qkv + rope-partner
        _const_spec((N, inner)), _const_spec((N, inner)),              # cos / sin (full width)
        _const_spec((inner, D)),                                       # wo
        _const_spec((1, D)), _const_spec((1, D)),                      # ff LN gamma/beta
        _const_spec((D, hidden)), _const_spec((1, hidden)),            # w1a, b1a
        _const_spec((D, hidden)), _const_spec((1, hidden)),            # w1g, b1g
        _const_spec((hidden, D)), _const_spec((1, D)),                 # w2, b2
    ]

    out_x_shape = jax.ShapeDtypeStruct((B, N, D), jnp.bfloat16)
    out_x_spec = pl.BlockSpec((1, N, D), lambda b: (b, 0, 0))
    if return_attn:
        out_shape = (out_x_shape, jax.ShapeDtypeStruct((B, heads, N, N), jnp.bfloat16))
        out_specs = (out_x_spec, pl.BlockSpec((1, heads, N, N), lambda b: (b, 0, 0, 0)))
    else:
        out_shape = out_x_shape
        out_specs = out_x_spec

    call = pl.pallas_call(
        kern,
        out_shape=out_shape,
        grid=(B,),
        in_specs=in_specs,
        out_specs=out_specs,
        compiler_params=pltpu.CompilerParams(
            dimension_semantics=("parallel",),
            vmem_limit_bytes=_vmem_limit_bytes()),
    )
    args = (x,
            ap["ln_g"], ap["ln_b"], ap["wqkv"], cosf, sinf, ap["wo"],
            fp["ln_g"], fp["ln_b"], fp["w1a"], fp["b1a"], fp["w1g"], fp["b1g"],
            fp["w2"], fp["b2"])
    out = call(*args)
    if return_attn:
        return out[0], out[1]
    return out, None


def transformer_forward(x, layers, cosf, sinf, *, heads, dim_head, return_attn=False):
    attns = []
    for ap, fp in layers:
        x, attn = transformer_layer(x, ap, fp, cosf, sinf, heads=heads, dim_head=dim_head,
                                    return_attn=return_attn)
        if return_attn:
            attns.append(attn)
    if not return_attn:
        return x
    return x, jnp.stack(attns)


# --------------------- host-side parameter / RoPE preparation ----------------
def init_canonical_params(key, dim, depth, heads, dim_head):
    """Parameters in the canonical (torch-like) layout."""
    inner = heads * dim_head
    hidden = 4 * dim
    layers = []
    for _ in range(depth):
        key, k1, k2, k3, k4 = jax.random.split(key, 5)
        attn_p = {
            "ln_g": jnp.ones((dim,), jnp.float32),
            "ln_b": jnp.zeros((dim,), jnp.float32),
            "wqkv": jax.random.normal(k1, (dim, 3 * inner), jnp.float32) / jnp.sqrt(dim),
            "wout": jax.random.normal(k2, (inner, dim), jnp.float32) / jnp.sqrt(inner),
        }
        ff_p = {
            "ln_g": jnp.ones((dim,), jnp.float32),
            "ln_b": jnp.zeros((dim,), jnp.float32),
            "w1": jax.random.normal(k3, (dim, 2 * hidden), jnp.float32) / jnp.sqrt(dim),
            "b1": jnp.zeros((2 * hidden,), jnp.float32),
            "w2": jax.random.normal(k4, (hidden, dim), jnp.float32) / jnp.sqrt(hidden),
            "b2": jnp.zeros((dim,), jnp.float32),
        }
        layers.append((attn_p, ff_p))
    return layers


def _rope_perm(dim_head, d_rope):
    evens = list(range(0, d_rope, 2))
    odds = list(range(1, d_rope, 2))
    rest = list(range(d_rope, dim_head))
    return jnp.array(evens + odds + rest, dtype=jnp.int32)


def prepare_layer_params(attn_p, ff_p, heads, dim_head, d_rope):
    """Canonical params -> kernel layout: rope-permuted, scale folded, sin-partner columns
    fused into one (D, 5*inner) projection weight, GEGLU weight split, bf16 weights."""
    dim = attn_p["wqkv"].shape[0]
    inner = heads * dim_head
    hidden = ff_p["w2"].shape[0]
    hr = d_rope // 2
    scale = dim_head ** -0.5
    perm = _rope_perm(dim_head, d_rope)

    wq, wk, wv = jnp.split(attn_p["wqkv"], 3, axis=1)          # (dim, inner) each

    def rope_cols(w):                                          # per-head [evens | odds | pass]
        return w.reshape(dim, heads, dim_head)[:, :, perm]

    def sin_partner(wp):                                       # signed swap of the rope halves
        t1 = wp[:, :, :hr]
        t2 = wp[:, :, hr:d_rope]
        rest = jnp.zeros_like(wp[:, :, d_rope:])
        return jnp.concatenate([-t2, t1, rest], axis=-1)

    wq_p = rope_cols(wq) * scale                               # softmax scale folded into wq
    wk_p = rope_cols(wk)
    wqkv = jnp.concatenate(
        [wq_p.reshape(dim, inner), sin_partner(wq_p).reshape(dim, inner),
         wk_p.reshape(dim, inner), sin_partner(wk_p).reshape(dim, inner),
         wv], axis=1).astype(jnp.bfloat16)                     # (dim, 5*inner)

    ap = {
        "ln_g": attn_p["ln_g"].reshape(1, dim).astype(jnp.float32),
        "ln_b": attn_p["ln_b"].reshape(1, dim).astype(jnp.float32),
        "wqkv": wqkv,
        "wo": attn_p["wout"].astype(jnp.bfloat16),             # (inner, dim)
    }
    fp = {
        "ln_g": ff_p["ln_g"].reshape(1, dim).astype(jnp.float32),
        "ln_b": ff_p["ln_b"].reshape(1, dim).astype(jnp.float32),
        "w1a": ff_p["w1"][:, :hidden].astype(jnp.bfloat16),
        "w1g": ff_p["w1"][:, hidden:].astype(jnp.bfloat16),
        "b1a": ff_p["b1"][:hidden].reshape(1, hidden).astype(jnp.float32),
        "b1g": ff_p["b1"][hidden:].reshape(1, hidden).astype(jnp.float32),
        "w2": ff_p["w2"].astype(jnp.bfloat16),
        "b2": ff_p["b2"].reshape(1, dim).astype(jnp.float32),
    }
    return ap, fp


def build_rope_tables(seq_len, d_rope, heads, dim_head, base=10000.0):
    # TODO(synk): RotaryPositionalEmbeddings source not provided; assumes torchtune-style
    # interleaved RoPE over the first d_rope dims of each head (pass-through beyond d_rope).
    hr = d_rope // 2
    theta = 1.0 / (base ** (jnp.arange(hr, dtype=jnp.float32) * 2.0 / d_rope))
    ang = jnp.arange(seq_len, dtype=jnp.float32)[:, None] * theta[None, :]    # (N, hr)
    pad = dim_head - d_rope
    cos_h = jnp.concatenate([jnp.cos(ang), jnp.cos(ang),
                             jnp.ones((seq_len, pad), jnp.float32)], axis=1)  # (N, dim_head)
    sin_h = jnp.concatenate([jnp.sin(ang), jnp.sin(ang),
                             jnp.zeros((seq_len, pad), jnp.float32)], axis=1)
    return jnp.tile(cos_h, (1, heads)), jnp.tile(sin_h, (1, heads))           # (N, inner)


if __name__ == "__main__":
    # small, forward-consistent shapes
    B, N = 2, 8
    dim, depth, heads, dim_head = 32, 2, 2, 16
    d_rope = 16                     # dim_rope_seq = N; attn_dropout = ff_dropout = 0.0

    key = jax.random.PRNGKey(0)
    key, kx = jax.random.split(key)
    x = jax.random.normal(kx, (B, N, dim), jnp.float32).astype(jnp.bfloat16)

    canonical = init_canonical_params(key, dim, depth, heads, dim_head)
    layers = [prepare_layer_params(ap, fp, heads, dim_head, d_rope) for ap, fp in canonical]
    cosf, sinf = build_rope_tables(N, d_rope, heads, dim_head)

    fwd = jax.jit(functools.partial(transformer_forward, heads=heads, dim_head=dim_head,
                                    return_attn=True))
    out, attns = fwd(x, layers, cosf, sinf)
    jax.block_until_ready((out, attns))
    assert out.shape == (B, N, dim)
    assert attns.shape == (depth, B, heads, N, N)
    assert bool(jnp.all(jnp.isfinite(out.astype(jnp.float32))))
    print("KERNEL_OK")
</pallas_src>

<mosaic_0001>
module attributes {stable_mosaic.version = 11 : i64} {
  func.func @layer_kernel(%arg0: i32, %arg1: memref<1x8x32xbf16, #tpu.memory_space<vmem>>, %arg2: memref<1x32xf32, #tpu.memory_space<vmem>>, %arg3: memref<1x32xf32, #tpu.memory_space<vmem>>, %arg4: memref<32x160xbf16, #tpu.memory_space<vmem>>, %arg5: memref<8x32xf32, #tpu.memory_space<vmem>>, %arg6: memref<8x32xf32, #tpu.memory_space<vmem>>, %arg7: memref<32x32xbf16, #tpu.memory_space<vmem>>, %arg8: memref<1x32xf32, #tpu.memory_space<vmem>>, %arg9: memref<1x32xf32, #tpu.memory_space<vmem>>, %arg10: memref<32x128xbf16, #tpu.memory_space<vmem>>, %arg11: memref<1x128xf32, #tpu.memory_space<vmem>>, %arg12: memref<32x128xbf16, #tpu.memory_space<vmem>>, %arg13: memref<1x128xf32, #tpu.memory_space<vmem>>, %arg14: memref<128x32xbf16, #tpu.memory_space<vmem>>, %arg15: memref<1x32xf32, #tpu.memory_space<vmem>>, %arg16: memref<1x8x32xbf16, #tpu.memory_space<vmem>>, %arg17: memref<1x2x8x8xbf16, #tpu.memory_space<vmem>>) attributes {dimension_semantics = [#tpu.dimension_semantics<parallel>], iteration_bounds = array<i64: 2>, scalar_prefetch = 0 : i64, scratch_operands = 0 : i64, tpu.core_type = #tpu.core_type<tc>, window_params = [{transform_indices = @transform_0, window_bounds = array<i64: 1, 8, 32>}, {pipeline_mode = #tpu.pipeline_mode<synchronous>, transform_indices = @transform_1, window_bounds = array<i64: 1, 32>}, {pipeline_mode = #tpu.pipeline_mode<synchronous>, transform_indices = @transform_2, window_bounds = array<i64: 1, 32>}, {pipeline_mode = #tpu.pipeline_mode<synchronous>, transform_indices = @transform_3, window_bounds = array<i64: 32, 160>}, {pipeline_mode = #tpu.pipeline_mode<synchronous>, transform_indices = @transform_4, window_bounds = array<i64: 8, 32>}, {pipeline_mode = #tpu.pipeline_mode<synchronous>, transform_indices = @transform_5, window_bounds = array<i64: 8, 32>}, {pipeline_mode = #tpu.pipeline_mode<synchronous>, transform_indices = @transform_6, window_bounds = array<i64: 32, 32>}, {pipeline_mode = #tpu.pipeline_mode<synchronous>, transform_indices = @transform_7, window_bounds = array<i64: 1, 32>}, {pipeline_mode = #tpu.pipeline_mode<synchronous>, transform_indices = @transform_8, window_bounds = array<i64: 1, 32>}, {pipeline_mode = #tpu.pipeline_mode<synchronous>, transform_indices = @transform_9, window_bounds = array<i64: 32, 128>}, {pipeline_mode = #tpu.pipeline_mode<synchronous>, transform_indices = @transform_10, window_bounds = array<i64: 1, 128>}, {pipeline_mode = #tpu.pipeline_mode<synchronous>, transform_indices = @transform_11, window_bounds = array<i64: 32, 128>}, {pipeline_mode = #tpu.pipeline_mode<synchronous>, transform_indices = @transform_12, window_bounds = array<i64: 1, 128>}, {pipeline_mode = #tpu.pipeline_mode<synchronous>, transform_indices = @transform_13, window_bounds = array<i64: 128, 32>}, {pipeline_mode = #tpu.pipeline_mode<synchronous>, transform_indices = @transform_14, window_bounds = array<i64: 1, 32>}, {transform_indices = @transform_15, window_bounds = array<i64: 1, 8, 32>}, {transform_indices = @transform_16, window_bounds = array<i64: 1, 2, 8, 8>}]} {
    %c0 = arith.constant 0 : index
    %c0_0 = arith.constant 0 : index
    %c0_1 = arith.constant 0 : index
    %0 = vector.load %arg1[%c0, %c0_0, %c0_1] : memref<1x8x32xbf16, #tpu.memory_space<vmem>>, vector<1x8x32xbf16>
    %1 = vector.shape_cast %0 : vector<1x8x32xbf16> to vector<8x32xbf16>
    %2 = arith.extf %1 : vector<8x32xbf16> to vector<8x32xf32>
    %c0_2 = arith.constant 0 : index
    %c0_3 = arith.constant 0 : index
    %3 = vector.load %arg2[%c0_2, %c0_3] : memref<1x32xf32, #tpu.memory_space<vmem>>, vector<1x32xf32>
    %c0_4 = arith.constant 0 : index
    %c0_5 = arith.constant 0 : index
    %4 = vector.load %arg3[%c0_4, %c0_5] : memref<1x32xf32, #tpu.memory_space<vmem>>, vector<1x32xf32>
    %cst = arith.constant dense<0.000000e+00> : vector<8xf32>
    %5 = vector.multi_reduction <add>, %2, %cst [1] : vector<8x32xf32> to vector<8xf32>
    %6 = vector.shape_cast %5 : vector<8xf32> to vector<8x1xf32>
    %cst_6 = arith.constant 3.200000e+01 : f32
    %7 = vector.broadcast %cst_6 : f32 to vector<8x1xf32>
    %8 = arith.divf %6, %7 : vector<8x1xf32>
    %9 = vector.broadcast %8 : vector<8x1xf32> to vector<8x32xf32>
    %10 = arith.subf %2, %9 : vector<8x32xf32>
    %11 = arith.mulf %10, %10 : vector<8x32xf32>
    %cst_7 = arith.constant dense<0.000000e+00> : vector<8xf32>
    %12 = vector.multi_reduction <add>, %11, %cst_7 [1] : vector<8x32xf32> to vector<8xf32>
    %13 = vector.shape_cast %12 : vector<8xf32> to vector<8x1xf32>
    %cst_8 = arith.constant 3.200000e+01 : f32
    %14 = vector.broadcast %cst_8 : f32 to vector<8x1xf32>
    %15 = arith.divf %13, %14 : vector<8x1xf32>
    %cst_9 = arith.constant 9.99999974E-6 : f32
    %16 = vector.broadcast %cst_9 : f32 to vector<8x1xf32>
    %17 = arith.addf %15, %16 : vector<8x1xf32>
    %18 = math.rsqrt %17 : vector<8x1xf32>
    %19 = vector.broadcast %18 : vector<8x1xf32> to vector<8x32xf32>
    %20 = arith.mulf %10, %19 : vector<8x32xf32>
    %21 = vector.broadcast %3 : vector<1x32xf32> to vector<8x32xf32>
    %22 = arith.mulf %20, %21 : vector<8x32xf32>
    %23 = vector.broadcast %4 : vector<1x32xf32> to vector<8x32xf32>
    %24 = arith.addf %22, %23 : vector<8x32xf32>
    %25 = arith.truncf %24 : vector<8x32xf32> to vector<8x32xbf16>
    %c0_10 = arith.constant 0 : index
    %c0_11 = arith.constant 0 : index
    %26 = vector.load %arg4[%c0_10, %c0_11] : memref<32x160xbf16, #tpu.memory_space<vmem>>, vector<32x160xbf16>
    %cst_12 = arith.constant dense<0.000000e+00> : vector<8x160xf32>
    %27 = tpu.matmul %25, %26, %cst_12 {dimension_numbers = #tpu.dot_dimension_numbers<[1], [0], [0], [1], [0, 0, 1, 1], [], []>} : vector<8x32xbf16>, vector<32x160xbf16>, vector<8x160xf32> -> vector<8x160xf32>
    %c0_13 = arith.constant 0 : index
    %c0_14 = arith.constant 0 : index
    %28 = vector.load %arg5[%c0_13, %c0_14] : memref<8x32xf32, #tpu.memory_space<vmem>>, vector<8x32xf32>
    %c0_15 = arith.constant 0 : index
    %c0_16 = arith.constant 0 : index
    %29 = vector.load %arg6[%c0_15, %c0_16] : memref<8x32xf32, #tpu.memory_space<vmem>>, vector<8x32xf32>
    %30 = vector.extract_strided_slice %27 {offsets = [0, 0], sizes = [8, 32], strides = [1, 1]} : vector<8x160xf32> to vector<8x32xf32>
    %31 = arith.mulf %30, %28 : vector<8x32xf32>
    %32 = vector.extract_strided_slice %27 {offsets = [0, 32], sizes = [8, 32], strides = [1, 1]} : vector<8x160xf32> to vector<8x32xf32>
    %33 = arith.mulf %32, %29 : vector<8x32xf32>
    %34 = arith.addf %31, %33 : vector<8x32xf32>
    %35 = vector.extract_strided_slice %27 {offsets = [0, 64], sizes = [8, 32], strides = [1, 1]} : vector<8x160xf32> to vector<8x32xf32>
    %36 = arith.mulf %35, %28 : vector<8x32xf32>
    %37 = vector.extract_strided_slice %27 {offsets = [0, 96], sizes = [8, 32], strides = [1, 1]} : vector<8x160xf32> to vector<8x32xf32>
    %38 = arith.mulf %37, %29 : vector<8x32xf32>
    %39 = arith.addf %36, %38 : vector<8x32xf32>
    %40 = vector.extract_strided_slice %27 {offsets = [0, 128], sizes = [8, 32], strides = [1, 1]} : vector<8x160xf32> to vector<8x32xf32>
    %41 = vector.extract_strided_slice %34 {offsets = [0, 0], sizes = [8, 16], strides = [1, 1]} : vector<8x32xf32> to vector<8x16xf32>
    %42 = vector.extract_strided_slice %34 {offsets = [0, 16], sizes = [8, 16], strides = [1, 1]} : vector<8x32xf32> to vector<8x16xf32>
    %43 = vector.shape_cast %41 : vector<8x16xf32> to vector<1x8x16xf32>
    %44 = vector.shape_cast %42 : vector<8x16xf32> to vector<1x8x16xf32>
    %45 = tpu.concatenate %43, %44 in 0 : vector<1x8x16xf32>, vector<1x8x16xf32> -> vector<2x8x16xf32>
    %46 = arith.truncf %45 : vector<2x8x16xf32> to vector<2x8x16xbf16>
    %47 = vector.extract_strided_slice %39 {offsets = [0, 0], sizes = [8, 16], strides = [1, 1]} : vector<8x32xf32> to vector<8x16xf32>
    %48 = vector.extract_strided_slice %39 {offsets = [0, 16], sizes = [8, 16], strides = [1, 1]} : vector<8x32xf32> to vector<8x16xf32>
    %49 = vector.shape_cast %47 : vector<8x16xf32> to vector<1x8x16xf32>
    %50 = vector.shape_cast %48 : vector<8x16xf32> to vector<1x8x16xf32>
    %51 = tpu.concatenate %49, %50 in 0 : vector<1x8x16xf32>, vector<1x8x16xf32> -> vector<2x8x16xf32>
    %52 = arith.truncf %51 : vector<2x8x16xf32> to vector<2x8x16xbf16>
    %53 = vector.extract_strided_slice %40 {offsets = [0, 0], sizes = [8, 16], strides = [1, 1]} : vector<8x32xf32> to vector<8x16xf32>
    %54 = vector.extract_strided_slice %40 {offsets = [0, 16], sizes = [8, 16], strides = [1, 1]} : vector<8x32xf32> to vector<8x16xf32>
    %55 = vector.shape_cast %53 : vector<8x16xf32> to vector<1x8x16xf32>
    %56 = vector.shape_cast %54 : vector<8x16xf32> to vector<1x8x16xf32>
    %57 = tpu.concatenate %55, %56 in 0 : vector<1x8x16xf32>, vector<1x8x16xf32> -> vector<2x8x16xf32>
    %58 = arith.truncf %57 : vector<2x8x16xf32> to vector<2x8x16xbf16>
    "tpu.trace_start"() <{level = 10 : i32, message = "hnd,hmd->hnm"}> : () -> ()
    %cst_17 = arith.constant dense<0.000000e+00> : vector<2x8x8xf32>
    %59 = tpu.matmul %46, %52, %cst_17 {dimension_numbers = #tpu.dot_dimension_numbers<[2], [2], [1], [1], [0, 0, 0, 1, 1, 1], [0], [0]>} : vector<2x8x16xbf16>, vector<2x8x16xbf16>, vector<2x8x8xf32> -> vector<2x8x8xf32>
    "tpu.trace_stop"() : () -> ()
    %cst_18 = arith.constant dense<0xFF800000> : vector<2x8xf32>
    %60 = vector.multi_reduction <maximumf>, %59, %cst_18 [2] : vector<2x8x8xf32> to vector<2x8xf32>
    %61 = vector.shape_cast %60 : vector<2x8xf32> to vector<2x8x1xf32>
    %62 = vector.broadcast %61 : vector<2x8x1xf32> to vector<2x8x8xf32>
    %63 = arith.subf %59, %62 : vector<2x8x8xf32>
    %64 = math.exp %63 : vector<2x8x8xf32>
    %cst_19 = arith.constant dense<0.000000e+00> : vector<2x8xf32>
    %65 = vector.multi_reduction <add>, %64, %cst_19 [2] : vector<2x8x8xf32> to vector<2x8xf32>
    %66 = vector.shape_cast %65 : vector<2x8xf32> to vector<2x8x1xf32>
    %67 = tpu.reciprocal %66 {approx = true} : vector<2x8x1xf32> -> vector<2x8x1xf32>
    %68 = vector.broadcast %67 : vector<2x8x1xf32> to vector<2x8x8xf32>
    %69 = arith.mulf %64, %68 : vector<2x8x8xf32>
    %70 = arith.truncf %69 : vector<2x8x8xf32> to vector<2x8x8xbf16>
    %c0_20 = arith.constant 0 : index
    %c0_21 = arith.constant 0 : index
    %c0_22 = arith.constant 0 : index
    %c0_23 = arith.constant 0 : index
    %71 = vector.load %arg17[%c0_20, %c0_21, %c0_22, %c0_23] : memref<1x2x8x8xbf16, #tpu.memory_space<vmem>>, vector<1x2x8x8xbf16>
    %72 = vector.shape_cast %71 : vector<1x2x8x8xbf16> to vector<2x8x8xbf16>
    %73 = vector.shape_cast %70 : vector<2x8x8xbf16> to vector<1x2x8x8xbf16>
    tpu.vector_store %arg17[%c0_20, %c0_21, %c0_22, %c0_23], %73 {strides = array<i32>} : memref<1x2x8x8xbf16, #tpu.memory_space<vmem>>, vector<1x2x8x8xbf16>,
    %74 = arith.truncf %69 : vector<2x8x8xf32> to vector<2x8x8xbf16>
    "tpu.trace_start"() <{level = 10 : i32, message = "hnm,hmd->hnd"}> : () -> ()
    %cst_24 = arith.constant dense<0.000000e+00> : vector<2x8x16xf32>
    %75 = tpu.matmul %74, %58, %cst_24 {dimension_numbers = #tpu.dot_dimension_numbers<[2], [1], [1], [2], [0, 0, 0, 1, 1, 2], [0], [0]>} : vector<2x8x8xbf16>, vector<2x8x16xbf16>, vector<2x8x16xf32> -> vector<2x8x16xf32>
    "tpu.trace_stop"() : () -> ()
    %76 = vector.extract_strided_slice %75 {offsets = [0, 0, 0], sizes = [1, 8, 16], strides = [1, 1, 1]} : vector<2x8x16xf32> to vector<1x8x16xf32>
    %77 = vector.shape_cast %76 : vector<1x8x16xf32> to vector<8x16xf32>
    %78 = vector.extract_strided_slice %75 {offsets = [1, 0, 0], sizes = [1, 8, 16], strides = [1, 1, 1]} : vector<2x8x16xf32> to vector<1x8x16xf32>
    %79 = vector.shape_cast %78 : vector<1x8x16xf32> to vector<8x16xf32>
    %80 = tpu.concatenate %77, %79 in 1 : vector<8x16xf32>, vector<8x16xf32> -> vector<8x32xf32>
    %81 = arith.truncf %80 : vector<8x32xf32> to vector<8x32xbf16>
    %c0_25 = arith.constant 0 : index
    %c0_26 = arith.constant 0 : index
    %82 = vector.load %arg7[%c0_25, %c0_26] : memref<32x32xbf16, #tpu.memory_space<vmem>>, vector<32x32xbf16>
    %cst_27 = arith.constant dense<0.000000e+00> : vector<8x32xf32>
    %83 = tpu.matmul %81, %82, %cst_27 {dimension_numbers = #tpu.dot_dimension_numbers<[1], [0], [0], [1], [0, 0, 1, 1], [], []>} : vector<8x32xbf16>, vector<32x32xbf16>, vector<8x32xf32> -> vector<8x32xf32>
    %84 = arith.addf %83, %2 : vector<8x32xf32>
    %c0_28 = arith.constant 0 : index
    %c0_29 = arith.constant 0 : index
    %85 = vector.load %arg8[%c0_28, %c0_29] : memref<1x32xf32, #tpu.memory_space<vmem>>, vector<1x32xf32>
    %c0_30 = arith.constant 0 : index
    %c0_31 = arith.constant 0 : index
    %86 = vector.load %arg9[%c0_30, %c0_31] : memref<1x32xf32, #tpu.memory_space<vmem>>, vector<1x32xf32>
    %cst_32 = arith.constant dense<0.000000e+00> : vector<8xf32>
    %87 = vector.multi_reduction <add>, %84, %cst_32 [1] : vector<8x32xf32> to vector<8xf32>
    %88 = vector.shape_cast %87 : vector<8xf32> to vector<8x1xf32>
    %cst_33 = arith.constant 3.200000e+01 : f32
    %89 = vector.broadcast %cst_33 : f32 to vector<8x1xf32>
    %90 = arith.divf %88, %89 : vector<8x1xf32>
    %91 = vector.broadcast %90 : vector<8x1xf32> to vector<8x32xf32>
    %92 = arith.subf %84, %91 : vector<8x32xf32>
    %93 = arith.mulf %92, %92 : vector<8x32xf32>
    %cst_34 = arith.constant dense<0.000000e+00> : vector<8xf32>
    %94 = vector.multi_reduction <add>, %93, %cst_34 [1] : vector<8x32xf32> to vector<8xf32>
    %95 = vector.shape_cast %94 : vector<8xf32> to vector<8x1xf32>
    %cst_35 = arith.constant 3.200000e+01 : f32
    %96 = vector.broadcast %cst_35 : f32 to vector<8x1xf32>
    %97 = arith.divf %95, %96 : vector<8x1xf32>
    %cst_36 = arith.constant 9.99999974E-6 : f32
    %98 = vector.broadcast %cst_36 : f32 to vector<8x1xf32>
    %99 = arith.addf %97, %98 : vector<8x1xf32>
    %100 = math.rsqrt %99 : vector<8x1xf32>
    %101 = vector.broadcast %100 : vector<8x1xf32> to vector<8x32xf32>
    %102 = arith.mulf %92, %101 : vector<8x32xf32>
    %103 = vector.broadcast %85 : vector<1x32xf32> to vector<8x32xf32>
    %104 = arith.mulf %102, %103 : vector<8x32xf32>
    %105 = vector.broadcast %86 : vector<1x32xf32> to vector<8x32xf32>
    %106 = arith.addf %104, %105 : vector<8x32xf32>
    %107 = arith.truncf %106 : vector<8x32xf32> to vector<8x32xbf16>
    %c0_37 = arith.constant 0 : index
    %c0_38 = arith.constant 0 : index
    %108 = vector.load %arg10[%c0_37, %c0_38] : memref<32x128xbf16, #tpu.memory_space<vmem>>, vector<32x128xbf16>
    %cst_39 = arith.constant dense<0.000000e+00> : vector<8x128xf32>
    %109 = tpu.matmul %107, %108, %cst_39 {dimension_numbers = #tpu.dot_dimension_numbers<[1], [0], [0], [1], [0, 0, 1, 1], [], []>} : vector<8x32xbf16>, vector<32x128xbf16>, vector<8x128xf32> -> vector<8x128xf32>
    %c0_40 = arith.constant 0 : index
    %c0_41 = arith.constant 0 : index
    %110 = vector.load %arg11[%c0_40, %c0_41] : memref<1x128xf32, #tpu.memory_space<vmem>>, vector<1x128xf32>
    %111 = vector.broadcast %110 : vector<1x128xf32> to vector<8x128xf32>
    %112 = arith.addf %109, %111 : vector<8x128xf32>
    %c0_42 = arith.constant 0 : index
    %c0_43 = arith.constant 0 : index
    %113 = vector.load %arg12[%c0_42, %c0_43] : memref<32x128xbf16, #tpu.memory_space<vmem>>, vector<32x128xbf16>
    %cst_44 = arith.constant dense<0.000000e+00> : vector<8x128xf32>
    %114 = tpu.matmul %107, %113, %cst_44 {dimension_numbers = #tpu.dot_dimension_numbers<[1], [0], [0], [1], [0, 0, 1, 1], [], []>} : vector<8x32xbf16>, vector<32x128xbf16>, vector<8x128xf32> -> vector<8x128xf32>
    %c0_45 = arith.constant 0 : index
    %c0_46 = arith.constant 0 : index
    %115 = vector.load %arg13[%c0_45, %c0_46] : memref<1x128xf32, #tpu.memory_space<vmem>>, vector<1x128xf32>
    %116 = vector.broadcast %115 : vector<1x128xf32> to vector<8x128xf32>
    %117 = arith.addf %114, %116 : vector<8x128xf32>
    %cst_47 = arith.constant 5.000000e-01 : f32
    %118 = vector.broadcast %cst_47 : f32 to vector<8x128xf32>
    %119 = arith.mulf %118, %117 : vector<8x128xf32>
    %cst_48 = arith.constant 0.707106769 : f32
    %120 = vector.broadcast %cst_48 : f32 to vector<8x128xf32>
    %121 = arith.mulf %117, %120 : vector<8x128xf32>
    %122 = math.erf %121 : vector<8x128xf32>
    %cst_49 = arith.constant 1.000000e+00 : f32
    %123 = vector.broadcast %cst_49 : f32 to vector<8x128xf32>
    %124 = arith.addf %123, %122 : vector<8x128xf32>
    %125 = arith.mulf %119, %124 : vector<8x128xf32>
    %126 = arith.mulf %112, %125 : vector<8x128xf32>
    %127 = arith.truncf %126 : vector<8x128xf32> to vector<8x128xbf16>
    %c0_50 = arith.constant 0 : index
    %c0_51 = arith.constant 0 : index
    %128 = vector.load %arg14[%c0_50, %c0_51] : memref<128x32xbf16, #tpu.memory_space<vmem>>, vector<128x32xbf16>
    %cst_52 = arith.constant dense<0.000000e+00> : vector<8x32xf32>
    %129 = tpu.matmul %127, %128, %cst_52 {dimension_numbers = #tpu.dot_dimension_numbers<[1], [0], [0], [1], [0, 0, 1, 1], [], []>} : vector<8x128xbf16>, vector<128x32xbf16>, vector<8x32xf32> -> vector<8x32xf32>
    %c0_53 = arith.constant 0 : index
    %c0_54 = arith.constant 0 : index
    %130 = vector.load %arg15[%c0_53, %c0_54] : memref<1x32xf32, #tpu.memory_space<vmem>>, vector<1x32xf32>
    %131 = vector.broadcast %130 : vector<1x32xf32> to vector<8x32xf32>
    %132 = arith.addf %129, %131 : vector<8x32xf32>
    %133 = arith.addf %132, %84 : vector<8x32xf32>
    %134 = arith.truncf %133 : vector<8x32xf32> to vector<8x32xbf16>
    %c0_55 = arith.constant 0 : index
    %c0_56 = arith.constant 0 : index
    %c0_57 = arith.constant 0 : index
    %135 = vector.load %arg16[%c0_55, %c0_56, %c0_57] : memref<1x8x32xbf16, #tpu.memory_space<vmem>>, vector<1x8x32xbf16>
    %136 = vector.shape_cast %135 : vector<1x8x32xbf16> to vector<8x32xbf16>
    %137 = vector.shape_cast %134 : vector<8x32xbf16> to vector<1x8x32xbf16>
    tpu.vector_store %arg16[%c0_55, %c0_56, %c0_57], %137 {strides = array<i32>} : memref<1x8x32xbf16, #tpu.memory_space<vmem>>, vector<1x8x32xbf16>,
    return
  }
  func.func @transform_0(%arg0: i32) -> (i32, i32, i32) {
    %c0_i32 = arith.constant 0 : i32
    %c0_i32_0 = arith.constant 0 : i32
    %c0_i32_1 = arith.constant 0 : i32
    return %arg0, %c0_i32, %c0_i32_0 : i32, i32, i32
  }
  func.func @transform_1(%arg0: i32) -> (i32, i32) {
    %c0_i32 = arith.constant 0 : i32
    %c0_i32_0 = arith.constant 0 : i32
    %c0_i32_1 = arith.constant 0 : i32
    return %c0_i32, %c0_i32_0 : i32, i32
  }
  func.func @transform_2(%arg0: i32) -> (i32, i32) {
    %c0_i32 = arith.constant 0 : i32
    %c0_i32_0 = arith.constant 0 : i32
    %c0_i32_1 = arith.constant 0 : i32
    return %c0_i32, %c0_i32_0 : i32, i32
  }
  func.func @transform_3(%arg0: i32) -> (i32, i32) {
    %c0_i32 = arith.constant 0 : i32
    %c0_i32_0 = arith.constant 0 : i32
    %c0_i32_1 = arith.constant 0 : i32
    return %c0_i32, %c0_i32_0 : i32, i32
  }
  func.func @transform_4(%arg0: i32) -> (i32, i32) {
    %c0_i32 = arith.constant 0 : i32
    %c0_i32_0 = arith.constant 0 : i32
    %c0_i32_1 = arith.constant 0 : i32
    return %c0_i32, %c0_i32_0 : i32, i32
  }
  func.func @transform_5(%arg0: i32) -> (i32, i32) {
    %c0_i32 = arith.constant 0 : i32
    %c0_i32_0 = arith.constant 0 : i32
    %c0_i32_1 = arith.constant 0 : i32
    return %c0_i32, %c0_i32_0 : i32, i32
  }
  func.func @transform_6(%arg0: i32) -> (i32, i32) {
    %c0_i32 = arith.constant 0 : i32
    %c0_i32_0 = arith.constant 0 : i32
    %c0_i32_1 = arith.constant 0 : i32
    return %c0_i32, %c0_i32_0 : i32, i32
  }
  func.func @transform_7(%arg0: i32) -> (i32, i32) {
    %c0_i32 = arith.constant 0 : i32
    %c0_i32_0 = arith.constant 0 : i32
    %c0_i32_1 = arith.constant 0 : i32
    return %c0_i32, %c0_i32_0 : i32, i32
  }
  func.func @transform_8(%arg0: i32) -> (i32, i32) {
    %c0_i32 = arith.constant 0 : i32
    %c0_i32_0 = arith.constant 0 : i32
    %c0_i32_1 = arith.constant 0 : i32
    return %c0_i32, %c0_i32_0 : i32, i32
  }
  func.func @transform_9(%arg0: i32) -> (i32, i32) {
    %c0_i32 = arith.constant 0 : i32
    %c0_i32_0 = arith.constant 0 : i32
    %c0_i32_1 = arith.constant 0 : i32
    return %c0_i32, %c0_i32_0 : i32, i32
  }
  func.func @transform_10(%arg0: i32) -> (i32, i32) {
    %c0_i32 = arith.constant 0 : i32
    %c0_i32_0 = arith.constant 0 : i32
    %c0_i32_1 = arith.constant 0 : i32
    return %c0_i32, %c0_i32_0 : i32, i32
  }
  func.func @transform_11(%arg0: i32) -> (i32, i32) {
    %c0_i32 = arith.constant 0 : i32
    %c0_i32_0 = arith.constant 0 : i32
    %c0_i32_1 = arith.constant 0 : i32
    return %c0_i32, %c0_i32_0 : i32, i32
  }
  func.func @transform_12(%arg0: i32) -> (i32, i32) {
    %c0_i32 = arith.constant 0 : i32
    %c0_i32_0 = arith.constant 0 : i32
    %c0_i32_1 = arith.constant 0 : i32
    return %c0_i32, %c0_i32_0 : i32, i32
  }
  func.func @transform_13(%arg0: i32) -> (i32, i32) {
    %c0_i32 = arith.constant 0 : i32
    %c0_i32_0 = arith.constant 0 : i32
    %c0_i32_1 = arith.constant 0 : i32
    return %c0_i32, %c0_i32_0 : i32, i32
  }
  func.func @transform_14(%arg0: i32) -> (i32, i32) {
    %c0_i32 = arith.constant 0 : i32
    %c0_i32_0 = arith.constant 0 : i32
    %c0_i32_1 = arith.constant 0 : i32
    return %c0_i32, %c0_i32_0 : i32, i32
  }
  func.func @transform_15(%arg0: i32) -> (i32, i32, i32) {
    %c0_i32 = arith.constant 0 : i32
    %c0_i32_0 = arith.constant 0 : i32
    %c0_i32_1 = arith.constant 0 : i32
    return %arg0, %c0_i32, %c0_i32_0 : i32, i32, i32
  }
  func.func @transform_16(%arg0: i32) -> (i32, i32, i32, i32) {
    %c0_i32 = arith.constant 0 : i32
    %c0_i32_0 = arith.constant 0 : i32
    %c0_i32_1 = arith.constant 0 : i32
    %c0_i32_2 = arith.constant 0 : i32
    return %arg0, %c0_i32, %c0_i32_0, %c0_i32_1 : i32, i32, i32, i32
  }
}

module attributes {stable_mosaic.version = 11 : i64} {
  func.func @layer_kernel(%arg0: i32, %arg1: memref<1x8x32xbf16, #tpu.memory_space<vmem>>, %arg2: memref<1x32xf32, #tpu.memory_space<vmem>>, %arg3: memref<1x32xf32, #tpu.memory_space<vmem>>, %arg4: memref<32x160xbf16, #tpu.memory_space<vmem>>, %arg5: memref<8x32xf32, #tpu.memory_space<vmem>>, %arg6: memref<8x32xf32, #tpu.memory_space<vmem>>, %arg7: memref<32x32xbf16, #tpu.memory_space<vmem>>, %arg8: memref<1x32xf32, #tpu.memory_space<vmem>>, %arg9: memref<1x32xf32, #tpu.memory_space<vmem>>, %arg10: memref<32x128xbf16, #tpu.memory_space<vmem>>, %arg11: memref<1x128xf32, #tpu.memory_space<vmem>>, %arg12: memref<32x128xbf16, #tpu.memory_space<vmem>>, %arg13: memref<1x128xf32, #tpu.memory_space<vmem>>, %arg14: memref<128x32xbf16, #tpu.memory_space<vmem>>, %arg15: memref<1x32xf32, #tpu.memory_space<vmem>>, %arg16: memref<1x8x32xbf16, #tpu.memory_space<vmem>>, %arg17: memref<1x2x8x8xbf16, #tpu.memory_space<vmem>>) attributes {dimension_semantics = [#tpu.dimension_semantics<parallel>], iteration_bounds = array<i64: 2>, scalar_prefetch = 0 : i64, scratch_operands = 0 : i64, tpu.core_type = #tpu.core_type<tc>, window_params = [{transform_indices = @transform_0, window_bounds = array<i64: 1, 8, 32>}, {pipeline_mode = #tpu.pipeline_mode<synchronous>, transform_indices = @transform_1, window_bounds = array<i64: 1, 32>}, {pipeline_mode = #tpu.pipeline_mode<synchronous>, transform_indices = @transform_2, window_bounds = array<i64: 1, 32>}, {pipeline_mode = #tpu.pipeline_mode<synchronous>, transform_indices = @transform_3, window_bounds = array<i64: 32, 160>}, {pipeline_mode = #tpu.pipeline_mode<synchronous>, transform_indices = @transform_4, window_bounds = array<i64: 8, 32>}, {pipeline_mode = #tpu.pipeline_mode<synchronous>, transform_indices = @transform_5, window_bounds = array<i64: 8, 32>}, {pipeline_mode = #tpu.pipeline_mode<synchronous>, transform_indices = @transform_6, window_bounds = array<i64: 32, 32>}, {pipeline_mode = #tpu.pipeline_mode<synchronous>, transform_indices = @transform_7, window_bounds = array<i64: 1, 32>}, {pipeline_mode = #tpu.pipeline_mode<synchronous>, transform_indices = @transform_8, window_bounds = array<i64: 1, 32>}, {pipeline_mode = #tpu.pipeline_mode<synchronous>, transform_indices = @transform_9, window_bounds = array<i64: 32, 128>}, {pipeline_mode = #tpu.pipeline_mode<synchronous>, transform_indices = @transform_10, window_bounds = array<i64: 1, 128>}, {pipeline_mode = #tpu.pipeline_mode<synchronous>, transform_indices = @transform_11, window_bounds = array<i64: 32, 128>}, {pipeline_mode = #tpu.pipeline_mode<synchronous>, transform_indices = @transform_12, window_bounds = array<i64: 1, 128>}, {pipeline_mode = #tpu.pipeline_mode<synchronous>, transform_indices = @transform_13, window_bounds = array<i64: 128, 32>}, {pipeline_mode = #tpu.pipeline_mode<synchronous>, transform_indices = @transform_14, window_bounds = array<i64: 1, 32>}, {transform_indices = @transform_15, window_bounds = array<i64: 1, 8, 32>}, {transform_indices = @transform_16, window_bounds = array<i64: 1, 2, 8, 8>}]} {
    %c0 = arith.constant 0 : index
    %c0_0 = arith.constant 0 : index
    %c0_1 = arith.constant 0 : index
    %0 = vector.load %arg1[%c0, %c0_0, %c0_1] : memref<1x8x32xbf16, #tpu.memory_space<vmem>>, vector<1x8x32xbf16>
    %1 = vector.shape_cast %0 : vector<1x8x32xbf16> to vector<8x32xbf16>
    %2 = arith.extf %1 : vector<8x32xbf16> to vector<8x32xf32>
    %c0_2 = arith.constant 0 : index
    %c0_3 = arith.constant 0 : index
    %3 = vector.load %arg2[%c0_2, %c0_3] : memref<1x32xf32, #tpu.memory_space<vmem>>, vector<1x32xf32>
    %c0_4 = arith.constant 0 : index
    %c0_5 = arith.constant 0 : index
    %4 = vector.load %arg3[%c0_4, %c0_5] : memref<1x32xf32, #tpu.memory_space<vmem>>, vector<1x32xf32>
    %cst = arith.constant dense<0.000000e+00> : vector<8xf32>
    %5 = vector.multi_reduction <add>, %2, %cst [1] : vector<8x32xf32> to vector<8xf32>
    %6 = vector.shape_cast %5 : vector<8xf32> to vector<8x1xf32>
    %cst_6 = arith.constant 3.200000e+01 : f32
    %7 = vector.broadcast %cst_6 : f32 to vector<8x1xf32>
    %8 = arith.divf %6, %7 : vector<8x1xf32>
    %9 = vector.broadcast %8 : vector<8x1xf32> to vector<8x32xf32>
    %10 = arith.subf %2, %9 : vector<8x32xf32>
    %11 = arith.mulf %10, %10 : vector<8x32xf32>
    %cst_7 = arith.constant dense<0.000000e+00> : vector<8xf32>
    %12 = vector.multi_reduction <add>, %11, %cst_7 [1] : vector<8x32xf32> to vector<8xf32>
    %13 = vector.shape_cast %12 : vector<8xf32> to vector<8x1xf32>
    %cst_8 = arith.constant 3.200000e+01 : f32
    %14 = vector.broadcast %cst_8 : f32 to vector<8x1xf32>
    %15 = arith.divf %13, %14 : vector<8x1xf32>
    %cst_9 = arith.constant 9.99999974E-6 : f32
    %16 = vector.broadcast %cst_9 : f32 to vector<8x1xf32>
    %17 = arith.addf %15, %16 : vector<8x1xf32>
    %18 = math.rsqrt %17 : vector<8x1xf32>
    %19 = vector.broadcast %18 : vector<8x1xf32> to vector<8x32xf32>
    %20 = arith.mulf %10, %19 : vector<8x32xf32>
    %21 = vector.broadcast %3 : vector<1x32xf32> to vector<8x32xf32>
    %22 = arith.mulf %20, %21 : vector<8x32xf32>
    %23 = vector.broadcast %4 : vector<1x32xf32> to vector<8x32xf32>
    %24 = arith.addf %22, %23 : vector<8x32xf32>
    %25 = arith.truncf %24 : vector<8x32xf32> to vector<8x32xbf16>
    %c0_10 = arith.constant 0 : index
    %c0_11 = arith.constant 0 : index
    %26 = vector.load %arg4[%c0_10, %c0_11] : memref<32x160xbf16, #tpu.memory_space<vmem>>, vector<32x160xbf16>
    %cst_12 = arith.constant dense<0.000000e+00> : vector<8x160xf32>
    %27 = tpu.matmul %25, %26, %cst_12 {dimension_numbers = #tpu.dot_dimension_numbers<[1], [0], [0], [1], [0, 0, 1, 1], [], []>} : vector<8x32xbf16>, vector<32x160xbf16>, vector<8x160xf32> -> vector<8x160xf32>
    %c0_13 = arith.constant 0 : index
    %c0_14 = arith.constant 0 : index
    %28 = vector.load %arg5[%c0_13, %c0_14] : memref<8x32xf32, #tpu.memory_space<vmem>>, vector<8x32xf32>
    %c0_15 = arith.constant 0 : index
    %c0_16 = arith.constant 0 : index
    %29 = vector.load %arg6[%c0_15, %c0_16] : memref<8x32xf32, #tpu.memory_space<vmem>>, vector<8x32xf32>
    %30 = vector.extract_strided_slice %27 {offsets = [0, 0], sizes = [8, 32], strides = [1, 1]} : vector<8x160xf32> to vector<8x32xf32>
    %31 = arith.mulf %30, %28 : vector<8x32xf32>
    %32 = vector.extract_strided_slice %27 {offsets = [0, 32], sizes = [8, 32], strides = [1, 1]} : vector<8x160xf32> to vector<8x32xf32>
    %33 = arith.mulf %32, %29 : vector<8x32xf32>
    %34 = arith.addf %31, %33 : vector<8x32xf32>
    %35 = vector.extract_strided_slice %27 {offsets = [0, 64], sizes = [8, 32], strides = [1, 1]} : vector<8x160xf32> to vector<8x32xf32>
    %36 = arith.mulf %35, %28 : vector<8x32xf32>
    %37 = vector.extract_strided_slice %27 {offsets = [0, 96], sizes = [8, 32], strides = [1, 1]} : vector<8x160xf32> to vector<8x32xf32>
    %38 = arith.mulf %37, %29 : vector<8x32xf32>
    %39 = arith.addf %36, %38 : vector<8x32xf32>
    %40 = vector.extract_strided_slice %27 {offsets = [0, 128], sizes = [8, 32], strides = [1, 1]} : vector<8x160xf32> to vector<8x32xf32>
    %41 = vector.extract_strided_slice %34 {offsets = [0, 0], sizes = [8, 16], strides = [1, 1]} : vector<8x32xf32> to vector<8x16xf32>
    %42 = vector.extract_strided_slice %34 {offsets = [0, 16], sizes = [8, 16], strides = [1, 1]} : vector<8x32xf32> to vector<8x16xf32>
    %43 = vector.shape_cast %41 : vector<8x16xf32> to vector<1x8x16xf32>
    %44 = vector.shape_cast %42 : vector<8x16xf32> to vector<1x8x16xf32>
    %45 = tpu.concatenate %43, %44 in 0 : vector<1x8x16xf32>, vector<1x8x16xf32> -> vector<2x8x16xf32>
    %46 = arith.truncf %45 : vector<2x8x16xf32> to vector<2x8x16xbf16>
    %47 = vector.extract_strided_slice %39 {offsets = [0, 0], sizes = [8, 16], strides = [1, 1]} : vector<8x32xf32> to vector<8x16xf32>
    %48 = vector.extract_strided_slice %39 {offsets = [0, 16], sizes = [8, 16], strides = [1, 1]} : vector<8x32xf32> to vector<8x16xf32>
    %49 = vector.shape_cast %47 : vector<8x16xf32> to vector<1x8x16xf32>
    %50 = vector.shape_cast %48 : vector<8x16xf32> to vector<1x8x16xf32>
    %51 = tpu.concatenate %49, %50 in 0 : vector<1x8x16xf32>, vector<1x8x16xf32> -> vector<2x8x16xf32>
    %52 = arith.truncf %51 : vector<2x8x16xf32> to vector<2x8x16xbf16>
    %53 = vector.extract_strided_slice %40 {offsets = [0, 0], sizes = [8, 16], strides = [1, 1]} : vector<8x32xf32> to vector<8x16xf32>
    %54 = vector.extract_strided_slice %40 {offsets = [0, 16], sizes = [8, 16], strides = [1, 1]} : vector<8x32xf32> to vector<8x16xf32>
    %55 = vector.shape_cast %53 : vector<8x16xf32> to vector<1x8x16xf32>
    %56 = vector.shape_cast %54 : vector<8x16xf32> to vector<1x8x16xf32>
    %57 = tpu.concatenate %55, %56 in 0 : vector<1x8x16xf32>, vector<1x8x16xf32> -> vector<2x8x16xf32>
    %58 = arith.truncf %57 : vector<2x8x16xf32> to vector<2x8x16xbf16>
    "tpu.trace_start"() <{level = 10 : i32, message = "hnd,hmd->hnm"}> : () -> ()
    %cst_17 = arith.constant dense<0.000000e+00> : vector<2x8x8xf32>
    %59 = tpu.matmul %46, %52, %cst_17 {dimension_numbers = #tpu.dot_dimension_numbers<[2], [2], [1], [1], [0, 0, 0, 1, 1, 1], [0], [0]>} : vector<2x8x16xbf16>, vector<2x8x16xbf16>, vector<2x8x8xf32> -> vector<2x8x8xf32>
    "tpu.trace_stop"() : () -> ()
    %cst_18 = arith.constant dense<0xFF800000> : vector<2x8xf32>
    %60 = vector.multi_reduction <maximumf>, %59, %cst_18 [2] : vector<2x8x8xf32> to vector<2x8xf32>
    %61 = vector.shape_cast %60 : vector<2x8xf32> to vector<2x8x1xf32>
    %62 = vector.broadcast %61 : vector<2x8x1xf32> to vector<2x8x8xf32>
    %63 = arith.subf %59, %62 : vector<2x8x8xf32>
    %64 = math.exp %63 : vector<2x8x8xf32>
    %cst_19 = arith.constant dense<0.000000e+00> : vector<2x8xf32>
    %65 = vector.multi_reduction <add>, %64, %cst_19 [2] : vector<2x8x8xf32> to vector<2x8xf32>
    %66 = vector.shape_cast %65 : vector<2x8xf32> to vector<2x8x1xf32>
    %67 = tpu.reciprocal %66 {approx = true} : vector<2x8x1xf32> -> vector<2x8x1xf32>
    %68 = vector.broadcast %67 : vector<2x8x1xf32> to vector<2x8x8xf32>
    %69 = arith.mulf %64, %68 : vector<2x8x8xf32>
    %70 = arith.truncf %69 : vector<2x8x8xf32> to vector<2x8x8xbf16>
    %c0_20 = arith.constant 0 : index
    %c0_21 = arith.constant 0 : index
    %c0_22 = arith.constant 0 : index
    %c0_23 = arith.constant 0 : index
    %71 = vector.load %arg17[%c0_20, %c0_21, %c0_22, %c0_23] : memref<1x2x8x8xbf16, #tpu.memory_space<vmem>>, vector<1x2x8x8xbf16>
    %72 = vector.shape_cast %71 : vector<1x2x8x8xbf16> to vector<2x8x8xbf16>
    %73 = vector.shape_cast %70 : vector<2x8x8xbf16> to vector<1x2x8x8xbf16>
    tpu.vector_store %arg17[%c0_20, %c0_21, %c0_22, %c0_23], %73 {strides = array<i32>} : memref<1x2x8x8xbf16, #tpu.memory_space<vmem>>, vector<1x2x8x8xbf16>,
    %74 = arith.truncf %69 : vector<2x8x8xf32> to vector<2x8x8xbf16>
    "tpu.trace_start"() <{level = 10 : i32, message = "hnm,hmd->hnd"}> : () -> ()
    %cst_24 = arith.constant dense<0.000000e+00> : vector<2x8x16xf32>
    %75 = tpu.matmul %74, %58, %cst_24 {dimension_numbers = #tpu.dot_dimension_numbers<[2], [1], [1], [2], [0, 0, 0, 1, 1, 2], [0], [0]>} : vector<2x8x8xbf16>, vector<2x8x16xbf16>, vector<2x8x16xf32> -> vector<2x8x16xf32>
    "tpu.trace_stop"() : () -> ()
    %76 = vector.extract_strided_slice %75 {offsets = [0, 0, 0], sizes = [1, 8, 16], strides = [1, 1, 1]} : vector<2x8x16xf32> to vector<1x8x16xf32>
    %77 = vector.shape_cast %76 : vector<1x8x16xf32> to vector<8x16xf32>
    %78 = vector.extract_strided_slice %75 {offsets = [1, 0, 0], sizes = [1, 8, 16], strides = [1, 1, 1]} : vector<2x8x16xf32> to vector<1x8x16xf32>
    %79 = vector.shape_cast %78 : vector<1x8x16xf32> to vector<8x16xf32>
    %80 = tpu.concatenate %77, %79 in 1 : vector<8x16xf32>, vector<8x16xf32> -> vector<8x32xf32>
    %81 = arith.truncf %80 : vector<8x32xf32> to vector<8x32xbf16>
    %c0_25 = arith.constant 0 : index
    %c0_26 = arith.constant 0 : index
    %82 = vector.load %arg7[%c0_25, %c0_26] : memref<32x32xbf16, #tpu.memory_space<vmem>>, vector<32x32xbf16>
    %cst_27 = arith.constant dense<0.000000e+00> : vector<8x32xf32>
    %83 = tpu.matmul %81, %82, %cst_27 {dimension_numbers = #tpu.dot_dimension_numbers<[1], [0], [0], [1], [0, 0, 1, 1], [], []>} : vector<8x32xbf16>, vector<32x32xbf16>, vector<8x32xf32> -> vector<8x32xf32>
    %84 = arith.addf %83, %2 : vector<8x32xf32>
    %c0_28 = arith.constant 0 : index
    %c0_29 = arith.constant 0 : index
    %85 = vector.load %arg8[%c0_28, %c0_29] : memref<1x32xf32, #tpu.memory_space<vmem>>, vector<1x32xf32>
    %c0_30 = arith.constant 0 : index
    %c0_31 = arith.constant 0 : index
    %86 = vector.load %arg9[%c0_30, %c0_31] : memref<1x32xf32, #tpu.memory_space<vmem>>, vector<1x32xf32>
    %cst_32 = arith.constant dense<0.000000e+00> : vector<8xf32>
    %87 = vector.multi_reduction <add>, %84, %cst_32 [1] : vector<8x32xf32> to vector<8xf32>
    %88 = vector.shape_cast %87 : vector<8xf32> to vector<8x1xf32>
    %cst_33 = arith.constant 3.200000e+01 : f32
    %89 = vector.broadcast %cst_33 : f32 to vector<8x1xf32>
    %90 = arith.divf %88, %89 : vector<8x1xf32>
    %91 = vector.broadcast %90 : vector<8x1xf32> to vector<8x32xf32>
    %92 = arith.subf %84, %91 : vector<8x32xf32>
    %93 = arith.mulf %92, %92 : vector<8x32xf32>
    %cst_34 = arith.constant dense<0.000000e+00> : vector<8xf32>
    %94 = vector.multi_reduction <add>, %93, %cst_34 [1] : vector<8x32xf32> to vector<8xf32>
    %95 = vector.shape_cast %94 : vector<8xf32> to vector<8x1xf32>
    %cst_35 = arith.constant 3.200000e+01 : f32
    %96 = vector.broadcast %cst_35 : f32 to vector<8x1xf32>
    %97 = arith.divf %95, %96 : vector<8x1xf32>
    %cst_36 = arith.constant 9.99999974E-6 : f32
    %98 = vector.broadcast %cst_36 : f32 to vector<8x1xf32>
    %99 = arith.addf %97, %98 : vector<8x1xf32>
    %100 = math.rsqrt %99 : vector<8x1xf32>
    %101 = vector.broadcast %100 : vector<8x1xf32> to vector<8x32xf32>
    %102 = arith.mulf %92, %101 : vector<8x32xf32>
    %103 = vector.broadcast %85 : vector<1x32xf32> to vector<8x32xf32>
    %104 = arith.mulf %102, %103 : vector<8x32xf32>
    %105 = vector.broadcast %86 : vector<1x32xf32> to vector<8x32xf32>
    %106 = arith.addf %104, %105 : vector<8x32xf32>
    %107 = arith.truncf %106 : vector<8x32xf32> to vector<8x32xbf16>
    %c0_37 = arith.constant 0 : index
    %c0_38 = arith.constant 0 : index
    %108 = vector.load %arg10[%c0_37, %c0_38] : memref<32x128xbf16, #tpu.memory_space<vmem>>, vector<32x128xbf16>
    %cst_39 = arith.constant dense<0.000000e+00> : vector<8x128xf32>
    %109 = tpu.matmul %107, %108, %cst_39 {dimension_numbers = #tpu.dot_dimension_numbers<[1], [0], [0], [1], [0, 0, 1, 1], [], []>} : vector<8x32xbf16>, vector<32x128xbf16>, vector<8x128xf32> -> vector<8x128xf32>
    %c0_40 = arith.constant 0 : index
    %c0_41 = arith.constant 0 : index
    %110 = vector.load %arg11[%c0_40, %c0_41] : memref<1x128xf32, #tpu.memory_space<vmem>>, vector<1x128xf32>
    %111 = vector.broadcast %110 : vector<1x128xf32> to vector<8x128xf32>
    %112 = arith.addf %109, %111 : vector<8x128xf32>
    %c0_42 = arith.constant 0 : index
    %c0_43 = arith.constant 0 : index
    %113 = vector.load %arg12[%c0_42, %c0_43] : memref<32x128xbf16, #tpu.memory_space<vmem>>, vector<32x128xbf16>
    %cst_44 = arith.constant dense<0.000000e+00> : vector<8x128xf32>
    %114 = tpu.matmul %107, %113, %cst_44 {dimension_numbers = #tpu.dot_dimension_numbers<[1], [0], [0], [1], [0, 0, 1, 1], [], []>} : vector<8x32xbf16>, vector<32x128xbf16>, vector<8x128xf32> -> vector<8x128xf32>
    %c0_45 = arith.constant 0 : index
    %c0_46 = arith.constant 0 : index
    %115 = vector.load %arg13[%c0_45, %c0_46] : memref<1x128xf32, #tpu.memory_space<vmem>>, vector<1x128xf32>
    %116 = vector.broadcast %115 : vector<1x128xf32> to vector<8x128xf32>
    %117 = arith.addf %114, %116 : vector<8x128xf32>
    %cst_47 = arith.constant 5.000000e-01 : f32
    %118 = vector.broadcast %cst_47 : f32 to vector<8x128xf32>
    %119 = arith.mulf %118, %117 : vector<8x128xf32>
    %cst_48 = arith.constant 0.707106769 : f32
    %120 = vector.broadcast %cst_48 : f32 to vector<8x128xf32>
    %121 = arith.mulf %117, %120 : vector<8x128xf32>
    %122 = math.erf %121 : vector<8x128xf32>
    %cst_49 = arith.constant 1.000000e+00 : f32
    %123 = vector.broadcast %cst_49 : f32 to vector<8x128xf32>
    %124 = arith.addf %123, %122 : vector<8x128xf32>
    %125 = arith.mulf %119, %124 : vector<8x128xf32>
    %126 = arith.mulf %112, %125 : vector<8x128xf32>
    %127 = arith.truncf %126 : vector<8x128xf32> to vector<8x128xbf16>
    %c0_50 = arith.constant 0 : index
    %c0_51 = arith.constant 0 : index
    %128 = vector.load %arg14[%c0_50, %c0_51] : memref<128x32xbf16, #tpu.memory_space<vmem>>, vector<128x32xbf16>
    %cst_52 = arith.constant dense<0.000000e+00> : vector<8x32xf32>
    %129 = tpu.matmul %127, %128, %cst_52 {dimension_numbers = #tpu.dot_dimension_numbers<[1], [0], [0], [1], [0, 0, 1, 1], [], []>} : vector<8x128xbf16>, vector<128x32xbf16>, vector<8x32xf32> -> vector<8x32xf32>
    %c0_53 = arith.constant 0 : index
    %c0_54 = arith.constant 0 : index
    %130 = vector.load %arg15[%c0_53, %c0_54] : memref<1x32xf32, #tpu.memory_space<vmem>>, vector<1x32xf32>
    %131 = vector.broadcast %130 : vector<1x32xf32> to vector<8x32xf32>
    %132 = arith.addf %129, %131 : vector<8x32xf32>
    %133 = arith.addf %132, %84 : vector<8x32xf32>
    %134 = arith.truncf %133 : vector<8x32xf32> to vector<8x32xbf16>
    %c0_55 = arith.constant 0 : index
    %c0_56 = arith.constant 0 : index
    %c0_57 = arith.constant 0 : index
    %135 = vector.load %arg16[%c0_55, %c0_56, %c0_57] : memref<1x8x32xbf16, #tpu.memory_space<vmem>>, vector<1x8x32xbf16>
    %136 = vector.shape_cast %135 : vector<1x8x32xbf16> to vector<8x32xbf16>
    %137 = vector.shape_cast %134 : vector<8x32xbf16> to vector<1x8x32xbf16>
    tpu.vector_store %arg16[%c0_55, %c0_56, %c0_57], %137 {strides = array<i32>} : memref<1x8x32xbf16, #tpu.memory_space<vmem>>, vector<1x8x32xbf16>,
    return
  }
  func.func @transform_0(%arg0: i32) -> (i32, i32, i32) {
    %c0_i32 = arith.constant 0 : i32
    %c0_i32_0 = arith.constant 0 : i32
    %c0_i32_1 = arith.constant 0 : i32
    return %arg0, %c0_i32, %c0_i32_0 : i32, i32, i32
  }
  func.func @transform_1(%arg0: i32) -> (i32, i32) {
    %c0_i32 = arith.constant 0 : i32
    %c0_i32_0 = arith.constant 0 : i32
    %c0_i32_1 = arith.constant 0 : i32
    return %c0_i32, %c0_i32_0 : i32, i32
  }
  func.func @transform_2(%arg0: i32) -> (i32, i32) {
    %c0_i32 = arith.constant 0 : i32
    %c0_i32_0 = arith.constant 0 : i32
    %c0_i32_1 = arith.constant 0 : i32
    return %c0_i32, %c0_i32_0 : i32, i32
  }
  func.func @transform_3(%arg0: i32) -> (i32, i32) {
    %c0_i32 = arith.constant 0 : i32
    %c0_i32_0 = arith.constant 0 : i32
    %c0_i32_1 = arith.constant 0 : i32
    return %c0_i32, %c0_i32_0 : i32, i32
  }
  func.func @transform_4(%arg0: i32) -> (i32, i32) {
    %c0_i32 = arith.constant 0 : i32
    %c0_i32_0 = arith.constant 0 : i32
    %c0_i32_1 = arith.constant 0 : i32
    return %c0_i32, %c0_i32_0 : i32, i32
  }
  func.func @transform_5(%arg0: i32) -> (i32, i32) {
    %c0_i32 = arith.constant 0 : i32
    %c0_i32_0 = arith.constant 0 : i32
    %c0_i32_1 = arith.constant 0 : i32
    return %c0_i32, %c0_i32_0 : i32, i32
  }
  func.func @transform_6(%arg0: i32) -> (i32, i32) {
    %c0_i32 = arith.constant 0 : i32
    %c0_i32_0 = arith.constant 0 : i32
    %c0_i32_1 = arith.constant 0 : i32
    return %c0_i32, %c0_i32_0 : i32, i32
  }
  func.func @transform_7(%arg0: i32) -> (i32, i32) {
    %c0_i32 = arith.constant 0 : i32
    %c0_i32_0 = arith.constant 0 : i32
    %c0_i32_1 = arith.constant 0 : i32
    return %c0_i32, %c0_i32_0 : i32, i32
  }
  func.func @transform_8(%arg0: i32) -> (i32, i32) {
    %c0_i32 = arith.constant 0 : i32
    %c0_i32_0 = arith.constant 0 : i32
    %c0_i32_1 = arith.constant 0 : i32
    return %c0_i32, %c0_i32_0 : i32, i32
  }
  func.func @transform_9(%arg0: i32) -> (i32, i32) {
    %c0_i32 = arith.constant 0 : i32
    %c0_i32_0 = arith.constant 0 : i32
    %c0_i32_1 = arith.constant 0 : i32
    return %c0_i32, %c0_i32_0 : i32, i32
  }
  func.func @transform_10(%arg0: i32) -> (i32, i32) {
    %c0_i32 = arith.constant 0 : i32
    %c0_i32_0 = arith.constant 0 : i32
    %c0_i32_1 = arith.constant 0 : i32
    return %c0_i32, %c0_i32_0 : i32, i32
  }
  func.func @transform_11(%arg0: i32) -> (i32, i32) {
    %c0_i32 = arith.constant 0 : i32
    %c0_i32_0 = arith.constant 0 : i32
    %c0_i32_1 = arith.constant 0 : i32
    return %c0_i32, %c0_i32_0 : i32, i32
  }
  func.func @transform_12(%arg0: i32) -> (i32, i32) {
    %c0_i32 = arith.constant 0 : i32
    %c0_i32_0 = arith.constant 0 : i32
    %c0_i32_1 = arith.constant 0 : i32
    return %c0_i32, %c0_i32_0 : i32, i32
  }
  func.func @transform_13(%arg0: i32) -> (i32, i32) {
    %c0_i32 = arith.constant 0 : i32
    %c0_i32_0 = arith.constant 0 : i32
    %c0_i32_1 = arith.constant 0 : i32
    return %c0_i32, %c0_i32_0 : i32, i32
  }
  func.func @transform_14(%arg0: i32) -> (i32, i32) {
    %c0_i32 = arith.constant 0 : i32
    %c0_i32_0 = arith.constant 0 : i32
    %c0_i32_1 = arith.constant 0 : i32
    return %c0_i32, %c0_i32_0 : i32, i32
  }
  func.func @transform_15(%arg0: i32) -> (i32, i32, i32) {
    %c0_i32 = arith.constant 0 : i32
    %c0_i32_0 = arith.constant 0 : i32
    %c0_i32_1 = arith.constant 0 : i32
    return %arg0, %c0_i32, %c0_i32_0 : i32, i32, i32
  }
  func.func @transform_16(%arg0: i32) -> (i32, i32, i32, i32) {
    %c0_i32 = arith.constant 0 : i32
    %c0_i32_0 = arith.constant 0 : i32
    %c0_i32_1 = arith.constant 0 : i32
    %c0_i32_2 = arith.constant 0 : i32
    return %arg0, %c0_i32, %c0_i32_0, %c0_i32_1 : i32, i32, i32, i32
  }
}

</mosaic_0001>

<llo_original>
// kernel: transformer_forward.3
$region0: #{transformer_forward.3}
  #allocation0 [shape = 'u32[]', space=smem, size = 0x4, offset = 0x4, fixed_abs, tag = 'smem constant byte address 0x4 - core index']
  #allocation1 [shape = 'u32[144,128]{1,0:T(1,128)}', space=vmem, size = 0x12000, scoped, tag = 'internal scratch']
  %s0 = inlined_call_operand.vmem [shape: bf16[2,8,32], index: 0, kind: input, shape index: {}]
  %s1 = inlined_call_operand.vmem [shape: f32[1,32], index: 1, kind: input, shape index: {}]
  %s2 = inlined_call_operand.vmem [shape: f32[1,32], index: 2, kind: input, shape index: {}]
  %s3 = inlined_call_operand.vmem [shape: bf16[32,160], index: 3, kind: input, shape index: {}]
  %s4 = inlined_call_operand.vmem [shape: f32[8,32], index: 4, kind: input, shape index: {}]
  %s5 = inlined_call_operand.vmem [shape: f32[8,32], index: 5, kind: input, shape index: {}]
  %s6 = inlined_call_operand.vmem [shape: bf16[32,32], index: 6, kind: input, shape index: {}]
  %s7 = inlined_call_operand.vmem [shape: f32[1,32], index: 7, kind: input, shape index: {}]
  %s8 = inlined_call_operand.vmem [shape: f32[1,32], index: 8, kind: input, shape index: {}]
  %s9 = inlined_call_operand.vmem [shape: bf16[32,128], index: 9, kind: input, shape index: {}]
  %s10 = inlined_call_operand.vmem [shape: f32[1,128], index: 10, kind: input, shape index: {}]
  %s11 = inlined_call_operand.vmem [shape: bf16[32,128], index: 11, kind: input, shape index: {}]
  %s12 = inlined_call_operand.vmem [shape: f32[1,128], index: 12, kind: input, shape index: {}]
  %s13 = inlined_call_operand.vmem [shape: bf16[128,32], index: 13, kind: input, shape index: {}]
  %s14 = inlined_call_operand.vmem [shape: f32[1,32], index: 14, kind: input, shape index: {}]
  %s15 = inlined_call_operand.hbm [shape: bf16[2,8,32], index: 15, kind: output, shape index: {0}]
  %s16 = inlined_call_operand.vmem [shape: bf16[2,2,8,8], index: 16, kind: output, shape index: {1}]
  %17 = xla_tuple %s15, %s16
  %s18 = sld [smem:[#allocation0]]
  $region101: #{transformer_forward.3} parent=0
    _
  %s20 = ssub.s32 1, %s18
  %s21 = scalar_select 0, %s20, %s18
  $region1: #{transformer_forward.3} parent=0
    #allocation2 [shape = 'u8[4096]{0}', space=vmem, size = 0x1000, scoped, tag = 'output window, operand 0']
    #allocation3 [shape = 's32[2]{0}', space=sflag, size = 0x8, scoped, tag = 'scoped memory for transformer_forward.3']
    %22 = vsyncpa [#allocation3], 0
    %s23 = scalar_lea.sflag [#allocation3], 1
    %24 = vsyncpa %s23, 0
    loop: start=0, step=1, limit=4
    $region2: #{transformer_forward.3} parent=1 // loop_pre_header
      _
    $region3: #{transformer_forward.3} parent=1 // loop_header
      %s26 = sphi 0, %s30
      %p27 = scmp.ge.s32.totalorder %s26, 4
      %s36 = sphi 0, %s38
      %s39 = sphi 0, %s36
      %s40 = sphi 0, %s39
      %s56 = sphi 0, %s40
      %s60 = sphi 0, %s60
      %s62 = sphi 0, %s60
      %s63 = sphi 0, %s62
      %s77 = sphi 0, %s63
      %s81 = sphi 0, %s81
      %s83 = sphi 0, %s81
      %s84 = sphi 0, %s83
      %s98 = sphi 0, %s84
      %s102 = sphi 0, %s102
      %s104 = sphi 0, %s102
      %s105 = sphi 0, %s104
      %s119 = sphi 0, %s105
      %s123 = sphi 0, %s123
      %s125 = sphi 0, %s123
      %s126 = sphi 0, %s125
      %s140 = sphi 0, %s126
      %s144 = sphi 0, %s144
      %s146 = sphi 0, %s144
      %s147 = sphi 0, %s146
      %s161 = sphi 0, %s147
      %s165 = sphi 0, %s165
      %s167 = sphi 0, %s165
      %s168 = sphi 0, %s167
      %s182 = sphi 0, %s168
      %s186 = sphi 0, %s186
      %s188 = sphi 0, %s186
      %s189 = sphi 0, %s188
      %s203 = sphi 0, %s189
      %s207 = sphi 0, %s207
      %s209 = sphi 0, %s207
      %s210 = sphi 0, %s209
      %s224 = sphi 0, %s210
      %s228 = sphi 0, %s228
      %s230 = sphi 0, %s228
      %s231 = sphi 0, %s230
      %s245 = sphi 0, %s231
      %s249 = sphi 0, %s249
      %s251 = sphi 0, %s249
      %s252 = sphi 0, %s251
      %s266 = sphi 0, %s252
      %s270 = sphi 0, %s270
      %s272 = sphi 0, %s270
      %s273 = sphi 0, %s272
      %s287 = sphi 0, %s273
      %s291 = sphi 0, %s291
      %s293 = sphi 0, %s291
      %s294 = sphi 0, %s293
      %s308 = sphi 0, %s294
      %s312 = sphi 0, %s312
      %s314 = sphi 0, %s312
      %s315 = sphi 0, %s314
      %s329 = sphi 0, %s315
      %s333 = sphi 0, %s333
      %s335 = sphi 0, %s333
      %s336 = sphi 0, %s335
      %s350 = sphi 0, %s336
      %s356 = sphi 0, %s358
      %s359 = sphi 0, %s356
      %s360 = sphi 0, %s359
      %s376 = sphi 0, %s360
      %s382 = sphi 0, %s384
      %s385 = sphi 0, %s382
      %s386 = sphi 0, %s385
      %s402 = sphi 0, %s386
    $region4: #{transformer_forward.3} parent=1 // loop_header_branch
      %29 = sbr.rel (%p27) target = $region8
    $region5: #{transformer_forward.3} parent=1 // loop_body
      %s31 = ssub.s32 %s26, 1
      %s32 = ssub.s32 %s26, 2
      %s33 = sadd.s32 %s26, 1
      %s34 = ssub.s32 %s26, %s33
      %p35 = scmp.eq.s32.totalorder %s34, 0
      %s37 = sadd.s32 %s36, 1
      %s38 = scalar_select %p35, %s36, %s37
      %p41 = pneg %p35
      %p42 = scmp.eq.s32.totalorder %s26, 1
      %p43 = por %p41, %p42
      %p44 = scmp.ne.s32.totalorder %s36, %s39
      %p45 = scmp.eq.s32.totalorder %s26, 0
      %p46 = por %p44, %p45
      %p47 = scmp.ne.s32.totalorder %s36, %s39
      %p48 = scmp.eq.s32.totalorder %s31, 1
      %p49 = por %p47, %p48
      %p50 = scmp.ne.s32.totalorder %s39, %s40
      %p51 = scmp.eq.s32.totalorder %s31, 0
      %p52 = por %p50, %p51
      %p53 = scmp.ne.s32.totalorder %s39, %s40
      %p54 = scmp.eq.s32.totalorder %s32, 1
      %p55 = por %p53, %p54
      %p57 = scmp.ne.s32.totalorder %s40, %s56
      %p58 = scmp.eq.s32.totalorder %s32, 0
      %p59 = por %p57, %p58
      %s61 = sadd.s32 %s60, 1
      %p64 = scmp.eq.s32.totalorder %s26, 1
      %p65 = scmp.ne.s32.totalorder %s60, %s62
      %p66 = scmp.eq.s32.totalorder %s26, 0
      %p67 = por %p65, %p66
      %p68 = scmp.ne.s32.totalorder %s60, %s62
      %p69 = scmp.eq.s32.totalorder %s31, 1
      %p70 = por %p68, %p69
      %p71 = scmp.ne.s32.totalorder %s62, %s63
      %p72 = scmp.eq.s32.totalorder %s31, 0
      %p73 = por %p71, %p72
      %p74 = scmp.ne.s32.totalorder %s62, %s63
      %p75 = scmp.eq.s32.totalorder %s32, 1
      %p76 = por %p74, %p75
      %p78 = scmp.ne.s32.totalorder %s63, %s77
      %p79 = scmp.eq.s32.totalorder %s32, 0
      %p80 = por %p78, %p79
      %s82 = sadd.s32 %s81, 1
      %p85 = scmp.eq.s32.totalorder %s26, 1
      %p86 = scmp.ne.s32.totalorder %s81, %s83
      %p87 = scmp.eq.s32.totalorder %s26, 0
      %p88 = por %p86, %p87
      %p89 = scmp.ne.s32.totalorder %s81, %s83
      %p90 = scmp.eq.s32.totalorder %s31, 1
      %p91 = por %p89, %p90
      %p92 = scmp.ne.s32.totalorder %s83, %s84
      %p93 = scmp.eq.s32.totalorder %s31, 0
      %p94 = por %p92, %p93
      %p95 = scmp.ne.s32.totalorder %s83, %s84
      %p96 = scmp.eq.s32.totalorder %s32, 1
      %p97 = por %p95, %p96
      %p99 = scmp.ne.s32.totalorder %s84, %s98
      %p100 = scmp.eq.s32.totalorder %s32, 0
      %p101 = por %p99, %p100
      %s103 = sadd.s32 %s102, 1
      %p106 = scmp.eq.s32.totalorder %s26, 1
      %p107 = scmp.ne.s32.totalorder %s102, %s104
      %p108 = scmp.eq.s32.totalorder %s26, 0
      %p109 = por %p107, %p108
      %p110 = scmp.ne.s32.totalorder %s102, %s104
      %p111 = scmp.eq.s32.totalorder %s31, 1
      %p112 = por %p110, %p111
      %p113 = scmp.ne.s32.totalorder %s104, %s105
      %p114 = scmp.eq.s32.totalorder %s31, 0
      %p115 = por %p113, %p114
      %p116 = scmp.ne.s32.totalorder %s104, %s105
      %p117 = scmp.eq.s32.totalorder %s32, 1
      %p118 = por %p116, %p117
      %p120 = scmp.ne.s32.totalorder %s105, %s119
      %p121 = scmp.eq.s32.totalorder %s32, 0
      %p122 = por %p120, %p121
      %s124 = sadd.s32 %s123, 1
      %p127 = scmp.eq.s32.totalorder %s26, 1
      %p128 = scmp.ne.s32.totalorder %s123, %s125
      %p129 = scmp.eq.s32.totalorder %s26, 0
      %p130 = por %p128, %p129
      %p131 = scmp.ne.s32.totalorder %s123, %s125
      %p132 = scmp.eq.s32.totalorder %s31, 1
      %p133 = por %p131, %p132
      %p134 = scmp.ne.s32.totalorder %s125, %s126
      %p135 = scmp.eq.s32.totalorder %s31, 0
      %p136 = por %p134, %p135
      %p137 = scmp.ne.s32.totalorder %s125, %s126
      %p138 = scmp.eq.s32.totalorder %s32, 1
      %p139 = por %p137, %p138
      %p141 = scmp.ne.s32.totalorder %s126, %s140
      %p142 = scmp.eq.s32.totalorder %s32, 0
      %p143 = por %p141, %p142
      %s145 = sadd.s32 %s144, 1
      %p148 = scmp.eq.s32.totalorder %s26, 1
      %p149 = scmp.ne.s32.totalorder %s144, %s146
      %p150 = scmp.eq.s32.totalorder %s26, 0
      %p151 = por %p149, %p150
      %p152 = scmp.ne.s32.totalorder %s144, %s146
      %p153 = scmp.eq.s32.totalorder %s31, 1
      %p154 = por %p152, %p153
      %p155 = scmp.ne.s32.totalorder %s146, %s147
      %p156 = scmp.eq.s32.totalorder %s31, 0
      %p157 = por %p155, %p156
      %p158 = scmp.ne.s32.totalorder %s146, %s147
      %p159 = scmp.eq.s32.totalorder %s32, 1
      %p160 = por %p158, %p159
      %p162 = scmp.ne.s32.totalorder %s147, %s161
      %p163 = scmp.eq.s32.totalorder %s32, 0
      %p164 = por %p162, %p163
      %s166 = sadd.s32 %s165, 1
      %p169 = scmp.eq.s32.totalorder %s26, 1
      %p170 = scmp.ne.s32.totalorder %s165, %s167
      %p171 = scmp.eq.s32.totalorder %s26, 0
      %p172 = por %p170, %p171
      %p173 = scmp.ne.s32.totalorder %s165, %s167
      %p174 = scmp.eq.s32.totalorder %s31, 1
      %p175 = por %p173, %p174
      %p176 = scmp.ne.s32.totalorder %s167, %s168
      %p177 = scmp.eq.s32.totalorder %s31, 0
      %p178 = por %p176, %p177
      %p179 = scmp.ne.s32.totalorder %s167, %s168
      %p180 = scmp.eq.s32.totalorder %s32, 1
      %p181 = por %p179, %p180
      %p183 = scmp.ne.s32.totalorder %s168, %s182
      %p184 = scmp.eq.s32.totalorder %s32, 0
      %p185 = por %p183, %p184
      %s187 = sadd.s32 %s186, 1
      %p190 = scmp.eq.s32.totalorder %s26, 1
      %p191 = scmp.ne.s32.totalorder %s186, %s188
      %p192 = scmp.eq.s32.totalorder %s26, 0
      %p193 = por %p191, %p192
      %p194 = scmp.ne.s32.totalorder %s186, %s188
      %p195 = scmp.eq.s32.totalorder %s31, 1
      %p196 = por %p194, %p195
      %p197 = scmp.ne.s32.totalorder %s188, %s189
      %p198 = scmp.eq.s32.totalorder %s31, 0
      %p199 = por %p197, %p198
      %p200 = scmp.ne.s32.totalorder %s188, %s189
      %p201 = scmp.eq.s32.totalorder %s32, 1
      %p202 = por %p200, %p201
      %p204 = scmp.ne.s32.totalorder %s189, %s203
      %p205 = scmp.eq.s32.totalorder %s32, 0
      %p206 = por %p204, %p205
      %s208 = sadd.s32 %s207, 1
      %p211 = scmp.eq.s32.totalorder %s26, 1
      %p212 = scmp.ne.s32.totalorder %s207, %s209
      %p213 = scmp.eq.s32.totalorder %s26, 0
      %p214 = por %p212, %p213
      %p215 = scmp.ne.s32.totalorder %s207, %s209
      %p216 = scmp.eq.s32.totalorder %s31, 1
      %p217 = por %p215, %p216
      %p218 = scmp.ne.s32.totalorder %s209, %s210
      %p219 = scmp.eq.s32.totalorder %s31, 0
      %p220 = por %p218, %p219
      %p221 = scmp.ne.s32.totalorder %s209, %s210
      %p222 = scmp.eq.s32.totalorder %s32, 1
      %p223 = por %p221, %p222
      %p225 = scmp.ne.s32.totalorder %s210, %s224
      %p226 = scmp.eq.s32.totalorder %s32, 0
      %p227 = por %p225, %p226
      %s229 = sadd.s32 %s228, 1
      %p232 = scmp.eq.s32.totalorder %s26, 1
      %p233 = scmp.ne.s32.totalorder %s228, %s230
      %p234 = scmp.eq.s32.totalorder %s26, 0
      %p235 = por %p233, %p234
      %p236 = scmp.ne.s32.totalorder %s228, %s230
      %p237 = scmp.eq.s32.totalorder %s31, 1
      %p238 = por %p236, %p237
      %p239 = scmp.ne.s32.totalorder %s230, %s231
      %p240 = scmp.eq.s32.totalorder %s31, 0
      %p241 = por %p239, %p240
      %p242 = scmp.ne.s32.totalorder %s230, %s231
      %p243 = scmp.eq.s32.totalorder %s32, 1
      %p244 = por %p242, %p243
      %p246 = scmp.ne.s32.totalorder %s231, %s245
      %p247 = scmp.eq.s32.totalorder %s32, 0
      %p248 = por %p246, %p247
      %s250 = sadd.s32 %s249, 1
      %p253 = scmp.eq.s32.totalorder %s26, 1
      %p254 = scmp.ne.s32.totalorder %s249, %s251
      %p255 = scmp.eq.s32.totalorder %s26, 0
      %p256 = por %p254, %p255
      %p257 = scmp.ne.s32.totalorder %s249, %s251
      %p258 = scmp.eq.s32.totalorder %s31, 1
      %p259 = por %p257, %p258
      %p260 = scmp.ne.s32.totalorder %s251, %s252
      %p261 = scmp.eq.s32.totalorder %s31, 0
      %p262 = por %p260, %p261
      %p263 = scmp.ne.s32.totalorder %s251, %s252
      %p264 = scmp.eq.s32.totalorder %s32, 1
      %p265 = por %p263, %p264
      %p267 = scmp.ne.s32.totalorder %s252, %s266
      %p268 = scmp.eq.s32.totalorder %s32, 0
      %p269 = por %p267, %p268
      %s271 = sadd.s32 %s270, 1
      %p274 = scmp.eq.s32.totalorder %s26, 1
      %p275 = scmp.ne.s32.totalorder %s270, %s272
      %p276 = scmp.eq.s32.totalorder %s26, 0
      %p277 = por %p275, %p276
      %p278 = scmp.ne.s32.totalorder %s270, %s272
      %p279 = scmp.eq.s32.totalorder %s31, 1
      %p280 = por %p278, %p279
      %p281 = scmp.ne.s32.totalorder %s272, %s273
      %p282 = scmp.eq.s32.totalorder %s31, 0
      %p283 = por %p281, %p282
      %p284 = scmp.ne.s32.totalorder %s272, %s273
      %p285 = scmp.eq.s32.totalorder %s32, 1
      %p286 = por %p284, %p285
      %p288 = scmp.ne.s32.totalorder %s273, %s287
      %p289 = scmp.eq.s32.totalorder %s32, 0
      %p290 = por %p288, %p289
      %s292 = sadd.s32 %s291, 1
      %p295 = scmp.eq.s32.totalorder %s26, 1
      %p296 = scmp.ne.s32.totalorder %s291, %s293
      %p297 = scmp.eq.s32.totalorder %s26, 0
      %p298 = por %p296, %p297
      %p299 = scmp.ne.s32.totalorder %s291, %s293
      %p300 = scmp.eq.s32.totalorder %s31, 1
      %p301 = por %p299, %p300
      %p302 = scmp.ne.s32.totalorder %s293, %s294
      %p303 = scmp.eq.s32.totalorder %s31, 0
      %p304 = por %p302, %p303
      %p305 = scmp.ne.s32.totalorder %s293, %s294
      %p306 = scmp.eq.s32.totalorder %s32, 1
      %p307 = por %p305, %p306
      %p309 = scmp.ne.s32.totalorder %s294, %s308
      %p310 = scmp.eq.s32.totalorder %s32, 0
      %p311 = por %p309, %p310
      %s313 = sadd.s32 %s312, 1
      %p316 = scmp.eq.s32.totalorder %s26, 1
      %p317 = scmp.ne.s32.totalorder %s312, %s314
      %p318 = scmp.eq.s32.totalorder %s26, 0
      %p319 = por %p317, %p318
      %p320 = scmp.ne.s32.totalorder %s312, %s314
      %p321 = scmp.eq.s32.totalorder %s31, 1
      %p322 = por %p320, %p321
      %p323 = scmp.ne.s32.totalorder %s314, %s315
      %p324 = scmp.eq.s32.totalorder %s31, 0
      %p325 = por %p323, %p324
      %p326 = scmp.ne.s32.totalorder %s314, %s315
      %p327 = scmp.eq.s32.totalorder %s32, 1
      %p328 = por %p326, %p327
      %p330 = scmp.ne.s32.totalorder %s315, %s329
      %p331 = scmp.eq.s32.totalorder %s32, 0
      %p332 = por %p330, %p331
      %s334 = sadd.s32 %s333, 1
      %p337 = scmp.eq.s32.totalorder %s26, 1
      %p338 = scmp.ne.s32.totalorder %s333, %s335
      %p339 = scmp.eq.s32.totalorder %s26, 0
      %p340 = por %p338, %p339
      %p341 = scmp.ne.s32.totalorder %s333, %s335
      %p342 = scmp.eq.s32.totalorder %s31, 1
      %p343 = por %p341, %p342
      %p344 = scmp.ne.s32.totalorder %s335, %s336
      %p345 = scmp.eq.s32.totalorder %s31, 0
      %p346 = por %p344, %p345
      %p347 = scmp.ne.s32.totalorder %s335, %s336
      %p348 = scmp.eq.s32.totalorder %s32, 1
      %p349 = por %p347, %p348
      %p351 = scmp.ne.s32.totalorder %s336, %s350
      %p352 = scmp.eq.s32.totalorder %s32, 0
      %p353 = por %p351, %p352
      %s354 = ssub.s32 %s26, %s33
      %p355 = scmp.eq.s32.totalorder %s354, 0
      %s357 = sadd.s32 %s356, 1
      %s358 = scalar_select %p355, %s356, %s357
      %p361 = pneg %p355
      %p362 = scmp.eq.s32.totalorder %s26, 1
      %p363 = por %p361, %p362
      %p364 = scmp.ne.s32.totalorder %s356, %s359
      %p365 = scmp.eq.s32.totalorder %s26, 0
      %p366 = por %p364, %p365
      %p367 = scmp.ne.s32.totalorder %s356, %s359
      %p368 = scmp.eq.s32.totalorder %s31, 1
      %p369 = por %p367, %p368
      %p370 = scmp.ne.s32.totalorder %s359, %s360
      %p371 = scmp.eq.s32.totalorder %s31, 0
      %p372 = por %p370, %p371
      %p373 = scmp.ne.s32.totalorder %s359, %s360
      %p374 = scmp.eq.s32.totalorder %s32, 1
      %p375 = por %p373, %p374
      %p377 = scmp.ne.s32.totalorder %s360, %s376
      %p378 = scmp.eq.s32.totalorder %s32, 0
      %p379 = por %p377, %p378
      %s380 = ssub.s32 %s26, %s33
      %p381 = scmp.eq.s32.totalorder %s380, 0
      %s383 = sadd.s32 %s382, 1
      %s384 = scalar_select %p381, %s382, %s383
      %p387 = pneg %p381
      %p388 = scmp.eq.s32.totalorder %s26, 1
      %p389 = por %p387, %p388
      %p390 = scmp.ne.s32.totalorder %s382, %s385
      %p391 = scmp.eq.s32.totalorder %s26, 0
      %p392 = por %p390, %p391
      %p393 = scmp.ne.s32.totalorder %s382, %s385
      %p394 = scmp.eq.s32.totalorder %s31, 1
      %p395 = por %p393, %p394
      %p396 = scmp.ne.s32.totalorder %s385, %s386
      %p397 = scmp.eq.s32.totalorder %s31, 0
      %p398 = por %p396, %p397
      %p399 = scmp.ne.s32.totalorder %s385, %s386
      %p400 = scmp.eq.s32.totalorder %s32, 1
      %p401 = por %p399, %p400
      %p403 = scmp.ne.s32.totalorder %s386, %s402
      %p404 = scmp.eq.s32.totalorder %s32, 0
      %p405 = por %p403, %p404
      %p406 = scmp.le.s32.totalorder 1, %s26
      %p407 = scmp.lt.s32.totalorder %s26, 3
      %p408 = pnand %p406, %p407
      %p409 = pneg %p408
      // Predicated region
      $region9: #{transformer_forward.3} parent=5 // pred_check
        _
      $region10: #{transformer_forward.3} parent=5 // pred_check_branch
        %411 = sbr.rel (%p408) target = $region12
      $region11: #{transformer_forward.3} parent=5 // pred_region
        %s412 = ssub.s32 %s26, 1
        // Predicated region
        $region13: #{transformer_forward.3} parent=11 // pred_check
          %p413 = pneg %p73
        $region14: #{transformer_forward.3} parent=11 // pred_check_branch
          %415 = sbr.rel (%p413) target = $region16
        $region15: #{transformer_forward.3} parent=11 // pred_region
          _
        $region16: #{transformer_forward.3} parent=11 // pred_fallthru
          _
        // Predicated region
        $region17: #{transformer_forward.3} parent=11 // pred_check
          %p416 = pneg %p94
        $region18: #{transformer_forward.3} parent=11 // pred_check_branch
          %418 = sbr.rel (%p416) target = $region20
        $region19: #{transformer_forward.3} parent=11 // pred_region
          _
        $region20: #{transformer_forward.3} parent=11 // pred_fallthru
          _
        // Predicated region
        $region21: #{transformer_forward.3} parent=11 // pred_check
          %p419 = pneg %p115
        $region22: #{transformer_forward.3} parent=11 // pred_check_branch
          %421 = sbr.rel (%p419) target = $region24
        $region23: #{transformer_forward.3} parent=11 // pred_region
          _
        $region24: #{transformer_forward.3} parent=11 // pred_fallthru
          _
        // Predicated region
        $region25: #{transformer_forward.3} parent=11 // pred_check
          %p422 = pneg %p136
        $region26: #{transformer_forward.3} parent=11 // pred_check_branch
          %424 = sbr.rel (%p422) target = $region28
        $region27: #{transformer_forward.3} parent=11 // pred_region
          _
        $region28: #{transformer_forward.3} parent=11 // pred_fallthru
          _
        // Predicated region
        $region29: #{transformer_forward.3} parent=11 // pred_check
          %p425 = pneg %p157
        $region30: #{transformer_forward.3} parent=11 // pred_check_branch
          %427 = sbr.rel (%p425) target = $region32
        $region31: #{transformer_forward.3} parent=11 // pred_region
          _
        $region32: #{transformer_forward.3} parent=11 // pred_fallthru
          _
        // Predicated region
        $region33: #{transformer_forward.3} parent=11 // pred_check
          %p428 = pneg %p178
        $region34: #{transformer_forward.3} parent=11 // pred_check_branch
          %430 = sbr.rel (%p428) target = $region36
        $region35: #{transformer_forward.3} parent=11 // pred_region
          _
        $region36: #{transformer_forward.3} parent=11 // pred_fallthru
          _
        // Predicated region
        $region37: #{transformer_forward.3} parent=11 // pred_check
          %p431 = pneg %p199
        $region38: #{transformer_forward.3} parent=11 // pred_check_branch
          %433 = sbr.rel (%p431) target = $region40
        $region39: #{transformer_forward.3} parent=11 // pred_region
          _
        $region40: #{transformer_forward.3} parent=11 // pred_fallthru
          _
        // Predicated region
        $region41: #{transformer_forward.3} parent=11 // pred_check
          %p434 = pneg %p220
        $region42: #{transformer_forward.3} parent=11 // pred_check_branch
          %436 = sbr.rel (%p434) target = $region44
        $region43: #{transformer_forward.3} parent=11 // pred_region
          _
        $region44: #{transformer_forward.3} parent=11 // pred_fallthru
          _
        // Predicated region
        $region45: #{transformer_forward.3} parent=11 // pred_check
          %p437 = pneg %p241
        $region46: #{transformer_forward.3} parent=11 // pred_check_branch
          %439 = sbr.rel (%p437) target = $region48
        $region47: #{transformer_forward.3} parent=11 // pred_region
          _
        $region48: #{transformer_forward.3} parent=11 // pred_fallthru
          _
        // Predicated region
        $region49: #{transformer_forward.3} parent=11 // pred_check
          %p440 = pneg %p262
        $region50: #{transformer_forward.3} parent=11 // pred_check_branch
          %442 = sbr.rel (%p440) target = $region52
        $region51: #{transformer_forward.3} parent=11 // pred_region
          _
        $region52: #{transformer_forward.3} parent=11 // pred_fallthru
          _
        // Predicated region
        $region53: #{transformer_forward.3} parent=11 // pred_check
          %p443 = pneg %p283
        $region54: #{transformer_forward.3} parent=11 // pred_check_branch
          %445 = sbr.rel (%p443) target = $region56
        $region55: #{transformer_forward.3} parent=11 // pred_region
          _
        $region56: #{transformer_forward.3} parent=11 // pred_fallthru
          _
        // Predicated region
        $region57: #{transformer_forward.3} parent=11 // pred_check
          %p446 = pneg %p304
        $region58: #{transformer_forward.3} parent=11 // pred_check_branch
          %448 = sbr.rel (%p446) target = $region60
        $region59: #{transformer_forward.3} parent=11 // pred_region
          _
        $region60: #{transformer_forward.3} parent=11 // pred_fallthru
          _
        // Predicated region
        $region61: #{transformer_forward.3} parent=11 // pred_check
          %p449 = pneg %p325
        $region62: #{transformer_forward.3} parent=11 // pred_check_branch
          %451 = sbr.rel (%p449) target = $region64
        $region63: #{transformer_forward.3} parent=11 // pred_region
          _
        $region64: #{transformer_forward.3} parent=11 // pred_fallthru
          _
        // Predicated region
        $region65: #{transformer_forward.3} parent=11 // pred_check
          %p452 = pneg %p346
        $region66: #{transformer_forward.3} parent=11 // pred_check_branch
          %454 = sbr.rel (%p452) target = $region68
        $region67: #{transformer_forward.3} parent=11 // pred_region
          _
        $region68: #{transformer_forward.3} parent=11 // pred_fallthru
          _
      $region12: #{transformer_forward.3} parent=5 // pred_fallthru
        _
      %p455 = scmp.lt.s32.totalorder %s26, 2
      // Predicated region
      $region69: #{transformer_forward.3} parent=5 // pred_check
        %p456 = pneg %p455
      $region70: #{transformer_forward.3} parent=5 // pred_check_branch
        %458 = sbr.rel (%p456) target = $region72
      $region71: #{transformer_forward.3} parent=5 // pred_region
        // Predicated region
        $region73: #{transformer_forward.3} parent=71 // pred_check
          %p459 = pneg %p46
        $region74: #{transformer_forward.3} parent=71 // pred_check_branch
          %461 = sbr.rel (%p459) target = $region76
        $region75: #{transformer_forward.3} parent=71 // pred_region
          %p462 = scmp.lt.s32.totalorder %s26, 1
          %s463 = scalar_select %p462, %s26, 1
          %s464 = smul.addr %s463, 4
          %s465 = scalar_lea.vmem %s0, %s464
        $region76: #{transformer_forward.3} parent=71 // pred_fallthru
          _
      $region72: #{transformer_forward.3} parent=5 // pred_fallthru
        _
      %p466 = scmp.le.s32.totalorder 1, %s26
      %p467 = scmp.lt.s32.totalorder %s26, 3
      %p468 = pnand %p466, %p467
      %p469 = pneg %p468
      // Predicated region
      $region77: #{transformer_forward.3} parent=5 // pred_check
        _
      $region78: #{transformer_forward.3} parent=5 // pred_check_branch
        %471 = sbr.rel (%p468) target = $region80
      $region79: #{transformer_forward.3} parent=5 // pred_region
        %s472 = ssub.s32 %s26, 1
        %p473 = scmp.lt.s32.totalorder %s31, 1
        %s474 = scalar_select %p473, %s31, 1
        %s475 = smul.addr %s474, 4
        %s476 = scalar_lea.vmem %s0, %s475
        %p477 = pneg %p52
        %p478 = pneg %p49
        %p479 = pneg %p73
        %p480 = pneg %p70
        %p481 = pneg %p94
        %p482 = pneg %p91
        %p483 = pneg %p115
        %p484 = pneg %p112
        %p485 = pneg %p136
        %p486 = pneg %p133
        %p487 = pneg %p157
        %p488 = pneg %p154
        %p489 = pneg %p178
        %p490 = pneg %p175
        %p491 = pneg %p199
        %p492 = pneg %p196
        %p493 = pneg %p220
        %p494 = pneg %p217
        %p495 = pneg %p241
        %p496 = pneg %p238
        %p497 = pneg %p262
        %p498 = pneg %p259
        %p499 = pneg %p283
        %p500 = pneg %p280
        %p501 = pneg %p304
        %p502 = pneg %p301
        %p503 = pneg %p325
        %p504 = pneg %p322
        %p505 = pneg %p346
        %p506 = pneg %p343
        %p507 = pneg %p372
        %p508 = pneg %p369
        %s509 = sand.u32 %s359, 1
        %s510 = scalar_lea.sflag [#allocation3], %s509
        %s511 = sand.u32 %s359, 1
        %s512 = smul.addr %s511, 4
        %s513 = scalar_lea.vmem [#allocation2], %s512
        %p514 = pneg %p398
        %p515 = pneg %p395
        %p516 = scmp.lt.s32.totalorder %s31, 1
        %s517 = scalar_select %p516, %s31, 1
        %s518 = smul.addr %s517, 2
        %s519 = smul.addr %s518, 4
        %s520 = scalar_lea.vmem %s16, %s519
        %p521 = scmp.lt.s32.totalorder %s31, 1
        %s522 = scalar_select %p521, %s31, 1
        %s523 = smul.addr %s522, 4
        %s524 = scalar_lea.vmem %s0, %s523
        %p525 = scmp.lt.s32.totalorder %s31, 1
        %s526 = scalar_select %p525, %s31, 1
        %s527 = smul.addr %s526, 2
        %s528 = smul.addr %s527, 4
        %s529 = scalar_lea.vmem %s16, %s528
        %v531 = vld [vmem:[%s524] sm:$0xf]
        %v532 = vunpack.c.l.bf16 %v531
        %v533 = vld [vmem:[%s1] sm:$0x1]
        %v534 = vld [vmem:[%s2] sm:$0x1]
        %vm535 = vcmask 261120
        %v536 = vsel %vm535, %v532, 0.0
        %537 = vadd.xlane.f32.xlu0 %v536
        %v538 = vpop.xlane.xlu0 %537
        %v539 = vrcp.pop 32.0
        %v540 = vmul.f32 %v538, %v539
        %v541 = vsub.f32 %v532, %v540
        %v542 = vmul.f32 %v541, %v541
        %v543 = vsel %vm535, %v542, 0.0
        %544 = vadd.xlane.f32.xlu0 %v543
        %v545 = vpop.xlane.xlu0 %544
        %v546 = vmul.f32 %v545, %v539
        %v547 = vadd.f32 %v546, 1e-05
        %v548 = vrsqrt.pop %v547
        %v549 = vmul.f32 %v541, %v548
        %v551 = vlaneseq
        %v552 = vshrl.u32 %v551, 7
        %v553 = vsub.s32 0, %v552
        %v554 = vrot.slane %v533, %v553
        %v556 = vmul.f32 %v549, %v554
        %v558 = vlaneseq
        %v559 = vshrl.u32 %v558, 7
        %v560 = vsub.s32 0, %v559
        %v561 = vrot.slane %v534, %v560
        %v563 = vadd.f32 %v556, %v561
        %v564 = vpack.c.bf16 %v563, %v563
        %v565 = vld [vmem:[%s3] sm:$0xff]
        %v566 = vld [vmem:[%s3 + $0x8] sm:$0xff]
        %v567 = vld [vmem:[%s3 + $0x10] sm:$0xff]
        %v568 = vld [vmem:[%s3 + $0x18] sm:$0xff]
        %v573 = vunpack.c.l.b16 %v565
        %v574 = vunpack.c.h.b16 %v565
        %v575 = vunpack.c.l.b16 %v566
        %v576 = vunpack.c.h.b16 %v566
        %v577 = vunpack.c.l.b16 %v567
        %v578 = vunpack.c.h.b16 %v567
        %v579 = vunpack.c.l.b16 %v568
        %v580 = vunpack.c.h.b16 %v568
        %v581 = vpack.c.b16 %v575, %v573
        %v582 = vpack.c.b16 %v576, %v574
        %v583 = vpack.c.b16 %v579, %v577
        %v584 = vpack.c.b16 %v580, %v578
        %v590 = vsel %vm535, %v564, 0
        %592 = vmatprep.subr.bf16.mxu0 %v582
        %593 = vmatpush1.bf16.msra.mxu0 %v581
        %594 = vmatprep.subr.bf16.mxu0 %v584
        %595 = vmatpush1.bf16.msra.mxu0 %v583
        %596 = vmatprep.subr.bf16.mxu0 0
        %597 = vmatpush1.bf16.msra.mxu0 0
        %598 = vmatprep.subr.bf16.mxu0 0
        %599 = vmatpush1.bf16.msra.mxu0 0
        %600 = vmatprep.subr.bf16.mxu0 0
        %601 = vmatpush1.bf16.msra.mxu0 0
        %602 = vmatprep.subr.bf16.mxu0 0
        %603 = vmatpush1.bf16.msra.mxu0 0
        %604 = vmatprep.subr.bf16.mxu0 0
        %605 = vmatpush1.bf16.msra.mxu0 0
        %606 = vmatprep.subr.bf16.mxu0 0
        %607 = vmatpush1.bf16.msra.mxu0 0
        %608 = vmatprep.subr.bf16.mxu0 0
        %609 = vmatpush1.bf16.msra.mxu0 0
        %610 = vmatprep.subr.bf16.mxu0 0
        %611 = vmatpush1.bf16.msra.mxu0 0
        %612 = vmatprep.subr.bf16.mxu0 0
        %613 = vmatpush1.bf16.msra.mxu0 0
        %614 = vmatprep.subr.bf16.mxu0 0
        %615 = vmatpush1.bf16.msra.mxu0 0
        %616 = vmatprep.subr.bf16.mxu0 0
        %617 = vmatpush1.bf16.msra.mxu0 0
        %618 = vmatprep.subr.bf16.mxu0 0
        %619 = vmatpush1.bf16.msra.mxu0 0
        %620 = vmatprep.subr.bf16.mxu0 0
        %621 = vmatpush1.bf16.msra.mxu0 0
        %622 = vmatprep.subr.bf16.mxu0 0
        %623 = vmatpush1.bf16.msra.mxu0 0
        %624 = vmatprep.mubr.bf16.mxu0 0
        %625 = vmatmul.mubr.bf16.gmra.mrb[0].mxu0 %v590
        %v626 = vpop.f32.mrb[0].mxu0
        %v627 = vadd.f32 0.0, %v626
        %v628 = vpop.f32.mrb[0].mxu0
        %v629 = vadd.f32 0.0, %v628
        %v630 = vpop.f32.mrb[0].mxu0
        %v631 = vpop.f32.mrb[0].mxu0
        %632 = vdwg.mxu0
        %v633 = vld [vmem:[%s4] sm:$0xff]
        %v634 = vld [vmem:[%s5] sm:$0xff]
        %v635 = vmul.f32 %v627, %v633
        %637 = vrot.lane.b32.xlu0 %v634, 32
        %v638 = vpop.permute.xlu0 %637
        %v640 = vmul.f32 %v627, %v638
        %642 = vrot.lane.b32.xlu0 %v640, 96
        %v643 = vpop.permute.xlu0 %642
        %v645 = vadd.f32 %v635, %v643
        %647 = vrot.lane.b32.xlu0 %v633, 64
        %v648 = vpop.permute.xlu0 %647
        %v650 = vmul.f32 %v627, %v648
        %651 = vrot.lane.b32.xlu0 %v634, 96
        %v652 = vpop.permute.xlu0 %651
        %v654 = vmul.f32 %v627, %v652
        %656 = vrot.lane.b32.xlu0 %v654, 96
        %v657 = vpop.permute.xlu0 %656
        %v659 = vadd.f32 %v650, %v657
        %661 = vrot.lane.b32.xlu0 %v645, 112
        %v662 = vpop.permute.xlu0 %661
        %v664 = vpack.c.bf16 %v645, %v645
        %v665 = vpack.c.bf16 %v662, %v662
        %667 = vrot.lane.b32.xlu0 %v659, 112
        %v668 = vpop.permute.xlu0 %667
        %v670 = vpack.c.bf16 %v659, %v659
        %v671 = vpack.c.bf16 %v668, %v668
        %673 = vrot.lane.b32.xlu0 %v629, 112
        %v674 = vpop.permute.xlu0 %673
        %v676 = vpack.c.bf16 %v629, %v629
        %v677 = vpack.c.bf16 %v674, %v674
        %679 = vrot.lane.b32.xlu0 %v670, 64
        %v680 = vpop.permute.xlu0 %679
        %vm681 = vcmask 130048
        %v683 = vsel %vm681, %v664, 0
        %v686 = vsel %vm681, %v680, 0
        %688 = vmatprep.subr.bf16.mxu0 0
        %689 = vmatpush1.bf16.xpose.msra.mxu0 %v686
        %690 = vmatprep.subr.bf16.mxu0 0
        %691 = vmatpush1.bf16.xpose.msra.mxu0 0
        %692 = vmatprep.subr.bf16.mxu0 0
        %693 = vmatpush1.bf16.xpose.msra.mxu0 0
        %694 = vmatprep.subr.bf16.mxu0 0
        %695 = vmatpush1.bf16.xpose.msra.mxu0 0
        %696 = vmatprep.subr.bf16.mxu0 0
        %697 = vmatpush1.bf16.xpose.msra.mxu0 0
        %698 = vmatprep.subr.bf16.mxu0 0
        %699 = vmatpush1.bf16.xpose.msra.mxu0 0
        %700 = vmatprep.subr.bf16.mxu0 0
        %701 = vmatpush1.bf16.xpose.msra.mxu0 0
        %702 = vmatprep.subr.bf16.mxu0 0
        %703 = vmatpush1.bf16.xpose.msra.mxu0 0
        %704 = vmatprep.subr.bf16.mxu0 0
        %705 = vmatpush1.bf16.xpose.msra.mxu0 0
        %706 = vmatprep.subr.bf16.mxu0 0
        %707 = vmatpush1.bf16.xpose.msra.mxu0 0
        %708 = vmatprep.subr.bf16.mxu0 0
        %709 = vmatpush1.bf16.xpose.msra.mxu0 0
        %710 = vmatprep.subr.bf16.mxu0 0
        %711 = vmatpush1.bf16.xpose.msra.mxu0 0
        %712 = vmatprep.subr.bf16.mxu0 0
        %713 = vmatpush1.bf16.xpose.msra.mxu0 0
        %714 = vmatprep.subr.bf16.mxu0 0
        %715 = vmatpush1.bf16.xpose.msra.mxu0 0
        %716 = vmatprep.subr.bf16.mxu0 0
        %717 = vmatpush1.bf16.xpose.msra.mxu0 0
        %718 = vmatprep.subr.bf16.mxu0 0
        %719 = vmatpush1.bf16.xpose.msra.mxu0 0
        %720 = vmatprep.mubr.bf16.mxu0 0
        %721 = vmatmul.mubr.bf16.gmra.mrb[0].mxu0 %v683
        %v722 = vpop.f32.mrb[0].mxu0
        %v723 = vadd.f32 0.0, %v722
        %v724 = vpop.f32.mrb[0].mxu0
        %v725 = vpop.f32.mrb[0].mxu0
        %v726 = vpop.f32.mrb[0].mxu0
        %727 = vdwg.mxu0
        %729 = vrot.lane.b32.xlu0 %v671, 64
        %v730 = vpop.permute.xlu0 %729
        %v732 = vsel %vm681, %v665, 0
        %v735 = vsel %vm681, %v730, 0
        %737 = vmatprep.subr.bf16.mxu0 0
        %738 = vmatpush1.bf16.xpose.msra.mxu0 %v735
        %739 = vmatprep.subr.bf16.mxu0 0
        %740 = vmatpush1.bf16.xpose.msra.mxu0 0
        %741 = vmatprep.subr.bf16.mxu0 0
        %742 = vmatpush1.bf16.xpose.msra.mxu0 0
        %743 = vmatprep.subr.bf16.mxu0 0
        %744 = vmatpush1.bf16.xpose.msra.mxu0 0
        %745 = vmatprep.subr.bf16.mxu0 0
        %746 = vmatpush1.bf16.xpose.msra.mxu0 0
        %747 = vmatprep.subr.bf16.mxu0 0
        %748 = vmatpush1.bf16.xpose.msra.mxu0 0
        %749 = vmatprep.subr.bf16.mxu0 0
        %750 = vmatpush1.bf16.xpose.msra.mxu0 0
        %751 = vmatprep.subr.bf16.mxu0 0
        %752 = vmatpush1.bf16.xpose.msra.mxu0 0
        %753 = vmatprep.subr.bf16.mxu0 0
        %754 = vmatpush1.bf16.xpose.msra.mxu0 0
        %755 = vmatprep.subr.bf16.mxu0 0
        %756 = vmatpush1.bf16.xpose.msra.mxu0 0
        %757 = vmatprep.subr.bf16.mxu0 0
        %758 = vmatpush1.bf16.xpose.msra.mxu0 0
        %759 = vmatprep.subr.bf16.mxu0 0
        %760 = vmatpush1.bf16.xpose.msra.mxu0 0
        %761 = vmatprep.subr.bf16.mxu0 0
        %762 = vmatpush1.bf16.xpose.msra.mxu0 0
        %763 = vmatprep.subr.bf16.mxu0 0
        %764 = vmatpush1.bf16.xpose.msra.mxu0 0
        %765 = vmatprep.subr.bf16.mxu0 0
        %766 = vmatpush1.bf16.xpose.msra.mxu0 0
        %767 = vmatprep.subr.bf16.mxu0 0
        %768 = vmatpush1.bf16.xpose.msra.mxu0 0
        %769 = vmatprep.mubr.bf16.mxu0 0
        %770 = vmatmul.mubr.bf16.gmra.mrb[0].mxu0 %v732
        %v771 = vpop.f32.mrb[0].mxu0
        %v772 = vadd.f32 0.0, %v771
        %v773 = vpop.f32.mrb[0].mxu0
        %v774 = vpop.f32.mrb[0].mxu0
        %v775 = vpop.f32.mrb[0].mxu0
        %776 = vdwg.mxu0
        %vm777 = vcmask 64512
        %v778 = vsel %vm777, %v723, -inf
        %779 = vmax.xlane.f32.xlu0 %v778
        %v780 = vpop.xlane.xlu0 %779
        %v781 = vsel %vm777, %v772, -inf
        %782 = vmax.xlane.f32.xlu0 %v781
        %v783 = vpop.xlane.xlu0 %782
        %v784 = vsub.f32 %v723, %v780
        %v785 = vsub.f32 %v772, %v783
        %v786 = vmul.f32 %v784, 1.442695
        %v787 = vpow.pop %v786
        %v788 = vmul.f32 %v785, 1.442695
        %v789 = vpow.pop %v788
        %v790 = vsel %vm777, %v787, 0.0
        %791 = vadd.xlane.f32.xlu0 %v790
        %v792 = vpop.xlane.xlu0 %791
        %v793 = vsel %vm777, %v789, 0.0
        %794 = vadd.xlane.f32.xlu0 %v793
        %v795 = vpop.xlane.xlu0 %794
        %v796 = vrcp.pop %v792
        %v797 = vrcp.pop %v795
        %v798 = vmul.f32 %v787, %v796
        %v799 = vmul.f32 %v789, %v797
        %v800 = vpack.c.bf16 %v798, %v798
        %v801 = vpack.c.bf16 %v799, %v799
        %vm802 = vcmask 60416
        %803 = vst.msk [vmem:[%s529] sm:$0xf] %vm802, %v800
        %804 = vst.msk [vmem:[%s529 + $0x4] sm:$0xf] %vm802, %v801
        %v806 = vsel %vm777, %v800, 0
        %vm808 = vcmask 1043456
        %v810 = vsel %vm808, %v676, 0
        %812 = vmatprep.subr.bf16.mxu0 0
        %813 = vmatpush1.bf16.msra.mxu0 %v810
        %814 = vmatprep.subr.bf16.mxu0 0
        %815 = vmatpush1.bf16.msra.mxu0 0
        %816 = vmatprep.subr.bf16.mxu0 0
        %817 = vmatpush1.bf16.msra.mxu0 0
        %818 = vmatprep.subr.bf16.mxu0 0
        %819 = vmatpush1.bf16.msra.mxu0 0
        %820 = vmatprep.subr.bf16.mxu0 0
        %821 = vmatpush1.bf16.msra.mxu0 0
        %822 = vmatprep.subr.bf16.mxu0 0
        %823 = vmatpush1.bf16.msra.mxu0 0
        %824 = vmatprep.subr.bf16.mxu0 0
        %825 = vmatpush1.bf16.msra.mxu0 0
        %826 = vmatprep.subr.bf16.mxu0 0
        %827 = vmatpush1.bf16.msra.mxu0 0
        %828 = vmatprep.subr.bf16.mxu0 0
        %829 = vmatpush1.bf16.msra.mxu0 0
        %830 = vmatprep.subr.bf16.mxu0 0
        %831 = vmatpush1.bf16.msra.mxu0 0
        %832 = vmatprep.subr.bf16.mxu0 0
        %833 = vmatpush1.bf16.msra.mxu0 0
        %834 = vmatprep.subr.bf16.mxu0 0
        %835 = vmatpush1.bf16.msra.mxu0 0
        %836 = vmatprep.subr.bf16.mxu0 0
        %837 = vmatpush1.bf16.msra.mxu0 0
        %838 = vmatprep.subr.bf16.mxu0 0
        %839 = vmatpush1.bf16.msra.mxu0 0
        %840 = vmatprep.subr.bf16.mxu0 0
        %841 = vmatpush1.bf16.msra.mxu0 0
        %842 = vmatprep.subr.bf16.mxu0 0
        %843 = vmatpush1.bf16.msra.mxu0 0
        %844 = vmatprep.mubr.bf16.mxu0 0
        %845 = vmatmul.mubr.bf16.gmra.mrb[0].mxu0 %v806
        %v846 = vpop.f32.mrb[0].mxu0
        %v847 = vadd.f32 0.0, %v846
        %v848 = vpop.f32.mrb[0].mxu0
        %v849 = vpop.f32.mrb[0].mxu0
        %v850 = vpop.f32.mrb[0].mxu0
        %851 = vdwg.mxu0
        %v853 = vsel %vm777, %v801, 0
        %v856 = vsel %vm808, %v677, 0
        %858 = vmatprep.subr.bf16.mxu0 0
        %859 = vmatpush1.bf16.msra.mxu0 %v856
        %860 = vmatprep.subr.bf16.mxu0 0
        %861 = vmatpush1.bf16.msra.mxu0 0
        %862 = vmatprep.subr.bf16.mxu0 0
        %863 = vmatpush1.bf16.msra.mxu0 0
        %864 = vmatprep.subr.bf16.mxu0 0
        %865 = vmatpush1.bf16.msra.mxu0 0
        %866 = vmatprep.subr.bf16.mxu0 0
        %867 = vmatpush1.bf16.msra.mxu0 0
        %868 = vmatprep.subr.bf16.mxu0 0
        %869 = vmatpush1.bf16.msra.mxu0 0
        %870 = vmatprep.subr.bf16.mxu0 0
        %871 = vmatpush1.bf16.msra.mxu0 0
        %872 = vmatprep.subr.bf16.mxu0 0
        %873 = vmatpush1.bf16.msra.mxu0 0
        %874 = vmatprep.subr.bf16.mxu0 0
        %875 = vmatpush1.bf16.msra.mxu0 0
        %876 = vmatprep.subr.bf16.mxu0 0
        %877 = vmatpush1.bf16.msra.mxu0 0
        %878 = vmatprep.subr.bf16.mxu0 0
        %879 = vmatpush1.bf16.msra.mxu0 0
        %880 = vmatprep.subr.bf16.mxu0 0
        %881 = vmatpush1.bf16.msra.mxu0 0
        %882 = vmatprep.subr.bf16.mxu0 0
        %883 = vmatpush1.bf16.msra.mxu0 0
        %884 = vmatprep.subr.bf16.mxu0 0
        %885 = vmatpush1.bf16.msra.mxu0 0
        %886 = vmatprep.subr.bf16.mxu0 0
        %887 = vmatpush1.bf16.msra.mxu0 0
        %888 = vmatprep.subr.bf16.mxu0 0
        %889 = vmatpush1.bf16.msra.mxu0 0
        %890 = vmatprep.mubr.bf16.mxu0 0
        %891 = vmatmul.mubr.bf16.gmra.mrb[0].mxu0 %v853
        %v892 = vpop.f32.mrb[0].mxu0
        %v893 = vadd.f32 0.0, %v892
        %v894 = vpop.f32.mrb[0].mxu0
        %v895 = vpop.f32.mrb[0].mxu0
        %v896 = vpop.f32.mrb[0].mxu0
        %897 = vdwg.mxu0
        %899 = vrot.lane.b32.xlu0 %v893, 16
        %v900 = vpop.permute.xlu0 %899
        %v902 = vsel %vm681, %v847, %v900
        %v903 = vpack.c.bf16 %v902, %v902
        %v904 = vld [vmem:[%s6] sm:$0xf]
        %v905 = vld [vmem:[%s6 + $0x4] sm:$0xf]
        %v906 = vld [vmem:[%s6 + $0x8] sm:$0xf]
        %v907 = vld [vmem:[%s6 + $0xc] sm:$0xf]
        %v912 = vunpack.c.l.b16 %v904
        %v913 = vunpack.c.l.b16 %v905
        %v914 = vunpack.c.l.b16 %v906
        %v915 = vunpack.c.l.b16 %v907
        %v916 = vpack.c.b16 %v913, %v912
        %v917 = vpack.c.b16 %v915, %v914
        %v921 = vsel %vm535, %v903, 0
        %923 = vmatprep.subr.bf16.mxu0 0
        %924 = vmatpush1.bf16.msra.mxu0 %v916
        %925 = vmatprep.subr.bf16.mxu0 0
        %926 = vmatpush1.bf16.msra.mxu0 %v917
        %927 = vmatprep.subr.bf16.mxu0 0
        %928 = vmatpush1.bf16.msra.mxu0 0
        %929 = vmatprep.subr.bf16.mxu0 0
        %930 = vmatpush1.bf16.msra.mxu0 0
        %931 = vmatprep.subr.bf16.mxu0 0
        %932 = vmatpush1.bf16.msra.mxu0 0
        %933 = vmatprep.subr.bf16.mxu0 0
        %934 = vmatpush1.bf16.msra.mxu0 0
        %935 = vmatprep.subr.bf16.mxu0 0
        %936 = vmatpush1.bf16.msra.mxu0 0
        %937 = vmatprep.subr.bf16.mxu0 0
        %938 = vmatpush1.bf16.msra.mxu0 0
        %939 = vmatprep.subr.bf16.mxu0 0
        %940 = vmatpush1.bf16.msra.mxu0 0
        %941 = vmatprep.subr.bf16.mxu0 0
        %942 = vmatpush1.bf16.msra.mxu0 0
        %943 = vmatprep.subr.bf16.mxu0 0
        %944 = vmatpush1.bf16.msra.mxu0 0
        %945 = vmatprep.subr.bf16.mxu0 0
        %946 = vmatpush1.bf16.msra.mxu0 0
        %947 = vmatprep.subr.bf16.mxu0 0
        %948 = vmatpush1.bf16.msra.mxu0 0
        %949 = vmatprep.subr.bf16.mxu0 0
        %950 = vmatpush1.bf16.msra.mxu0 0
        %951 = vmatprep.subr.bf16.mxu0 0
        %952 = vmatpush1.bf16.msra.mxu0 0
        %953 = vmatprep.subr.bf16.mxu0 0
        %954 = vmatpush1.bf16.msra.mxu0 0
        %955 = vmatprep.mubr.bf16.mxu0 0
        %956 = vmatmul.mubr.bf16.gmra.mrb[0].mxu0 %v921
        %v957 = vpop.f32.mrb[0].mxu0
        %v958 = vadd.f32 %v532, %v957
        %v959 = vpop.f32.mrb[0].mxu0
        %v960 = vpop.f32.mrb[0].mxu0
        %v961 = vpop.f32.mrb[0].mxu0
        %962 = vdwg.mxu0
        %v963 = vld [vmem:[%s7] sm:$0x1]
        %v964 = vld [vmem:[%s8] sm:$0x1]
        %v965 = vsel %vm535, %v958, 0.0
        %966 = vadd.xlane.f32.xlu0 %v965
        %v967 = vpop.xlane.xlu0 %966
        %v968 = vmul.f32 %v967, %v539
        %v969 = vsub.f32 %v958, %v968
        %v970 = vmul.f32 %v969, %v969
        %v971 = vsel %vm535, %v970, 0.0
        %972 = vadd.xlane.f32.xlu0 %v971
        %v973 = vpop.xlane.xlu0 %972
        %v974 = vmul.f32 %v973, %v539
        %v975 = vadd.f32 %v974, 1e-05
        %v976 = vrsqrt.pop %v975
        %v977 = vmul.f32 %v969, %v976
        %v979 = vlaneseq
        %v980 = vshrl.u32 %v979, 7
        %v981 = vsub.s32 0, %v980
        %v982 = vrot.slane %v963, %v981
        %v984 = vmul.f32 %v977, %v982
        %v986 = vlaneseq
        %v987 = vshrl.u32 %v986, 7
        %v988 = vsub.s32 0, %v987
        %v989 = vrot.slane %v964, %v988
        %v991 = vadd.f32 %v984, %v989
        %v992 = vpack.c.bf16 %v991, %v991
        %v993 = vld [vmem:[%s9] sm:$0xf]
        %v994 = vld [vmem:[%s9 + $0x4] sm:$0xf]
        %v995 = vld [vmem:[%s9 + $0x8] sm:$0xf]
        %v996 = vld [vmem:[%s9 + $0xc] sm:$0xf]
        %v997 = vld [vmem:[%s10] sm:$0x1]
        %v999 = vlaneseq
        %v1000 = vshrl.u32 %v999, 7
        %v1001 = vsub.s32 0, %v1000
        %v1002 = vrot.slane %v997, %v1001
        %v1008 = vunpack.c.l.b16 %v993
        %v1009 = vunpack.c.l.b16 %v994
        %v1010 = vunpack.c.l.b16 %v995
        %v1011 = vunpack.c.l.b16 %v996
        %v1012 = vpack.c.b16 %v1009, %v1008
        %v1013 = vpack.c.b16 %v1011, %v1010
        %v1017 = vsel %vm535, %v992, 0
        %1019 = vmatprep.subr.bf16.mxu0 0
        %1020 = vmatpush1.bf16.msra.mxu0 %v1012
        %1021 = vmatprep.subr.bf16.mxu0 0
        %1022 = vmatpush1.bf16.msra.mxu0 %v1013
        %1023 = vmatprep.subr.bf16.mxu0 0
        %1024 = vmatpush1.bf16.msra.mxu0 0
        %1025 = vmatprep.subr.bf16.mxu0 0
        %1026 = vmatpush1.bf16.msra.mxu0 0
        %1027 = vmatprep.subr.bf16.mxu0 0
        %1028 = vmatpush1.bf16.msra.mxu0 0
        %1029 = vmatprep.subr.bf16.mxu0 0
        %1030 = vmatpush1.bf16.msra.mxu0 0
        %1031 = vmatprep.subr.bf16.mxu0 0
        %1032 = vmatpush1.bf16.msra.mxu0 0
        %1033 = vmatprep.subr.bf16.mxu0 0
        %1034 = vmatpush1.bf16.msra.mxu0 0
        %1035 = vmatprep.subr.bf16.mxu0 0
        %1036 = vmatpush1.bf16.msra.mxu0 0
        %1037 = vmatprep.subr.bf16.mxu0 0
        %1038 = vmatpush1.bf16.msra.mxu0 0
        %1039 = vmatprep.subr.bf16.mxu0 0
        %1040 = vmatpush1.bf16.msra.mxu0 0
        %1041 = vmatprep.subr.bf16.mxu0 0
        %1042 = vmatpush1.bf16.msra.mxu0 0
        %1043 = vmatprep.subr.bf16.mxu0 0
        %1044 = vmatpush1.bf16.msra.mxu0 0
        %1045 = vmatprep.subr.bf16.mxu0 0
        %1046 = vmatpush1.bf16.msra.mxu0 0
        %1047 = vmatprep.subr.bf16.mxu0 0
        %1048 = vmatpush1.bf16.msra.mxu0 0
        %1049 = vmatprep.subr.bf16.mxu0 0
        %1050 = vmatpush1.bf16.msra.mxu0 0
        %1051 = vmatprep.mubr.bf16.mxu0 0
        %1052 = vmatmul.mubr.bf16.gmra.mrb[0].mxu0 %v1017
        %v1053 = vpop.f32.mrb[0].mxu0
        %v1054 = vadd.f32 %v1002, %v1053
        %v1055 = vpop.f32.mrb[0].mxu0
        %v1056 = vpop.f32.mrb[0].mxu0
        %v1057 = vpop.f32.mrb[0].mxu0
        %1058 = vdwg.mxu0
        %v1059 = vld [vmem:[%s11] sm:$0xf]
        %v1060 = vld [vmem:[%s11 + $0x4] sm:$0xf]
        %v1061 = vld [vmem:[%s11 + $0x8] sm:$0xf]
        %v1062 = vld [vmem:[%s11 + $0xc] sm:$0xf]
        %v1063 = vld [vmem:[%s12] sm:$0x1]
        %v1065 = vlaneseq
        %v1066 = vshrl.u32 %v1065, 7
        %v1067 = vsub.s32 0, %v1066
        %v1068 = vrot.slane %v1063, %v1067
        %v1074 = vunpack.c.l.b16 %v1059
        %v1075 = vunpack.c.l.b16 %v1060
        %v1076 = vunpack.c.l.b16 %v1061
        %v1077 = vunpack.c.l.b16 %v1062
        %v1078 = vpack.c.b16 %v1075, %v1074
        %v1079 = vpack.c.b16 %v1077, %v1076
        %1082 = vmatprep.subr.bf16.mxu0 0
        %1083 = vmatpush1.bf16.msra.mxu0 %v1078
        %1084 = vmatprep.subr.bf16.mxu0 0
        %1085 = vmatpush1.bf16.msra.mxu0 %v1079
        %1086 = vmatprep.subr.bf16.mxu0 0
        %1087 = vmatpush1.bf16.msra.mxu0 0
        %1088 = vmatprep.subr.bf16.mxu0 0
        %1089 = vmatpush1.bf16.msra.mxu0 0
        %1090 = vmatprep.subr.bf16.mxu0 0
        %1091 = vmatpush1.bf16.msra.mxu0 0
        %1092 = vmatprep.subr.bf16.mxu0 0
        %1093 = vmatpush1.bf16.msra.mxu0 0
        %1094 = vmatprep.subr.bf16.mxu0 0
        %1095 = vmatpush1.bf16.msra.mxu0 0
        %1096 = vmatprep.subr.bf16.mxu0 0
        %1097 = vmatpush1.bf16.msra.mxu0 0
        %1098 = vmatprep.subr.bf16.mxu0 0
        %1099 = vmatpush1.bf16.msra.mxu0 0
        %1100 = vmatprep.subr.bf16.mxu0 0
        %1101 = vmatpush1.bf16.msra.mxu0 0
        %1102 = vmatprep.subr.bf16.mxu0 0
        %1103 = vmatpush1.bf16.msra.mxu0 0
        %1104 = vmatprep.subr.bf16.mxu0 0
        %1105 = vmatpush1.bf16.msra.mxu0 0
        %1106 = vmatprep.subr.bf16.mxu0 0
        %1107 = vmatpush1.bf16.msra.mxu0 0
        %1108 = vmatprep.subr.bf16.mxu0 0
        %1109 = vmatpush1.bf16.msra.mxu0 0
        %1110 = vmatprep.subr.bf16.mxu0 0
        %1111 = vmatpush1.bf16.msra.mxu0 0
        %1112 = vmatprep.subr.bf16.mxu0 0
        %1113 = vmatpush1.bf16.msra.mxu0 0
        %1114 = vmatprep.mubr.bf16.mxu0 0
        %1115 = vmatmul.mubr.bf16.gmra.mrb[0].mxu0 %v1017
        %v1116 = vpop.f32.mrb[0].mxu0
        %v1117 = vadd.f32 %v1068, %v1116
        %v1118 = vpop.f32.mrb[0].mxu0
        %v1119 = vpop.f32.mrb[0].mxu0
        %v1120 = vpop.f32.mrb[0].mxu0
        %1121 = vdwg.mxu0
        %v1122 = vmul.f32 %v1117, 0.5
        %v1123 = vmul.f32 %v1117, 0.70710677
        %v1124 = verf.f32.pop %v1123
        %v1125 = vadd.f32 %v1124, 1.0
        %v1126 = vmul.f32 %v1122, %v1125
        %v1127 = vmul.f32 %v1054, %v1126
        %v1128 = vpack.c.bf16 %v1127, %v1127
        %v1129 = vld [vmem:[%s13] sm:$0xf]
        %v1130 = vld [vmem:[%s13 + $0x4] sm:$0xf]
        %v1131 = vld [vmem:[%s13 + $0x8] sm:$0xf]
        %v1132 = vld [vmem:[%s13 + $0xc] sm:$0xf]
        %v1133 = vld [vmem:[%s13 + $0x10] sm:$0xf]
        %v1134 = vld [vmem:[%s13 + $0x14] sm:$0xf]
        %v1135 = vld [vmem:[%s13 + $0x18] sm:$0xf]
        %v1136 = vld [vmem:[%s13 + $0x1c] sm:$0xf]
        %v1137 = vld [vmem:[%s13 + $0x20] sm:$0xf]
        %v1138 = vld [vmem:[%s13 + $0x24] sm:$0xf]
        %v1139 = vld [vmem:[%s13 + $0x28] sm:$0xf]
        %v1140 = vld [vmem:[%s13 + $0x2c] sm:$0xf]
        %v1141 = vld [vmem:[%s13 + $0x30] sm:$0xf]
        %v1142 = vld [vmem:[%s13 + $0x34] sm:$0xf]
        %v1143 = vld [vmem:[%s13 + $0x38] sm:$0xf]
        %v1144 = vld [vmem:[%s13 + $0x3c] sm:$0xf]
        %v1145 = vld [vmem:[%s14] sm:$0x1]
        %v1147 = vlaneseq
        %v1148 = vshrl.u32 %v1147, 7
        %v1149 = vsub.s32 0, %v1148
        %v1150 = vrot.slane %v1145, %v1149
        %v1168 = vunpack.c.l.b16 %v1129
        %v1169 = vunpack.c.l.b16 %v1130
        %v1170 = vunpack.c.l.b16 %v1131
        %v1171 = vunpack.c.l.b16 %v1132
        %v1172 = vunpack.c.l.b16 %v1133
        %v1173 = vunpack.c.l.b16 %v1134
        %v1174 = vunpack.c.l.b16 %v1135
        %v1175 = vunpack.c.l.b16 %v1136
        %v1176 = vunpack.c.l.b16 %v1137
        %v1177 = vunpack.c.l.b16 %v1138
        %v1178 = vunpack.c.l.b16 %v1139
        %v1179 = vunpack.c.l.b16 %v1140
        %v1180 = vunpack.c.l.b16 %v1141
        %v1181 = vunpack.c.l.b16 %v1142
        %v1182 = vunpack.c.l.b16 %v1143
        %v1183 = vunpack.c.l.b16 %v1144
        %v1184 = vpack.c.b16 %v1169, %v1168
        %v1185 = vpack.c.b16 %v1171, %v1170
        %v1186 = vpack.c.b16 %v1173, %v1172
        %v1187 = vpack.c.b16 %v1175, %v1174
        %v1188 = vpack.c.b16 %v1177, %v1176
        %v1189 = vpack.c.b16 %v1179, %v1178
        %v1190 = vpack.c.b16 %v1181, %v1180
        %v1191 = vpack.c.b16 %v1183, %v1182
        %1200 = vmatprep.subr.bf16.mxu0 0
        %1201 = vmatpush1.bf16.msra.mxu0 %v1184
        %1202 = vmatprep.subr.bf16.mxu0 0
        %1203 = vmatpush1.bf16.msra.mxu0 %v1185
        %1204 = vmatprep.subr.bf16.mxu0 0
        %1205 = vmatpush1.bf16.msra.mxu0 %v1186
        %1206 = vmatprep.subr.bf16.mxu0 0
        %1207 = vmatpush1.bf16.msra.mxu0 %v1187
        %1208 = vmatprep.subr.bf16.mxu0 0
        %1209 = vmatpush1.bf16.msra.mxu0 %v1188
        %1210 = vmatprep.subr.bf16.mxu0 0
        %1211 = vmatpush1.bf16.msra.mxu0 %v1189
        %1212 = vmatprep.subr.bf16.mxu0 0
        %1213 = vmatpush1.bf16.msra.mxu0 %v1190
        %1214 = vmatprep.subr.bf16.mxu0 0
        %1215 = vmatpush1.bf16.msra.mxu0 %v1191
        %1216 = vmatprep.subr.bf16.mxu0 0
        %1217 = vmatpush1.bf16.msra.mxu0 0
        %1218 = vmatprep.subr.bf16.mxu0 0
        %1219 = vmatpush1.bf16.msra.mxu0 0
        %1220 = vmatprep.subr.bf16.mxu0 0
        %1221 = vmatpush1.bf16.msra.mxu0 0
        %1222 = vmatprep.subr.bf16.mxu0 0
        %1223 = vmatpush1.bf16.msra.mxu0 0
        %1224 = vmatprep.subr.bf16.mxu0 0
        %1225 = vmatpush1.bf16.msra.mxu0 0
        %1226 = vmatprep.subr.bf16.mxu0 0
        %1227 = vmatpush1.bf16.msra.mxu0 0
        %1228 = vmatprep.subr.bf16.mxu0 0
        %1229 = vmatpush1.bf16.msra.mxu0 0
        %1230 = vmatprep.subr.bf16.mxu0 0
        %1231 = vmatpush1.bf16.msra.mxu0 0
        %1232 = vmatprep.mubr.bf16.mxu0 0
        %1233 = vmatmul.mubr.bf16.gmra.mrb[0].mxu0 %v1128
        %v1234 = vpop.f32.mrb[0].mxu0
        %v1235 = vadd.f32 %v1150, %v1234
        %v1236 = vpop.f32.mrb[0].mxu0
        %v1237 = vpop.f32.mrb[0].mxu0
        %v1238 = vpop.f32.mrb[0].mxu0
        %1239 = vdwg.mxu0
        %v1240 = vadd.f32 %v1235, %v958
        %v1241 = vpack.c.bf16 %v1240, %v1240
        %vm1242 = vcmask 257024
        %1243 = vst.msk [vmem:[%s513] sm:$0xf] %vm1242, %v1241
        %s1244 = sand.u32 %s359, 1
        %s1245 = scalar_lea.sflag [#allocation3], %s1244
        %s1246 = sand.u32 %s359, 1
        %s1247 = smul.addr %s1246, 4
        %s1248 = scalar_lea.vmem [#allocation2], %s1247
        %p1249 = scmp.lt.s32.totalorder %s31, 1
        %s1250 = scalar_select %p1249, %s31, 1
        %s1251 = smul.addr %s1250, 2
        %s1252 = smul.addr %s1251, 4
        %s1253 = scalar_lea.vmem %s16, %s1252
        // Predicated region
        $region81: #{transformer_forward.3} parent=79 // pred_check
          %p1254 = pneg %p369
        $region82: #{transformer_forward.3} parent=79 // pred_check_branch
          %1256 = sbr.rel (%p1254) target = $region84
        $region83: #{transformer_forward.3} parent=79 // pred_region
          %s1258 = ssub.s32 64, 64
          %1259 = vsyncadd %s1245, %s1258
          %s1260 = smul.addr %s31, 64
          %s1261 = scalar_lea.hbm %s15, %s1260
          %s1263 = sshll.u32 %s1248, 4
          %s1264 = int_to_ptr.vmem [resolvable:$true] %s1263
          %1266 = dma.vmem_to_hbm [thread:$0]  %s1264, 64, %s1261, %s1245
        $region84: #{transformer_forward.3} parent=79 // pred_fallthru
          _
        // Predicated region
        $region85: #{transformer_forward.3} parent=79 // pred_check
          %p1267 = pneg %p395
        $region86: #{transformer_forward.3} parent=79 // pred_check_branch
          %1269 = sbr.rel (%p1267) target = $region88
        $region87: #{transformer_forward.3} parent=79 // pred_region
          _
        $region88: #{transformer_forward.3} parent=79 // pred_fallthru
          _
      $region80: #{transformer_forward.3} parent=5 // pred_fallthru
        _
      %p1270 = scmp.le.s32.totalorder 2, %s26
      // Predicated region
      $region89: #{transformer_forward.3} parent=5 // pred_check
        %p1271 = pneg %p1270
      $region90: #{transformer_forward.3} parent=5 // pred_check_branch
        %1273 = sbr.rel (%p1271) target = $region92
      $region91: #{transformer_forward.3} parent=5 // pred_region
        %s1274 = ssub.s32 %s26, 2
        // Predicated region
        $region93: #{transformer_forward.3} parent=91 // pred_check
          %p1275 = pneg %p375
        $region94: #{transformer_forward.3} parent=91 // pred_check_branch
          %1277 = sbr.rel (%p1275) target = $region96
        $region95: #{transformer_forward.3} parent=91 // pred_region
          %s1278 = sand.u32 %s360, 1
          %s1279 = scalar_lea.sflag [#allocation3], %s1278
          %s1280 = sand.u32 %s360, 1
          %s1281 = smul.addr %s1280, 4
          %s1282 = scalar_lea.vmem [#allocation2], %s1281
          %1283 = dma.done %s1279, 64
        $region96: #{transformer_forward.3} parent=91 // pred_fallthru
          _
        // Predicated region
        $region97: #{transformer_forward.3} parent=91 // pred_check
          %p1284 = pneg %p401
        $region98: #{transformer_forward.3} parent=91 // pred_check_branch
          %1286 = sbr.rel (%p1284) target = $region100
        $region99: #{transformer_forward.3} parent=91 // pred_region
          %p1287 = scmp.lt.s32.totalorder %s32, 1
          %s1288 = scalar_select %p1287, %s32, 1
          %s1289 = smul.addr %s1288, 2
          %s1290 = smul.addr %s1289, 4
          %s1291 = scalar_lea.vmem %s16, %s1290
        $region100: #{transformer_forward.3} parent=91 // pred_fallthru
          _
      $region92: #{transformer_forward.3} parent=5 // pred_fallthru
        _
    $region6: #{transformer_forward.3} parent=1 // loop_footer
      %s30 = sadd.s32 1, %s26
    $region7: #{transformer_forward.3} parent=1 // loop_footer_branch
      %25 = sbr.rel target = $region3
    $region8: #{transformer_forward.3} parent=1 // loop_exit
      _
    %1292 = vsyncpa [#allocation3], 1
    %s1293 = scalar_lea.sflag [#allocation3], 1
    %1294 = vsyncpa %s1293, 1

// kernel: transformer_forward.2
$region0: #{transformer_forward.2}
  #allocation0 [shape = 'u32[]', space=smem, size = 0x4, offset = 0x4, fixed_abs, tag = 'smem constant byte address 0x4 - core index']
  #allocation1 [shape = 'u32[144,128]{1,0:T(1,128)}', space=vmem, size = 0x12000, scoped, tag = 'internal scratch']
  %s0 = inlined_call_operand.hbm [shape: bf16[2,8,32], index: 0, kind: input, shape index: {}]
  %s1 = inlined_call_operand.vmem [shape: f32[1,32], index: 1, kind: input, shape index: {}]
  %s2 = inlined_call_operand.vmem [shape: f32[1,32], index: 2, kind: input, shape index: {}]
  %s3 = inlined_call_operand.vmem [shape: bf16[32,160], index: 3, kind: input, shape index: {}]
  %s4 = inlined_call_operand.vmem [shape: f32[8,32], index: 4, kind: input, shape index: {}]
  %s5 = inlined_call_operand.vmem [shape: f32[8,32], index: 5, kind: input, shape index: {}]
  %s6 = inlined_call_operand.vmem [shape: bf16[32,32], index: 6, kind: input, shape index: {}]
  %s7 = inlined_call_operand.hbm [shape: f32[1,32], index: 7, kind: input, shape index: {}]
  %s8 = inlined_call_operand.hbm [shape: f32[1,32], index: 8, kind: input, shape index: {}]
  %s9 = inlined_call_operand.vmem [shape: bf16[32,128], index: 9, kind: input, shape index: {}]
  %s10 = inlined_call_operand.hbm [shape: f32[1,128], index: 10, kind: input, shape index: {}]
  %s11 = inlined_call_operand.vmem [shape: bf16[32,128], index: 11, kind: input, shape index: {}]
  %s12 = inlined_call_operand.hbm [shape: f32[1,128], index: 12, kind: input, shape index: {}]
  %s13 = inlined_call_operand.vmem [shape: bf16[128,32], index: 13, kind: input, shape index: {}]
  %s14 = inlined_call_operand.hbm [shape: f32[1,32], index: 14, kind: input, shape index: {}]
  %s15 = inlined_call_operand.vmem [shape: bf16[2,8,32], index: 15, kind: output, shape index: {0}]
  %s16 = inlined_call_operand.vmem [shape: bf16[2,2,8,8], index: 16, kind: output, shape index: {1}]
  %17 = xla_tuple %s15, %s16
  %s18 = sld [smem:[#allocation0]]
  $region125: #{transformer_forward.2} parent=0
    _
  %s20 = ssub.s32 1, %s18
  %s21 = scalar_select 0, %s20, %s18
  $region1: #{transformer_forward.2} parent=0
    #allocation2 [shape = 'u8[4096]{0}', space=vmem, size = 0x1000, scoped, tag = 'input window, operand 0']
    #allocation3 [shape = 's32[2]{0}', space=sflag, size = 0x8, scoped, tag = 'scoped memory for transformer_forward.2']
    #allocation4 [shape = 'u8[512]{0}', space=vmem, size = 0x400, scoped, tag = 'input window, operand 7, single buffered']
    #allocation5 [shape = 's32[1]{0}', space=sflag, size = 0x4, scoped, tag = 'scoped memory for transformer_forward.2']
    #allocation6 [shape = 'u8[512]{0}', space=vmem, size = 0x400, scoped, tag = 'input window, operand 8, single buffered']
    #allocation7 [shape = 'u8[512]{0}', space=vmem, size = 0x400, scoped, tag = 'input window, operand 10, single buffered']
    #allocation8 [shape = 's32[1]{0}', space=sflag, size = 0x4, scoped, tag = 'scoped memory for transformer_forward.2']
    #allocation9 [shape = 'u8[512]{0}', space=vmem, size = 0x400, scoped, tag = 'input window, operand 12, single buffered']
    #allocation10 [shape = 'u8[512]{0}', space=vmem, size = 0x400, scoped, tag = 'input window, operand 14, single buffered']
    #allocation11 [shape = 's32[1]{0}', space=sflag, size = 0x4, scoped, tag = 'scoped memory for transformer_forward.2']
    %22 = vsyncpa [#allocation3], 0
    %s23 = scalar_lea.sflag [#allocation3], 1
    %24 = vsyncpa %s23, 0
    %25 = vsyncpa [#allocation5], 0
    %26 = vsyncpa [#allocation8], 0
    %27 = vsyncpa [#allocation11], 0
    loop: start=0, step=1, limit=4
    $region2: #{transformer_forward.2} parent=1 // loop_pre_header
      _
    $region3: #{transformer_forward.2} parent=1 // loop_header
      %s29 = sphi 0, %s33
      %p30 = scmp.ge.s32.totalorder %s29, 4
      %s39 = sphi 0, %s41
      %s42 = sphi 0, %s39
      %s43 = sphi 0, %s42
      %s59 = sphi 0, %s43
      %s63 = sphi 0, %s63
      %s65 = sphi 0, %s63
      %s66 = sphi 0, %s65
      %s80 = sphi 0, %s66
      %s84 = sphi 0, %s84
      %s86 = sphi 0, %s84
      %s87 = sphi 0, %s86
      %s101 = sphi 0, %s87
      %s105 = sphi 0, %s105
      %s107 = sphi 0, %s105
      %s108 = sphi 0, %s107
      %s122 = sphi 0, %s108
      %s126 = sphi 0, %s126
      %s128 = sphi 0, %s126
      %s129 = sphi 0, %s128
      %s143 = sphi 0, %s129
      %s147 = sphi 0, %s147
      %s149 = sphi 0, %s147
      %s150 = sphi 0, %s149
      %s164 = sphi 0, %s150
      %s168 = sphi 0, %s168
      %s170 = sphi 0, %s168
      %s171 = sphi 0, %s170
      %s185 = sphi 0, %s171
      %s189 = sphi 0, %s189
      %s191 = sphi 0, %s189
      %s192 = sphi 0, %s191
      %s206 = sphi 0, %s192
      %s210 = sphi 0, %s210
      %s212 = sphi 0, %s210
      %s213 = sphi 0, %s212
      %s227 = sphi 0, %s213
      %s231 = sphi 0, %s231
      %s233 = sphi 0, %s231
      %s234 = sphi 0, %s233
      %s248 = sphi 0, %s234
      %s252 = sphi 0, %s252
      %s254 = sphi 0, %s252
      %s255 = sphi 0, %s254
      %s269 = sphi 0, %s255
      %s273 = sphi 0, %s273
      %s275 = sphi 0, %s273
      %s276 = sphi 0, %s275
      %s290 = sphi 0, %s276
      %s294 = sphi 0, %s294
      %s296 = sphi 0, %s294
      %s297 = sphi 0, %s296
      %s311 = sphi 0, %s297
      %s315 = sphi 0, %s315
      %s317 = sphi 0, %s315
      %s318 = sphi 0, %s317
      %s332 = sphi 0, %s318
      %s336 = sphi 0, %s336
      %s338 = sphi 0, %s336
      %s339 = sphi 0, %s338
      %s353 = sphi 0, %s339
      %s359 = sphi 0, %s361
      %s362 = sphi 0, %s359
      %s363 = sphi 0, %s362
      %s379 = sphi 0, %s363
      %s385 = sphi 0, %s387
      %s388 = sphi 0, %s385
      %s389 = sphi 0, %s388
      %s405 = sphi 0, %s389
    $region4: #{transformer_forward.2} parent=1 // loop_header_branch
      %32 = sbr.rel (%p30) target = $region8
    $region5: #{transformer_forward.2} parent=1 // loop_body
      %s34 = ssub.s32 %s29, 1
      %s35 = ssub.s32 %s29, 2
      %s36 = sadd.s32 %s29, 1
      %s37 = ssub.s32 %s29, %s36
      %p38 = scmp.eq.s32.totalorder %s37, 0
      %s40 = sadd.s32 %s39, 1
      %s41 = scalar_select %p38, %s39, %s40
      %p44 = pneg %p38
      %p45 = scmp.eq.s32.totalorder %s29, 1
      %p46 = por %p44, %p45
      %p47 = scmp.ne.s32.totalorder %s39, %s42
      %p48 = scmp.eq.s32.totalorder %s29, 0
      %p49 = por %p47, %p48
      %p50 = scmp.ne.s32.totalorder %s39, %s42
      %p51 = scmp.eq.s32.totalorder %s34, 1
      %p52 = por %p50, %p51
      %p53 = scmp.ne.s32.totalorder %s42, %s43
      %p54 = scmp.eq.s32.totalorder %s34, 0
      %p55 = por %p53, %p54
      %p56 = scmp.ne.s32.totalorder %s42, %s43
      %p57 = scmp.eq.s32.totalorder %s35, 1
      %p58 = por %p56, %p57
      %p60 = scmp.ne.s32.totalorder %s43, %s59
      %p61 = scmp.eq.s32.totalorder %s35, 0
      %p62 = por %p60, %p61
      %s64 = sadd.s32 %s63, 1
      %p67 = scmp.eq.s32.totalorder %s29, 1
      %p68 = scmp.ne.s32.totalorder %s63, %s65
      %p69 = scmp.eq.s32.totalorder %s29, 0
      %p70 = por %p68, %p69
      %p71 = scmp.ne.s32.totalorder %s63, %s65
      %p72 = scmp.eq.s32.totalorder %s34, 1
      %p73 = por %p71, %p72
      %p74 = scmp.ne.s32.totalorder %s65, %s66
      %p75 = scmp.eq.s32.totalorder %s34, 0
      %p76 = por %p74, %p75
      %p77 = scmp.ne.s32.totalorder %s65, %s66
      %p78 = scmp.eq.s32.totalorder %s35, 1
      %p79 = por %p77, %p78
      %p81 = scmp.ne.s32.totalorder %s66, %s80
      %p82 = scmp.eq.s32.totalorder %s35, 0
      %p83 = por %p81, %p82
      %s85 = sadd.s32 %s84, 1
      %p88 = scmp.eq.s32.totalorder %s29, 1
      %p89 = scmp.ne.s32.totalorder %s84, %s86
      %p90 = scmp.eq.s32.totalorder %s29, 0
      %p91 = por %p89, %p90
      %p92 = scmp.ne.s32.totalorder %s84, %s86
      %p93 = scmp.eq.s32.totalorder %s34, 1
      %p94 = por %p92, %p93
      %p95 = scmp.ne.s32.totalorder %s86, %s87
      %p96 = scmp.eq.s32.totalorder %s34, 0
      %p97 = por %p95, %p96
      %p98 = scmp.ne.s32.totalorder %s86, %s87
      %p99 = scmp.eq.s32.totalorder %s35, 1
      %p100 = por %p98, %p99
      %p102 = scmp.ne.s32.totalorder %s87, %s101
      %p103 = scmp.eq.s32.totalorder %s35, 0
      %p104 = por %p102, %p103
      %s106 = sadd.s32 %s105, 1
      %p109 = scmp.eq.s32.totalorder %s29, 1
      %p110 = scmp.ne.s32.totalorder %s105, %s107
      %p111 = scmp.eq.s32.totalorder %s29, 0
      %p112 = por %p110, %p111
      %p113 = scmp.ne.s32.totalorder %s105, %s107
      %p114 = scmp.eq.s32.totalorder %s34, 1
      %p115 = por %p113, %p114
      %p116 = scmp.ne.s32.totalorder %s107, %s108
      %p117 = scmp.eq.s32.totalorder %s34, 0
      %p118 = por %p116, %p117
      %p119 = scmp.ne.s32.totalorder %s107, %s108
      %p120 = scmp.eq.s32.totalorder %s35, 1
      %p121 = por %p119, %p120
      %p123 = scmp.ne.s32.totalorder %s108, %s122
      %p124 = scmp.eq.s32.totalorder %s35, 0
      %p125 = por %p123, %p124
      %s127 = sadd.s32 %s126, 1
      %p130 = scmp.eq.s32.totalorder %s29, 1
      %p131 = scmp.ne.s32.totalorder %s126, %s128
      %p132 = scmp.eq.s32.totalorder %s29, 0
      %p133 = por %p131, %p132
      %p134 = scmp.ne.s32.totalorder %s126, %s128
      %p135 = scmp.eq.s32.totalorder %s34, 1
      %p136 = por %p134, %p135
      %p137 = scmp.ne.s32.totalorder %s128, %s129
      %p138 = scmp.eq.s32.totalorder %s34, 0
      %p139 = por %p137, %p138
      %p140 = scmp.ne.s32.totalorder %s128, %s129
      %p141 = scmp.eq.s32.totalorder %s35, 1
      %p142 = por %p140, %p141
      %p144 = scmp.ne.s32.totalorder %s129, %s143
      %p145 = scmp.eq.s32.totalorder %s35, 0
      %p146 = por %p144, %p145
      %s148 = sadd.s32 %s147, 1
      %p151 = scmp.eq.s32.totalorder %s29, 1
      %p152 = scmp.ne.s32.totalorder %s147, %s149
      %p153 = scmp.eq.s32.totalorder %s29, 0
      %p154 = por %p152, %p153
      %p155 = scmp.ne.s32.totalorder %s147, %s149
      %p156 = scmp.eq.s32.totalorder %s34, 1
      %p157 = por %p155, %p156
      %p158 = scmp.ne.s32.totalorder %s149, %s150
      %p159 = scmp.eq.s32.totalorder %s34, 0
      %p160 = por %p158, %p159
      %p161 = scmp.ne.s32.totalorder %s149, %s150
      %p162 = scmp.eq.s32.totalorder %s35, 1
      %p163 = por %p161, %p162
      %p165 = scmp.ne.s32.totalorder %s150, %s164
      %p166 = scmp.eq.s32.totalorder %s35, 0
      %p167 = por %p165, %p166
      %s169 = sadd.s32 %s168, 1
      %p172 = scmp.eq.s32.totalorder %s29, 1
      %p173 = scmp.ne.s32.totalorder %s168, %s170
      %p174 = scmp.eq.s32.totalorder %s29, 0
      %p175 = por %p173, %p174
      %p176 = scmp.ne.s32.totalorder %s168, %s170
      %p177 = scmp.eq.s32.totalorder %s34, 1
      %p178 = por %p176, %p177
      %p179 = scmp.ne.s32.totalorder %s170, %s171
      %p180 = scmp.eq.s32.totalorder %s34, 0
      %p181 = por %p179, %p180
      %p182 = scmp.ne.s32.totalorder %s170, %s171
      %p183 = scmp.eq.s32.totalorder %s35, 1
      %p184 = por %p182, %p183
      %p186 = scmp.ne.s32.totalorder %s171, %s185
      %p187 = scmp.eq.s32.totalorder %s35, 0
      %p188 = por %p186, %p187
      %s190 = sadd.s32 %s189, 1
      %p193 = scmp.eq.s32.totalorder %s29, 1
      %p194 = scmp.ne.s32.totalorder %s189, %s191
      %p195 = scmp.eq.s32.totalorder %s29, 0
      %p196 = por %p194, %p195
      %p197 = scmp.ne.s32.totalorder %s189, %s191
      %p198 = scmp.eq.s32.totalorder %s34, 1
      %p199 = por %p197, %p198
      %p200 = scmp.ne.s32.totalorder %s191, %s192
      %p201 = scmp.eq.s32.totalorder %s34, 0
      %p202 = por %p200, %p201
      %p203 = scmp.ne.s32.totalorder %s191, %s192
      %p204 = scmp.eq.s32.totalorder %s35, 1
      %p205 = por %p203, %p204
      %p207 = scmp.ne.s32.totalorder %s192, %s206
      %p208 = scmp.eq.s32.totalorder %s35, 0
      %p209 = por %p207, %p208
      %s211 = sadd.s32 %s210, 1
      %p214 = scmp.eq.s32.totalorder %s29, 1
      %p215 = scmp.ne.s32.totalorder %s210, %s212
      %p216 = scmp.eq.s32.totalorder %s29, 0
      %p217 = por %p215, %p216
      %p218 = scmp.ne.s32.totalorder %s210, %s212
      %p219 = scmp.eq.s32.totalorder %s34, 1
      %p220 = por %p218, %p219
      %p221 = scmp.ne.s32.totalorder %s212, %s213
      %p222 = scmp.eq.s32.totalorder %s34, 0
      %p223 = por %p221, %p222
      %p224 = scmp.ne.s32.totalorder %s212, %s213
      %p225 = scmp.eq.s32.totalorder %s35, 1
      %p226 = por %p224, %p225
      %p228 = scmp.ne.s32.totalorder %s213, %s227
      %p229 = scmp.eq.s32.totalorder %s35, 0
      %p230 = por %p228, %p229
      %s232 = sadd.s32 %s231, 1
      %p235 = scmp.eq.s32.totalorder %s29, 1
      %p236 = scmp.ne.s32.totalorder %s231, %s233
      %p237 = scmp.eq.s32.totalorder %s29, 0
      %p238 = por %p236, %p237
      %p239 = scmp.ne.s32.totalorder %s231, %s233
      %p240 = scmp.eq.s32.totalorder %s34, 1
      %p241 = por %p239, %p240
      %p242 = scmp.ne.s32.totalorder %s233, %s234
      %p243 = scmp.eq.s32.totalorder %s34, 0
      %p244 = por %p242, %p243
      %p245 = scmp.ne.s32.totalorder %s233, %s234
      %p246 = scmp.eq.s32.totalorder %s35, 1
      %p247 = por %p245, %p246
      %p249 = scmp.ne.s32.totalorder %s234, %s248
      %p250 = scmp.eq.s32.totalorder %s35, 0
      %p251 = por %p249, %p250
      %s253 = sadd.s32 %s252, 1
      %p256 = scmp.eq.s32.totalorder %s29, 1
      %p257 = scmp.ne.s32.totalorder %s252, %s254
      %p258 = scmp.eq.s32.totalorder %s29, 0
      %p259 = por %p257, %p258
      %p260 = scmp.ne.s32.totalorder %s252, %s254
      %p261 = scmp.eq.s32.totalorder %s34, 1
      %p262 = por %p260, %p261
      %p263 = scmp.ne.s32.totalorder %s254, %s255
      %p264 = scmp.eq.s32.totalorder %s34, 0
      %p265 = por %p263, %p264
      %p266 = scmp.ne.s32.totalorder %s254, %s255
      %p267 = scmp.eq.s32.totalorder %s35, 1
      %p268 = por %p266, %p267
      %p270 = scmp.ne.s32.totalorder %s255, %s269
      %p271 = scmp.eq.s32.totalorder %s35, 0
      %p272 = por %p270, %p271
      %s274 = sadd.s32 %s273, 1
      %p277 = scmp.eq.s32.totalorder %s29, 1
      %p278 = scmp.ne.s32.totalorder %s273, %s275
      %p279 = scmp.eq.s32.totalorder %s29, 0
      %p280 = por %p278, %p279
      %p281 = scmp.ne.s32.totalorder %s273, %s275
      %p282 = scmp.eq.s32.totalorder %s34, 1
      %p283 = por %p281, %p282
      %p284 = scmp.ne.s32.totalorder %s275, %s276
      %p285 = scmp.eq.s32.totalorder %s34, 0
      %p286 = por %p284, %p285
      %p287 = scmp.ne.s32.totalorder %s275, %s276
      %p288 = scmp.eq.s32.totalorder %s35, 1
      %p289 = por %p287, %p288
      %p291 = scmp.ne.s32.totalorder %s276, %s290
      %p292 = scmp.eq.s32.totalorder %s35, 0
      %p293 = por %p291, %p292
      %s295 = sadd.s32 %s294, 1
      %p298 = scmp.eq.s32.totalorder %s29, 1
      %p299 = scmp.ne.s32.totalorder %s294, %s296
      %p300 = scmp.eq.s32.totalorder %s29, 0
      %p301 = por %p299, %p300
      %p302 = scmp.ne.s32.totalorder %s294, %s296
      %p303 = scmp.eq.s32.totalorder %s34, 1
      %p304 = por %p302, %p303
      %p305 = scmp.ne.s32.totalorder %s296, %s297
      %p306 = scmp.eq.s32.totalorder %s34, 0
      %p307 = por %p305, %p306
      %p308 = scmp.ne.s32.totalorder %s296, %s297
      %p309 = scmp.eq.s32.totalorder %s35, 1
      %p310 = por %p308, %p309
      %p312 = scmp.ne.s32.totalorder %s297, %s311
      %p313 = scmp.eq.s32.totalorder %s35, 0
      %p314 = por %p312, %p313
      %s316 = sadd.s32 %s315, 1
      %p319 = scmp.eq.s32.totalorder %s29, 1
      %p320 = scmp.ne.s32.totalorder %s315, %s317
      %p321 = scmp.eq.s32.totalorder %s29, 0
      %p322 = por %p320, %p321
      %p323 = scmp.ne.s32.totalorder %s315, %s317
      %p324 = scmp.eq.s32.totalorder %s34, 1
      %p325 = por %p323, %p324
      %p326 = scmp.ne.s32.totalorder %s317, %s318
      %p327 = scmp.eq.s32.totalorder %s34, 0
      %p328 = por %p326, %p327
      %p329 = scmp.ne.s32.totalorder %s317, %s318
      %p330 = scmp.eq.s32.totalorder %s35, 1
      %p331 = por %p329, %p330
      %p333 = scmp.ne.s32.totalorder %s318, %s332
      %p334 = scmp.eq.s32.totalorder %s35, 0
      %p335 = por %p333, %p334
      %s337 = sadd.s32 %s336, 1
      %p340 = scmp.eq.s32.totalorder %s29, 1
      %p341 = scmp.ne.s32.totalorder %s336, %s338
      %p342 = scmp.eq.s32.totalorder %s29, 0
      %p343 = por %p341, %p342
      %p344 = scmp.ne.s32.totalorder %s336, %s338
      %p345 = scmp.eq.s32.totalorder %s34, 1
      %p346 = por %p344, %p345
      %p347 = scmp.ne.s32.totalorder %s338, %s339
      %p348 = scmp.eq.s32.totalorder %s34, 0
      %p349 = por %p347, %p348
      %p350 = scmp.ne.s32.totalorder %s338, %s339
      %p351 = scmp.eq.s32.totalorder %s35, 1
      %p352 = por %p350, %p351
      %p354 = scmp.ne.s32.totalorder %s339, %s353
      %p355 = scmp.eq.s32.totalorder %s35, 0
      %p356 = por %p354, %p355
      %s357 = ssub.s32 %s29, %s36
      %p358 = scmp.eq.s32.totalorder %s357, 0
      %s360 = sadd.s32 %s359, 1
      %s361 = scalar_select %p358, %s359, %s360
      %p364 = pneg %p358
      %p365 = scmp.eq.s32.totalorder %s29, 1
      %p366 = por %p364, %p365
      %p367 = scmp.ne.s32.totalorder %s359, %s362
      %p368 = scmp.eq.s32.totalorder %s29, 0
      %p369 = por %p367, %p368
      %p370 = scmp.ne.s32.totalorder %s359, %s362
      %p371 = scmp.eq.s32.totalorder %s34, 1
      %p372 = por %p370, %p371
      %p373 = scmp.ne.s32.totalorder %s362, %s363
      %p374 = scmp.eq.s32.totalorder %s34, 0
      %p375 = por %p373, %p374
      %p376 = scmp.ne.s32.totalorder %s362, %s363
      %p377 = scmp.eq.s32.totalorder %s35, 1
      %p378 = por %p376, %p377
      %p380 = scmp.ne.s32.totalorder %s363, %s379
      %p381 = scmp.eq.s32.totalorder %s35, 0
      %p382 = por %p380, %p381
      %s383 = ssub.s32 %s29, %s36
      %p384 = scmp.eq.s32.totalorder %s383, 0
      %s386 = sadd.s32 %s385, 1
      %s387 = scalar_select %p384, %s385, %s386
      %p390 = pneg %p384
      %p391 = scmp.eq.s32.totalorder %s29, 1
      %p392 = por %p390, %p391
      %p393 = scmp.ne.s32.totalorder %s385, %s388
      %p394 = scmp.eq.s32.totalorder %s29, 0
      %p395 = por %p393, %p394
      %p396 = scmp.ne.s32.totalorder %s385, %s388
      %p397 = scmp.eq.s32.totalorder %s34, 1
      %p398 = por %p396, %p397
      %p399 = scmp.ne.s32.totalorder %s388, %s389
      %p400 = scmp.eq.s32.totalorder %s34, 0
      %p401 = por %p399, %p400
      %p402 = scmp.ne.s32.totalorder %s388, %s389
      %p403 = scmp.eq.s32.totalorder %s35, 1
      %p404 = por %p402, %p403
      %p406 = scmp.ne.s32.totalorder %s389, %s405
      %p407 = scmp.eq.s32.totalorder %s35, 0
      %p408 = por %p406, %p407
      %p409 = scmp.le.s32.totalorder 1, %s29
      %p410 = scmp.lt.s32.totalorder %s29, 3
      %p411 = pnand %p409, %p410
      %p412 = pneg %p411
      // Predicated region
      $region9: #{transformer_forward.2} parent=5 // pred_check
        _
      $region10: #{transformer_forward.2} parent=5 // pred_check_branch
        %414 = sbr.rel (%p411) target = $region12
      $region11: #{transformer_forward.2} parent=5 // pred_region
        %s415 = ssub.s32 %s29, 1
        // Predicated region
        $region13: #{transformer_forward.2} parent=11 // pred_check
          %p416 = pneg %p76
        $region14: #{transformer_forward.2} parent=11 // pred_check_branch
          %418 = sbr.rel (%p416) target = $region16
        $region15: #{transformer_forward.2} parent=11 // pred_region
          _
        $region16: #{transformer_forward.2} parent=11 // pred_fallthru
          _
        // Predicated region
        $region17: #{transformer_forward.2} parent=11 // pred_check
          %p419 = pneg %p97
        $region18: #{transformer_forward.2} parent=11 // pred_check_branch
          %421 = sbr.rel (%p419) target = $region20
        $region19: #{transformer_forward.2} parent=11 // pred_region
          _
        $region20: #{transformer_forward.2} parent=11 // pred_fallthru
          _
        // Predicated region
        $region21: #{transformer_forward.2} parent=11 // pred_check
          %p422 = pneg %p118
        $region22: #{transformer_forward.2} parent=11 // pred_check_branch
          %424 = sbr.rel (%p422) target = $region24
        $region23: #{transformer_forward.2} parent=11 // pred_region
          _
        $region24: #{transformer_forward.2} parent=11 // pred_fallthru
          _
        // Predicated region
        $region25: #{transformer_forward.2} parent=11 // pred_check
          %p425 = pneg %p139
        $region26: #{transformer_forward.2} parent=11 // pred_check_branch
          %427 = sbr.rel (%p425) target = $region28
        $region27: #{transformer_forward.2} parent=11 // pred_region
          _
        $region28: #{transformer_forward.2} parent=11 // pred_fallthru
          _
        // Predicated region
        $region29: #{transformer_forward.2} parent=11 // pred_check
          %p428 = pneg %p160
        $region30: #{transformer_forward.2} parent=11 // pred_check_branch
          %430 = sbr.rel (%p428) target = $region32
        $region31: #{transformer_forward.2} parent=11 // pred_region
          _
        $region32: #{transformer_forward.2} parent=11 // pred_fallthru
          _
        // Predicated region
        $region33: #{transformer_forward.2} parent=11 // pred_check
          %p431 = pneg %p181
        $region34: #{transformer_forward.2} parent=11 // pred_check_branch
          %433 = sbr.rel (%p431) target = $region36
        $region35: #{transformer_forward.2} parent=11 // pred_region
          _
        $region36: #{transformer_forward.2} parent=11 // pred_fallthru
          _
        // Predicated region
        $region37: #{transformer_forward.2} parent=11 // pred_check
          %p434 = pneg %p202
        $region38: #{transformer_forward.2} parent=11 // pred_check_branch
          %436 = sbr.rel (%p434) target = $region40
        $region39: #{transformer_forward.2} parent=11 // pred_region
          %s438 = ssub.s32 16, 16
          %439 = vsyncadd [#allocation5], %s438
          %s441 = sshll.u32 [#allocation4], 4
          %s442 = int_to_ptr.vmem [resolvable:$true] %s441
          %444 = dma.hbm_to_vmem [thread:$0]  %s7, 16, %s442, [#allocation5]
        $region40: #{transformer_forward.2} parent=11 // pred_fallthru
          _
        // Predicated region
        $region41: #{transformer_forward.2} parent=11 // pred_check
          %p445 = pneg %p223
        $region42: #{transformer_forward.2} parent=11 // pred_check_branch
          %447 = sbr.rel (%p445) target = $region44
        $region43: #{transformer_forward.2} parent=11 // pred_region
          %s449 = ssub.s32 16, 16
          %450 = vsyncadd [#allocation5], %s449
          %s452 = sshll.u32 [#allocation6], 4
          %s453 = int_to_ptr.vmem [resolvable:$true] %s452
          %455 = dma.hbm_to_vmem [thread:$0]  %s8, 16, %s453, [#allocation5]
        $region44: #{transformer_forward.2} parent=11 // pred_fallthru
          _
        // Predicated region
        $region45: #{transformer_forward.2} parent=11 // pred_check
          %p456 = pneg %p244
        $region46: #{transformer_forward.2} parent=11 // pred_check_branch
          %458 = sbr.rel (%p456) target = $region48
        $region47: #{transformer_forward.2} parent=11 // pred_region
          _
        $region48: #{transformer_forward.2} parent=11 // pred_fallthru
          _
        // Predicated region
        $region49: #{transformer_forward.2} parent=11 // pred_check
          %p459 = pneg %p265
        $region50: #{transformer_forward.2} parent=11 // pred_check_branch
          %461 = sbr.rel (%p459) target = $region52
        $region51: #{transformer_forward.2} parent=11 // pred_region
          %s463 = ssub.s32 16, 16
          %464 = vsyncadd [#allocation8], %s463
          %s466 = sshll.u32 [#allocation7], 4
          %s467 = int_to_ptr.vmem [resolvable:$true] %s466
          %469 = dma.hbm_to_vmem [thread:$0]  %s10, 16, %s467, [#allocation8]
        $region52: #{transformer_forward.2} parent=11 // pred_fallthru
          _
        // Predicated region
        $region53: #{transformer_forward.2} parent=11 // pred_check
          %p470 = pneg %p286
        $region54: #{transformer_forward.2} parent=11 // pred_check_branch
          %472 = sbr.rel (%p470) target = $region56
        $region55: #{transformer_forward.2} parent=11 // pred_region
          _
        $region56: #{transformer_forward.2} parent=11 // pred_fallthru
          _
        // Predicated region
        $region57: #{transformer_forward.2} parent=11 // pred_check
          %p473 = pneg %p307
        $region58: #{transformer_forward.2} parent=11 // pred_check_branch
          %475 = sbr.rel (%p473) target = $region60
        $region59: #{transformer_forward.2} parent=11 // pred_region
          %s477 = ssub.s32 16, 16
          %478 = vsyncadd [#allocation8], %s477
          %s480 = sshll.u32 [#allocation9], 4
          %s481 = int_to_ptr.vmem [resolvable:$true] %s480
          %483 = dma.hbm_to_vmem [thread:$0]  %s12, 16, %s481, [#allocation8]
        $region60: #{transformer_forward.2} parent=11 // pred_fallthru
          _
        // Predicated region
        $region61: #{transformer_forward.2} parent=11 // pred_check
          %p484 = pneg %p328
        $region62: #{transformer_forward.2} parent=11 // pred_check_branch
          %486 = sbr.rel (%p484) target = $region64
        $region63: #{transformer_forward.2} parent=11 // pred_region
          _
        $region64: #{transformer_forward.2} parent=11 // pred_fallthru
          _
        // Predicated region
        $region65: #{transformer_forward.2} parent=11 // pred_check
          %p487 = pneg %p349
        $region66: #{transformer_forward.2} parent=11 // pred_check_branch
          %489 = sbr.rel (%p487) target = $region68
        $region67: #{transformer_forward.2} parent=11 // pred_region
          %s491 = ssub.s32 16, 16
          %492 = vsyncadd [#allocation11], %s491
          %s494 = sshll.u32 [#allocation10], 4
          %s495 = int_to_ptr.vmem [resolvable:$true] %s494
          %497 = dma.hbm_to_vmem [thread:$0]  %s14, 16, %s495, [#allocation11]
        $region68: #{transformer_forward.2} parent=11 // pred_fallthru
          _
      $region12: #{transformer_forward.2} parent=5 // pred_fallthru
        _
      %p498 = scmp.lt.s32.totalorder %s29, 2
      // Predicated region
      $region69: #{transformer_forward.2} parent=5 // pred_check
        %p499 = pneg %p498
      $region70: #{transformer_forward.2} parent=5 // pred_check_branch
        %501 = sbr.rel (%p499) target = $region72
      $region71: #{transformer_forward.2} parent=5 // pred_region
        // Predicated region
        $region73: #{transformer_forward.2} parent=71 // pred_check
          %p502 = pneg %p49
        $region74: #{transformer_forward.2} parent=71 // pred_check_branch
          %504 = sbr.rel (%p502) target = $region76
        $region75: #{transformer_forward.2} parent=71 // pred_region
          %s505 = sand.u32 %s39, 1
          %s506 = scalar_lea.sflag [#allocation3], %s505
          %s507 = sand.u32 %s39, 1
          %s508 = smul.addr %s507, 4
          %s509 = scalar_lea.vmem [#allocation2], %s508
          %s511 = ssub.s32 64, 64
          %512 = vsyncadd %s506, %s511
          %s513 = smul.addr %s29, 64
          %s514 = scalar_lea.hbm %s0, %s513
          %s516 = sshll.u32 %s509, 4
          %s517 = int_to_ptr.vmem [resolvable:$true] %s516
          %519 = dma.hbm_to_vmem [thread:$0]  %s514, 64, %s517, %s506
        $region76: #{transformer_forward.2} parent=71 // pred_fallthru
          _
      $region72: #{transformer_forward.2} parent=5 // pred_fallthru
        _
      %p520 = scmp.le.s32.totalorder 1, %s29
      %p521 = scmp.lt.s32.totalorder %s29, 3
      %p522 = pnand %p520, %p521
      %p523 = pneg %p522
      // Predicated region
      $region77: #{transformer_forward.2} parent=5 // pred_check
        _
      $region78: #{transformer_forward.2} parent=5 // pred_check_branch
        %525 = sbr.rel (%p522) target = $region80
      $region79: #{transformer_forward.2} parent=5 // pred_region
        %s526 = ssub.s32 %s29, 1
        %s527 = sand.u32 %s42, 1
        %s528 = scalar_lea.sflag [#allocation3], %s527
        %s529 = sand.u32 %s42, 1
        %s530 = smul.addr %s529, 4
        %s531 = scalar_lea.vmem [#allocation2], %s530
        // Predicated region
        $region81: #{transformer_forward.2} parent=79 // pred_check
          %p532 = pneg %p55
        $region82: #{transformer_forward.2} parent=79 // pred_check_branch
          %534 = sbr.rel (%p532) target = $region84
        $region83: #{transformer_forward.2} parent=79 // pred_region
          %535 = dma.done %s528, 64
        $region84: #{transformer_forward.2} parent=79 // pred_fallthru
          _
        // Predicated region
        $region85: #{transformer_forward.2} parent=79 // pred_check
          %p536 = pneg %p202
        $region86: #{transformer_forward.2} parent=79 // pred_check_branch
          %538 = sbr.rel (%p536) target = $region88
        $region87: #{transformer_forward.2} parent=79 // pred_region
          %539 = dma.done [#allocation5], 16
        $region88: #{transformer_forward.2} parent=79 // pred_fallthru
          _
        // Predicated region
        $region89: #{transformer_forward.2} parent=79 // pred_check
          %p540 = pneg %p223
        $region90: #{transformer_forward.2} parent=79 // pred_check_branch
          %542 = sbr.rel (%p540) target = $region92
        $region91: #{transformer_forward.2} parent=79 // pred_region
          %543 = dma.done [#allocation5], 16
        $region92: #{transformer_forward.2} parent=79 // pred_fallthru
          _
        // Predicated region
        $region93: #{transformer_forward.2} parent=79 // pred_check
          %p544 = pneg %p265
        $region94: #{transformer_forward.2} parent=79 // pred_check_branch
          %546 = sbr.rel (%p544) target = $region96
        $region95: #{transformer_forward.2} parent=79 // pred_region
          %547 = dma.done [#allocation8], 16
        $region96: #{transformer_forward.2} parent=79 // pred_fallthru
          _
        // Predicated region
        $region97: #{transformer_forward.2} parent=79 // pred_check
          %p548 = pneg %p307
        $region98: #{transformer_forward.2} parent=79 // pred_check_branch
          %550 = sbr.rel (%p548) target = $region100
        $region99: #{transformer_forward.2} parent=79 // pred_region
          %551 = dma.done [#allocation8], 16
        $region100: #{transformer_forward.2} parent=79 // pred_fallthru
          _
        // Predicated region
        $region101: #{transformer_forward.2} parent=79 // pred_check
          %p552 = pneg %p349
        $region102: #{transformer_forward.2} parent=79 // pred_check_branch
          %554 = sbr.rel (%p552) target = $region104
        $region103: #{transformer_forward.2} parent=79 // pred_region
          %555 = dma.done [#allocation11], 16
        $region104: #{transformer_forward.2} parent=79 // pred_fallthru
          _
        %s556 = sand.u32 %s42, 1
        %s557 = scalar_lea.sflag [#allocation3], %s556
        %s558 = sand.u32 %s42, 1
        %s559 = smul.addr %s558, 4
        %s560 = scalar_lea.vmem [#allocation2], %s559
        %p561 = pneg %p55
        %p562 = pneg %p52
        %p563 = pneg %p76
        %p564 = pneg %p73
        %p565 = pneg %p97
        %p566 = pneg %p94
        %p567 = pneg %p118
        %p568 = pneg %p115
        %p569 = pneg %p139
        %p570 = pneg %p136
        %p571 = pneg %p160
        %p572 = pneg %p157
        %p573 = pneg %p181
        %p574 = pneg %p178
        %p575 = pneg %p202
        %p576 = pneg %p199
        %p577 = pneg %p223
        %p578 = pneg %p220
        %p579 = pneg %p244
        %p580 = pneg %p241
        %p581 = pneg %p265
        %p582 = pneg %p262
        %p583 = pneg %p286
        %p584 = pneg %p283
        %p585 = pneg %p307
        %p586 = pneg %p304
        %p587 = pneg %p328
        %p588 = pneg %p325
        %p589 = pneg %p349
        %p590 = pneg %p346
        %p591 = pneg %p375
        %p592 = pneg %p372
        %p593 = scmp.lt.s32.totalorder %s34, 1
        %s594 = scalar_select %p593, %s34, 1
        %s595 = smul.addr %s594, 4
        %s596 = scalar_lea.vmem %s15, %s595
        %p597 = pneg %p401
        %p598 = pneg %p398
        %p599 = scmp.lt.s32.totalorder %s34, 1
        %s600 = scalar_select %p599, %s34, 1
        %s601 = smul.addr %s600, 2
        %s602 = smul.addr %s601, 4
        %s603 = scalar_lea.vmem %s16, %s602
        %p604 = scmp.lt.s32.totalorder %s34, 1
        %s605 = scalar_select %p604, %s34, 1
        %s606 = smul.addr %s605, 4
        %s607 = scalar_lea.vmem %s15, %s606
        %p608 = scmp.lt.s32.totalorder %s34, 1
        %s609 = scalar_select %p608, %s34, 1
        %s610 = smul.addr %s609, 2
        %s611 = smul.addr %s610, 4
        %s612 = scalar_lea.vmem %s16, %s611
        %v614 = vld [vmem:[%s531] sm:$0xf]
        %v615 = vunpack.c.l.bf16 %v614
        %v616 = vld [vmem:[%s1] sm:$0x1]
        %v617 = vld [vmem:[%s2] sm:$0x1]
        %vm618 = vcmask 261120
        %v619 = vsel %vm618, %v615, 0.0
        %620 = vadd.xlane.f32.xlu0 %v619
        %v621 = vpop.xlane.xlu0 %620
        %v622 = vrcp.pop 32.0
        %v623 = vmul.f32 %v621, %v622
        %v624 = vsub.f32 %v615, %v623
        %v625 = vmul.f32 %v624, %v624
        %v626 = vsel %vm618, %v625, 0.0
        %627 = vadd.xlane.f32.xlu0 %v626
        %v628 = vpop.xlane.xlu0 %627
        %v629 = vmul.f32 %v628, %v622
        %v630 = vadd.f32 %v629, 1e-05
        %v631 = vrsqrt.pop %v630
        %v632 = vmul.f32 %v624, %v631
        %v634 = vlaneseq
        %v635 = vshrl.u32 %v634, 7
        %v636 = vsub.s32 0, %v635
        %v637 = vrot.slane %v616, %v636
        %v639 = vmul.f32 %v632, %v637
        %v641 = vlaneseq
        %v642 = vshrl.u32 %v641, 7
        %v643 = vsub.s32 0, %v642
        %v644 = vrot.slane %v617, %v643
        %v646 = vadd.f32 %v639, %v644
        %v647 = vpack.c.bf16 %v646, %v646
        %v648 = vld [vmem:[%s3] sm:$0xff]
        %v649 = vld [vmem:[%s3 + $0x8] sm:$0xff]
        %v650 = vld [vmem:[%s3 + $0x10] sm:$0xff]
        %v651 = vld [vmem:[%s3 + $0x18] sm:$0xff]
        %v656 = vunpack.c.l.b16 %v648
        %v657 = vunpack.c.h.b16 %v648
        %v658 = vunpack.c.l.b16 %v649
        %v659 = vunpack.c.h.b16 %v649
        %v660 = vunpack.c.l.b16 %v650
        %v661 = vunpack.c.h.b16 %v650
        %v662 = vunpack.c.l.b16 %v651
        %v663 = vunpack.c.h.b16 %v651
        %v664 = vpack.c.b16 %v658, %v656
        %v665 = vpack.c.b16 %v659, %v657
        %v666 = vpack.c.b16 %v662, %v660
        %v667 = vpack.c.b16 %v663, %v661
        %v673 = vsel %vm618, %v647, 0
        %675 = vmatprep.subr.bf16.mxu0 %v665
        %676 = vmatpush1.bf16.msra.mxu0 %v664
        %677 = vmatprep.subr.bf16.mxu0 %v667
        %678 = vmatpush1.bf16.msra.mxu0 %v666
        %679 = vmatprep.subr.bf16.mxu0 0
        %680 = vmatpush1.bf16.msra.mxu0 0
        %681 = vmatprep.subr.bf16.mxu0 0
        %682 = vmatpush1.bf16.msra.mxu0 0
        %683 = vmatprep.subr.bf16.mxu0 0
        %684 = vmatpush1.bf16.msra.mxu0 0
        %685 = vmatprep.subr.bf16.mxu0 0
        %686 = vmatpush1.bf16.msra.mxu0 0
        %687 = vmatprep.subr.bf16.mxu0 0
        %688 = vmatpush1.bf16.msra.mxu0 0
        %689 = vmatprep.subr.bf16.mxu0 0
        %690 = vmatpush1.bf16.msra.mxu0 0
        %691 = vmatprep.subr.bf16.mxu0 0
        %692 = vmatpush1.bf16.msra.mxu0 0
        %693 = vmatprep.subr.bf16.mxu0 0
        %694 = vmatpush1.bf16.msra.mxu0 0
        %695 = vmatprep.subr.bf16.mxu0 0
        %696 = vmatpush1.bf16.msra.mxu0 0
        %697 = vmatprep.subr.bf16.mxu0 0
        %698 = vmatpush1.bf16.msra.mxu0 0
        %699 = vmatprep.subr.bf16.mxu0 0
        %700 = vmatpush1.bf16.msra.mxu0 0
        %701 = vmatprep.subr.bf16.mxu0 0
        %702 = vmatpush1.bf16.msra.mxu0 0
        %703 = vmatprep.subr.bf16.mxu0 0
        %704 = vmatpush1.bf16.msra.mxu0 0
        %705 = vmatprep.subr.bf16.mxu0 0
        %706 = vmatpush1.bf16.msra.mxu0 0
        %707 = vmatprep.mubr.bf16.mxu0 0
        %708 = vmatmul.mubr.bf16.gmra.mrb[0].mxu0 %v673
        %v709 = vpop.f32.mrb[0].mxu0
        %v710 = vadd.f32 0.0, %v709
        %v711 = vpop.f32.mrb[0].mxu0
        %v712 = vadd.f32 0.0, %v711
        %v713 = vpop.f32.mrb[0].mxu0
        %v714 = vpop.f32.mrb[0].mxu0
        %715 = vdwg.mxu0
        %v716 = vld [vmem:[%s4] sm:$0xff]
        %v717 = vld [vmem:[%s5] sm:$0xff]
        %v718 = vmul.f32 %v710, %v716
        %720 = vrot.lane.b32.xlu0 %v717, 32
        %v721 = vpop.permute.xlu0 %720
        %v723 = vmul.f32 %v710, %v721
        %725 = vrot.lane.b32.xlu0 %v723, 96
        %v726 = vpop.permute.xlu0 %725
        %v728 = vadd.f32 %v718, %v726
        %730 = vrot.lane.b32.xlu0 %v716, 64
        %v731 = vpop.permute.xlu0 %730
        %v733 = vmul.f32 %v710, %v731
        %734 = vrot.lane.b32.xlu0 %v717, 96
        %v735 = vpop.permute.xlu0 %734
        %v737 = vmul.f32 %v710, %v735
        %739 = vrot.lane.b32.xlu0 %v737, 96
        %v740 = vpop.permute.xlu0 %739
        %v742 = vadd.f32 %v733, %v740
        %744 = vrot.lane.b32.xlu0 %v728, 112
        %v745 = vpop.permute.xlu0 %744
        %v747 = vpack.c.bf16 %v728, %v728
        %v748 = vpack.c.bf16 %v745, %v745
        %750 = vrot.lane.b32.xlu0 %v742, 112
        %v751 = vpop.permute.xlu0 %750
        %v753 = vpack.c.bf16 %v742, %v742
        %v754 = vpack.c.bf16 %v751, %v751
        %756 = vrot.lane.b32.xlu0 %v712, 112
        %v757 = vpop.permute.xlu0 %756
        %v759 = vpack.c.bf16 %v712, %v712
        %v760 = vpack.c.bf16 %v757, %v757
        %762 = vrot.lane.b32.xlu0 %v753, 64
        %v763 = vpop.permute.xlu0 %762
        %vm764 = vcmask 130048
        %v766 = vsel %vm764, %v747, 0
        %v769 = vsel %vm764, %v763, 0
        %771 = vmatprep.subr.bf16.mxu0 0
        %772 = vmatpush1.bf16.xpose.msra.mxu0 %v769
        %773 = vmatprep.subr.bf16.mxu0 0
        %774 = vmatpush1.bf16.xpose.msra.mxu0 0
        %775 = vmatprep.subr.bf16.mxu0 0
        %776 = vmatpush1.bf16.xpose.msra.mxu0 0
        %777 = vmatprep.subr.bf16.mxu0 0
        %778 = vmatpush1.bf16.xpose.msra.mxu0 0
        %779 = vmatprep.subr.bf16.mxu0 0
        %780 = vmatpush1.bf16.xpose.msra.mxu0 0
        %781 = vmatprep.subr.bf16.mxu0 0
        %782 = vmatpush1.bf16.xpose.msra.mxu0 0
        %783 = vmatprep.subr.bf16.mxu0 0
        %784 = vmatpush1.bf16.xpose.msra.mxu0 0
        %785 = vmatprep.subr.bf16.mxu0 0
        %786 = vmatpush1.bf16.xpose.msra.mxu0 0
        %787 = vmatprep.subr.bf16.mxu0 0
        %788 = vmatpush1.bf16.xpose.msra.mxu0 0
        %789 = vmatprep.subr.bf16.mxu0 0
        %790 = vmatpush1.bf16.xpose.msra.mxu0 0
        %791 = vmatprep.subr.bf16.mxu0 0
        %792 = vmatpush1.bf16.xpose.msra.mxu0 0
        %793 = vmatprep.subr.bf16.mxu0 0
        %794 = vmatpush1.bf16.xpose.msra.mxu0 0
        %795 = vmatprep.subr.bf16.mxu0 0
        %796 = vmatpush1.bf16.xpose.msra.mxu0 0
        %797 = vmatprep.subr.bf16.mxu0 0
        %798 = vmatpush1.bf16.xpose.msra.mxu0 0
        %799 = vmatprep.subr.bf16.mxu0 0
        %800 = vmatpush1.bf16.xpose.msra.mxu0 0
        %801 = vmatprep.subr.bf16.mxu0 0
        %802 = vmatpush1.bf16.xpose.msra.mxu0 0
        %803 = vmatprep.mubr.bf16.mxu0 0
        %804 = vmatmul.mubr.bf16.gmra.mrb[0].mxu0 %v766
        %v805 = vpop.f32.mrb[0].mxu0
        %v806 = vadd.f32 0.0, %v805
        %v807 = vpop.f32.mrb[0].mxu0
        %v808 = vpop.f32.mrb[0].mxu0
        %v809 = vpop.f32.mrb[0].mxu0
        %810 = vdwg.mxu0
        %812 = vrot.lane.b32.xlu0 %v754, 64
        %v813 = vpop.permute.xlu0 %812
        %v815 = vsel %vm764, %v748, 0
        %v818 = vsel %vm764, %v813, 0
        %820 = vmatprep.subr.bf16.mxu0 0
        %821 = vmatpush1.bf16.xpose.msra.mxu0 %v818
        %822 = vmatprep.subr.bf16.mxu0 0
        %823 = vmatpush1.bf16.xpose.msra.mxu0 0
        %824 = vmatprep.subr.bf16.mxu0 0
        %825 = vmatpush1.bf16.xpose.msra.mxu0 0
        %826 = vmatprep.subr.bf16.mxu0 0
        %827 = vmatpush1.bf16.xpose.msra.mxu0 0
        %828 = vmatprep.subr.bf16.mxu0 0
        %829 = vmatpush1.bf16.xpose.msra.mxu0 0
        %830 = vmatprep.subr.bf16.mxu0 0
        %831 = vmatpush1.bf16.xpose.msra.mxu0 0
        %832 = vmatprep.subr.bf16.mxu0 0
        %833 = vmatpush1.bf16.xpose.msra.mxu0 0
        %834 = vmatprep.subr.bf16.mxu0 0
        %835 = vmatpush1.bf16.xpose.msra.mxu0 0
        %836 = vmatprep.subr.bf16.mxu0 0
        %837 = vmatpush1.bf16.xpose.msra.mxu0 0
        %838 = vmatprep.subr.bf16.mxu0 0
        %839 = vmatpush1.bf16.xpose.msra.mxu0 0
        %840 = vmatprep.subr.bf16.mxu0 0
        %841 = vmatpush1.bf16.xpose.msra.mxu0 0
        %842 = vmatprep.subr.bf16.mxu0 0
        %843 = vmatpush1.bf16.xpose.msra.mxu0 0
        %844 = vmatprep.subr.bf16.mxu0 0
        %845 = vmatpush1.bf16.xpose.msra.mxu0 0
        %846 = vmatprep.subr.bf16.mxu0 0
        %847 = vmatpush1.bf16.xpose.msra.mxu0 0
        %848 = vmatprep.subr.bf16.mxu0 0
        %849 = vmatpush1.bf16.xpose.msra.mxu0 0
        %850 = vmatprep.subr.bf16.mxu0 0
        %851 = vmatpush1.bf16.xpose.msra.mxu0 0
        %852 = vmatprep.mubr.bf16.mxu0 0
        %853 = vmatmul.mubr.bf16.gmra.mrb[0].mxu0 %v815
        %v854 = vpop.f32.mrb[0].mxu0
        %v855 = vadd.f32 0.0, %v854
        %v856 = vpop.f32.mrb[0].mxu0
        %v857 = vpop.f32.mrb[0].mxu0
        %v858 = vpop.f32.mrb[0].mxu0
        %859 = vdwg.mxu0
        %vm860 = vcmask 64512
        %v861 = vsel %vm860, %v806, -inf
        %862 = vmax.xlane.f32.xlu0 %v861
        %v863 = vpop.xlane.xlu0 %862
        %v864 = vsel %vm860, %v855, -inf
        %865 = vmax.xlane.f32.xlu0 %v864
        %v866 = vpop.xlane.xlu0 %865
        %v867 = vsub.f32 %v806, %v863
        %v868 = vsub.f32 %v855, %v866
        %v869 = vmul.f32 %v867, 1.442695
        %v870 = vpow.pop %v869
        %v871 = vmul.f32 %v868, 1.442695
        %v872 = vpow.pop %v871
        %v873 = vsel %vm860, %v870, 0.0
        %874 = vadd.xlane.f32.xlu0 %v873
        %v875 = vpop.xlane.xlu0 %874
        %v876 = vsel %vm860, %v872, 0.0
        %877 = vadd.xlane.f32.xlu0 %v876
        %v878 = vpop.xlane.xlu0 %877
        %v879 = vrcp.pop %v875
        %v880 = vrcp.pop %v878
        %v881 = vmul.f32 %v870, %v879
        %v882 = vmul.f32 %v872, %v880
        %v883 = vpack.c.bf16 %v881, %v881
        %v884 = vpack.c.bf16 %v882, %v882
        %vm885 = vcmask 60416
        %886 = vst.msk [vmem:[%s612] sm:$0xf] %vm885, %v883
        %887 = vst.msk [vmem:[%s612 + $0x4] sm:$0xf] %vm885, %v884
        %v889 = vsel %vm860, %v883, 0
        %vm891 = vcmask 1043456
        %v893 = vsel %vm891, %v759, 0
        %895 = vmatprep.subr.bf16.mxu0 0
        %896 = vmatpush1.bf16.msra.mxu0 %v893
        %897 = vmatprep.subr.bf16.mxu0 0
        %898 = vmatpush1.bf16.msra.mxu0 0
        %899 = vmatprep.subr.bf16.mxu0 0
        %900 = vmatpush1.bf16.msra.mxu0 0
        %901 = vmatprep.subr.bf16.mxu0 0
        %902 = vmatpush1.bf16.msra.mxu0 0
        %903 = vmatprep.subr.bf16.mxu0 0
        %904 = vmatpush1.bf16.msra.mxu0 0
        %905 = vmatprep.subr.bf16.mxu0 0
        %906 = vmatpush1.bf16.msra.mxu0 0
        %907 = vmatprep.subr.bf16.mxu0 0
        %908 = vmatpush1.bf16.msra.mxu0 0
        %909 = vmatprep.subr.bf16.mxu0 0
        %910 = vmatpush1.bf16.msra.mxu0 0
        %911 = vmatprep.subr.bf16.mxu0 0
        %912 = vmatpush1.bf16.msra.mxu0 0
        %913 = vmatprep.subr.bf16.mxu0 0
        %914 = vmatpush1.bf16.msra.mxu0 0
        %915 = vmatprep.subr.bf16.mxu0 0
        %916 = vmatpush1.bf16.msra.mxu0 0
        %917 = vmatprep.subr.bf16.mxu0 0
        %918 = vmatpush1.bf16.msra.mxu0 0
        %919 = vmatprep.subr.bf16.mxu0 0
        %920 = vmatpush1.bf16.msra.mxu0 0
        %921 = vmatprep.subr.bf16.mxu0 0
        %922 = vmatpush1.bf16.msra.mxu0 0
        %923 = vmatprep.subr.bf16.mxu0 0
        %924 = vmatpush1.bf16.msra.mxu0 0
        %925 = vmatprep.subr.bf16.mxu0 0
        %926 = vmatpush1.bf16.msra.mxu0 0
        %927 = vmatprep.mubr.bf16.mxu0 0
        %928 = vmatmul.mubr.bf16.gmra.mrb[0].mxu0 %v889
        %v929 = vpop.f32.mrb[0].mxu0
        %v930 = vadd.f32 0.0, %v929
        %v931 = vpop.f32.mrb[0].mxu0
        %v932 = vpop.f32.mrb[0].mxu0
        %v933 = vpop.f32.mrb[0].mxu0
        %934 = vdwg.mxu0
        %v936 = vsel %vm860, %v884, 0
        %v939 = vsel %vm891, %v760, 0
        %941 = vmatprep.subr.bf16.mxu0 0
        %942 = vmatpush1.bf16.msra.mxu0 %v939
        %943 = vmatprep.subr.bf16.mxu0 0
        %944 = vmatpush1.bf16.msra.mxu0 0
        %945 = vmatprep.subr.bf16.mxu0 0
        %946 = vmatpush1.bf16.msra.mxu0 0
        %947 = vmatprep.subr.bf16.mxu0 0
        %948 = vmatpush1.bf16.msra.mxu0 0
        %949 = vmatprep.subr.bf16.mxu0 0
        %950 = vmatpush1.bf16.msra.mxu0 0
        %951 = vmatprep.subr.bf16.mxu0 0
        %952 = vmatpush1.bf16.msra.mxu0 0
        %953 = vmatprep.subr.bf16.mxu0 0
        %954 = vmatpush1.bf16.msra.mxu0 0
        %955 = vmatprep.subr.bf16.mxu0 0
        %956 = vmatpush1.bf16.msra.mxu0 0
        %957 = vmatprep.subr.bf16.mxu0 0
        %958 = vmatpush1.bf16.msra.mxu0 0
        %959 = vmatprep.subr.bf16.mxu0 0
        %960 = vmatpush1.bf16.msra.mxu0 0
        %961 = vmatprep.subr.bf16.mxu0 0
        %962 = vmatpush1.bf16.msra.mxu0 0
        %963 = vmatprep.subr.bf16.mxu0 0
        %964 = vmatpush1.bf16.msra.mxu0 0
        %965 = vmatprep.subr.bf16.mxu0 0
        %966 = vmatpush1.bf16.msra.mxu0 0
        %967 = vmatprep.subr.bf16.mxu0 0
        %968 = vmatpush1.bf16.msra.mxu0 0
        %969 = vmatprep.subr.bf16.mxu0 0
        %970 = vmatpush1.bf16.msra.mxu0 0
        %971 = vmatprep.subr.bf16.mxu0 0
        %972 = vmatpush1.bf16.msra.mxu0 0
        %973 = vmatprep.mubr.bf16.mxu0 0
        %974 = vmatmul.mubr.bf16.gmra.mrb[0].mxu0 %v936
        %v975 = vpop.f32.mrb[0].mxu0
        %v976 = vadd.f32 0.0, %v975
        %v977 = vpop.f32.mrb[0].mxu0
        %v978 = vpop.f32.mrb[0].mxu0
        %v979 = vpop.f32.mrb[0].mxu0
        %980 = vdwg.mxu0
        %982 = vrot.lane.b32.xlu0 %v976, 16
        %v983 = vpop.permute.xlu0 %982
        %v985 = vsel %vm764, %v930, %v983
        %v986 = vpack.c.bf16 %v985, %v985
        %v987 = vld [vmem:[%s6] sm:$0xf]
        %v988 = vld [vmem:[%s6 + $0x4] sm:$0xf]
        %v989 = vld [vmem:[%s6 + $0x8] sm:$0xf]
        %v990 = vld [vmem:[%s6 + $0xc] sm:$0xf]
        %v995 = vunpack.c.l.b16 %v987
        %v996 = vunpack.c.l.b16 %v988
        %v997 = vunpack.c.l.b16 %v989
        %v998 = vunpack.c.l.b16 %v990
        %v999 = vpack.c.b16 %v996, %v995
        %v1000 = vpack.c.b16 %v998, %v997
        %v1004 = vsel %vm618, %v986, 0
        %1006 = vmatprep.subr.bf16.mxu0 0
        %1007 = vmatpush1.bf16.msra.mxu0 %v999
        %1008 = vmatprep.subr.bf16.mxu0 0
        %1009 = vmatpush1.bf16.msra.mxu0 %v1000
        %1010 = vmatprep.subr.bf16.mxu0 0
        %1011 = vmatpush1.bf16.msra.mxu0 0
        %1012 = vmatprep.subr.bf16.mxu0 0
        %1013 = vmatpush1.bf16.msra.mxu0 0
        %1014 = vmatprep.subr.bf16.mxu0 0
        %1015 = vmatpush1.bf16.msra.mxu0 0
        %1016 = vmatprep.subr.bf16.mxu0 0
        %1017 = vmatpush1.bf16.msra.mxu0 0
        %1018 = vmatprep.subr.bf16.mxu0 0
        %1019 = vmatpush1.bf16.msra.mxu0 0
        %1020 = vmatprep.subr.bf16.mxu0 0
        %1021 = vmatpush1.bf16.msra.mxu0 0
        %1022 = vmatprep.subr.bf16.mxu0 0
        %1023 = vmatpush1.bf16.msra.mxu0 0
        %1024 = vmatprep.subr.bf16.mxu0 0
        %1025 = vmatpush1.bf16.msra.mxu0 0
        %1026 = vmatprep.subr.bf16.mxu0 0
        %1027 = vmatpush1.bf16.msra.mxu0 0
        %1028 = vmatprep.subr.bf16.mxu0 0
        %1029 = vmatpush1.bf16.msra.mxu0 0
        %1030 = vmatprep.subr.bf16.mxu0 0
        %1031 = vmatpush1.bf16.msra.mxu0 0
        %1032 = vmatprep.subr.bf16.mxu0 0
        %1033 = vmatpush1.bf16.msra.mxu0 0
        %1034 = vmatprep.subr.bf16.mxu0 0
        %1035 = vmatpush1.bf16.msra.mxu0 0
        %1036 = vmatprep.subr.bf16.mxu0 0
        %1037 = vmatpush1.bf16.msra.mxu0 0
        %1038 = vmatprep.mubr.bf16.mxu0 0
        %1039 = vmatmul.mubr.bf16.gmra.mrb[0].mxu0 %v1004
        %v1040 = vpop.f32.mrb[0].mxu0
        %v1041 = vadd.f32 %v615, %v1040
        %v1042 = vpop.f32.mrb[0].mxu0
        %v1043 = vpop.f32.mrb[0].mxu0
        %v1044 = vpop.f32.mrb[0].mxu0
        %1045 = vdwg.mxu0
        %v1046 = vld [vmem:[#allocation4] sm:$0x1]
        %v1047 = vld [vmem:[#allocation6] sm:$0x1]
        %v1048 = vsel %vm618, %v1041, 0.0
        %1049 = vadd.xlane.f32.xlu0 %v1048
        %v1050 = vpop.xlane.xlu0 %1049
        %v1051 = vmul.f32 %v1050, %v622
        %v1052 = vsub.f32 %v1041, %v1051
        %v1053 = vmul.f32 %v1052, %v1052
        %v1054 = vsel %vm618, %v1053, 0.0
        %1055 = vadd.xlane.f32.xlu0 %v1054
        %v1056 = vpop.xlane.xlu0 %1055
        %v1057 = vmul.f32 %v1056, %v622
        %v1058 = vadd.f32 %v1057, 1e-05
        %v1059 = vrsqrt.pop %v1058
        %v1060 = vmul.f32 %v1052, %v1059
        %v1062 = vlaneseq
        %v1063 = vshrl.u32 %v1062, 7
        %v1064 = vsub.s32 0, %v1063
        %v1065 = vrot.slane %v1046, %v1064
        %v1067 = vmul.f32 %v1060, %v1065
        %v1069 = vlaneseq
        %v1070 = vshrl.u32 %v1069, 7
        %v1071 = vsub.s32 0, %v1070
        %v1072 = vrot.slane %v1047, %v1071
        %v1074 = vadd.f32 %v1067, %v1072
        %v1075 = vpack.c.bf16 %v1074, %v1074
        %v1076 = vld [vmem:[%s9] sm:$0xf]
        %v1077 = vld [vmem:[%s9 + $0x4] sm:$0xf]
        %v1078 = vld [vmem:[%s9 + $0x8] sm:$0xf]
        %v1079 = vld [vmem:[%s9 + $0xc] sm:$0xf]
        %v1080 = vld [vmem:[#allocation7] sm:$0x1]
        %v1082 = vlaneseq
        %v1083 = vshrl.u32 %v1082, 7
        %v1084 = vsub.s32 0, %v1083
        %v1085 = vrot.slane %v1080, %v1084
        %v1091 = vunpack.c.l.b16 %v1076
        %v1092 = vunpack.c.l.b16 %v1077
        %v1093 = vunpack.c.l.b16 %v1078
        %v1094 = vunpack.c.l.b16 %v1079
        %v1095 = vpack.c.b16 %v1092, %v1091
        %v1096 = vpack.c.b16 %v1094, %v1093
        %v1100 = vsel %vm618, %v1075, 0
        %1102 = vmatprep.subr.bf16.mxu0 0
        %1103 = vmatpush1.bf16.msra.mxu0 %v1095
        %1104 = vmatprep.subr.bf16.mxu0 0
        %1105 = vmatpush1.bf16.msra.mxu0 %v1096
        %1106 = vmatprep.subr.bf16.mxu0 0
        %1107 = vmatpush1.bf16.msra.mxu0 0
        %1108 = vmatprep.subr.bf16.mxu0 0
        %1109 = vmatpush1.bf16.msra.mxu0 0
        %1110 = vmatprep.subr.bf16.mxu0 0
        %1111 = vmatpush1.bf16.msra.mxu0 0
        %1112 = vmatprep.subr.bf16.mxu0 0
        %1113 = vmatpush1.bf16.msra.mxu0 0
        %1114 = vmatprep.subr.bf16.mxu0 0
        %1115 = vmatpush1.bf16.msra.mxu0 0
        %1116 = vmatprep.subr.bf16.mxu0 0
        %1117 = vmatpush1.bf16.msra.mxu0 0
        %1118 = vmatprep.subr.bf16.mxu0 0
        %1119 = vmatpush1.bf16.msra.mxu0 0
        %1120 = vmatprep.subr.bf16.mxu0 0
        %1121 = vmatpush1.bf16.msra.mxu0 0
        %1122 = vmatprep.subr.bf16.mxu0 0
        %1123 = vmatpush1.bf16.msra.mxu0 0
        %1124 = vmatprep.subr.bf16.mxu0 0
        %1125 = vmatpush1.bf16.msra.mxu0 0
        %1126 = vmatprep.subr.bf16.mxu0 0
        %1127 = vmatpush1.bf16.msra.mxu0 0
        %1128 = vmatprep.subr.bf16.mxu0 0
        %1129 = vmatpush1.bf16.msra.mxu0 0
        %1130 = vmatprep.subr.bf16.mxu0 0
        %1131 = vmatpush1.bf16.msra.mxu0 0
        %1132 = vmatprep.subr.bf16.mxu0 0
        %1133 = vmatpush1.bf16.msra.mxu0 0
        %1134 = vmatprep.mubr.bf16.mxu0 0
        %1135 = vmatmul.mubr.bf16.gmra.mrb[0].mxu0 %v1100
        %v1136 = vpop.f32.mrb[0].mxu0
        %v1137 = vadd.f32 %v1085, %v1136
        %v1138 = vpop.f32.mrb[0].mxu0
        %v1139 = vpop.f32.mrb[0].mxu0
        %v1140 = vpop.f32.mrb[0].mxu0
        %1141 = vdwg.mxu0
        %v1142 = vld [vmem:[%s11] sm:$0xf]
        %v1143 = vld [vmem:[%s11 + $0x4] sm:$0xf]
        %v1144 = vld [vmem:[%s11 + $0x8] sm:$0xf]
        %v1145 = vld [vmem:[%s11 + $0xc] sm:$0xf]
        %v1146 = vld [vmem:[#allocation9] sm:$0x1]
        %v1148 = vlaneseq
        %v1149 = vshrl.u32 %v1148, 7
        %v1150 = vsub.s32 0, %v1149
        %v1151 = vrot.slane %v1146, %v1150
        %v1157 = vunpack.c.l.b16 %v1142
        %v1158 = vunpack.c.l.b16 %v1143
        %v1159 = vunpack.c.l.b16 %v1144
        %v1160 = vunpack.c.l.b16 %v1145
        %v1161 = vpack.c.b16 %v1158, %v1157
        %v1162 = vpack.c.b16 %v1160, %v1159
        %1165 = vmatprep.subr.bf16.mxu0 0
        %1166 = vmatpush1.bf16.msra.mxu0 %v1161
        %1167 = vmatprep.subr.bf16.mxu0 0
        %1168 = vmatpush1.bf16.msra.mxu0 %v1162
        %1169 = vmatprep.subr.bf16.mxu0 0
        %1170 = vmatpush1.bf16.msra.mxu0 0
        %1171 = vmatprep.subr.bf16.mxu0 0
        %1172 = vmatpush1.bf16.msra.mxu0 0
        %1173 = vmatprep.subr.bf16.mxu0 0
        %1174 = vmatpush1.bf16.msra.mxu0 0
        %1175 = vmatprep.subr.bf16.mxu0 0
        %1176 = vmatpush1.bf16.msra.mxu0 0
        %1177 = vmatprep.subr.bf16.mxu0 0
        %1178 = vmatpush1.bf16.msra.mxu0 0
        %1179 = vmatprep.subr.bf16.mxu0 0
        %1180 = vmatpush1.bf16.msra.mxu0 0
        %1181 = vmatprep.subr.bf16.mxu0 0
        %1182 = vmatpush1.bf16.msra.mxu0 0
        %1183 = vmatprep.subr.bf16.mxu0 0
        %1184 = vmatpush1.bf16.msra.mxu0 0
        %1185 = vmatprep.subr.bf16.mxu0 0
        %1186 = vmatpush1.bf16.msra.mxu0 0
        %1187 = vmatprep.subr.bf16.mxu0 0
        %1188 = vmatpush1.bf16.msra.mxu0 0
        %1189 = vmatprep.subr.bf16.mxu0 0
        %1190 = vmatpush1.bf16.msra.mxu0 0
        %1191 = vmatprep.subr.bf16.mxu0 0
        %1192 = vmatpush1.bf16.msra.mxu0 0
        %1193 = vmatprep.subr.bf16.mxu0 0
        %1194 = vmatpush1.bf16.msra.mxu0 0
        %1195 = vmatprep.subr.bf16.mxu0 0
        %1196 = vmatpush1.bf16.msra.mxu0 0
        %1197 = vmatprep.mubr.bf16.mxu0 0
        %1198 = vmatmul.mubr.bf16.gmra.mrb[0].mxu0 %v1100
        %v1199 = vpop.f32.mrb[0].mxu0
        %v1200 = vadd.f32 %v1151, %v1199
        %v1201 = vpop.f32.mrb[0].mxu0
        %v1202 = vpop.f32.mrb[0].mxu0
        %v1203 = vpop.f32.mrb[0].mxu0
        %1204 = vdwg.mxu0
        %v1205 = vmul.f32 %v1200, 0.5
        %v1206 = vmul.f32 %v1200, 0.70710677
        %v1207 = verf.f32.pop %v1206
        %v1208 = vadd.f32 %v1207, 1.0
        %v1209 = vmul.f32 %v1205, %v1208
        %v1210 = vmul.f32 %v1137, %v1209
        %v1211 = vpack.c.bf16 %v1210, %v1210
        %v1212 = vld [vmem:[%s13] sm:$0xf]
        %v1213 = vld [vmem:[%s13 + $0x4] sm:$0xf]
        %v1214 = vld [vmem:[%s13 + $0x8] sm:$0xf]
        %v1215 = vld [vmem:[%s13 + $0xc] sm:$0xf]
        %v1216 = vld [vmem:[%s13 + $0x10] sm:$0xf]
        %v1217 = vld [vmem:[%s13 + $0x14] sm:$0xf]
        %v1218 = vld [vmem:[%s13 + $0x18] sm:$0xf]
        %v1219 = vld [vmem:[%s13 + $0x1c] sm:$0xf]
        %v1220 = vld [vmem:[%s13 + $0x20] sm:$0xf]
        %v1221 = vld [vmem:[%s13 + $0x24] sm:$0xf]
        %v1222 = vld [vmem:[%s13 + $0x28] sm:$0xf]
        %v1223 = vld [vmem:[%s13 + $0x2c] sm:$0xf]
        %v1224 = vld [vmem:[%s13 + $0x30] sm:$0xf]
        %v1225 = vld [vmem:[%s13 + $0x34] sm:$0xf]
        %v1226 = vld [vmem:[%s13 + $0x38] sm:$0xf]
        %v1227 = vld [vmem:[%s13 + $0x3c] sm:$0xf]
        %v1228 = vld [vmem:[#allocation10] sm:$0x1]
        %v1230 = vlaneseq
        %v1231 = vshrl.u32 %v1230, 7
        %v1232 = vsub.s32 0, %v1231
        %v1233 = vrot.slane %v1228, %v1232
        %v1251 = vunpack.c.l.b16 %v1212
        %v1252 = vunpack.c.l.b16 %v1213
        %v1253 = vunpack.c.l.b16 %v1214
        %v1254 = vunpack.c.l.b16 %v1215
        %v1255 = vunpack.c.l.b16 %v1216
        %v1256 = vunpack.c.l.b16 %v1217
        %v1257 = vunpack.c.l.b16 %v1218
        %v1258 = vunpack.c.l.b16 %v1219
        %v1259 = vunpack.c.l.b16 %v1220
        %v1260 = vunpack.c.l.b16 %v1221
        %v1261 = vunpack.c.l.b16 %v1222
        %v1262 = vunpack.c.l.b16 %v1223
        %v1263 = vunpack.c.l.b16 %v1224
        %v1264 = vunpack.c.l.b16 %v1225
        %v1265 = vunpack.c.l.b16 %v1226
        %v1266 = vunpack.c.l.b16 %v1227
        %v1267 = vpack.c.b16 %v1252, %v1251
        %v1268 = vpack.c.b16 %v1254, %v1253
        %v1269 = vpack.c.b16 %v1256, %v1255
        %v1270 = vpack.c.b16 %v1258, %v1257
        %v1271 = vpack.c.b16 %v1260, %v1259
        %v1272 = vpack.c.b16 %v1262, %v1261
        %v1273 = vpack.c.b16 %v1264, %v1263
        %v1274 = vpack.c.b16 %v1266, %v1265
        %1283 = vmatprep.subr.bf16.mxu0 0
        %1284 = vmatpush1.bf16.msra.mxu0 %v1267
        %1285 = vmatprep.subr.bf16.mxu0 0
        %1286 = vmatpush1.bf16.msra.mxu0 %v1268
        %1287 = vmatprep.subr.bf16.mxu0 0
        %1288 = vmatpush1.bf16.msra.mxu0 %v1269
        %1289 = vmatprep.subr.bf16.mxu0 0
        %1290 = vmatpush1.bf16.msra.mxu0 %v1270
        %1291 = vmatprep.subr.bf16.mxu0 0
        %1292 = vmatpush1.bf16.msra.mxu0 %v1271
        %1293 = vmatprep.subr.bf16.mxu0 0
        %1294 = vmatpush1.bf16.msra.mxu0 %v1272
        %1295 = vmatprep.subr.bf16.mxu0 0
        %1296 = vmatpush1.bf16.msra.mxu0 %v1273
        %1297 = vmatprep.subr.bf16.mxu0 0
        %1298 = vmatpush1.bf16.msra.mxu0 %v1274
        %1299 = vmatprep.subr.bf16.mxu0 0
        %1300 = vmatpush1.bf16.msra.mxu0 0
        %1301 = vmatprep.subr.bf16.mxu0 0
        %1302 = vmatpush1.bf16.msra.mxu0 0
        %1303 = vmatprep.subr.bf16.mxu0 0
        %1304 = vmatpush1.bf16.msra.mxu0 0
        %1305 = vmatprep.subr.bf16.mxu0 0
        %1306 = vmatpush1.bf16.msra.mxu0 0
        %1307 = vmatprep.subr.bf16.mxu0 0
        %1308 = vmatpush1.bf16.msra.mxu0 0
        %1309 = vmatprep.subr.bf16.mxu0 0
        %1310 = vmatpush1.bf16.msra.mxu0 0
        %1311 = vmatprep.subr.bf16.mxu0 0
        %1312 = vmatpush1.bf16.msra.mxu0 0
        %1313 = vmatprep.subr.bf16.mxu0 0
        %1314 = vmatpush1.bf16.msra.mxu0 0
        %1315 = vmatprep.mubr.bf16.mxu0 0
        %1316 = vmatmul.mubr.bf16.gmra.mrb[0].mxu0 %v1211
        %v1317 = vpop.f32.mrb[0].mxu0
        %v1318 = vadd.f32 %v1233, %v1317
        %v1319 = vpop.f32.mrb[0].mxu0
        %v1320 = vpop.f32.mrb[0].mxu0
        %v1321 = vpop.f32.mrb[0].mxu0
        %1322 = vdwg.mxu0
        %v1323 = vadd.f32 %v1318, %v1041
        %v1324 = vpack.c.bf16 %v1323, %v1323
        %vm1325 = vcmask 257024
        %1326 = vst.msk [vmem:[%s607] sm:$0xf] %vm1325, %v1324
        %p1327 = scmp.lt.s32.totalorder %s34, 1
        %s1328 = scalar_select %p1327, %s34, 1
        %s1329 = smul.addr %s1328, 4
        %s1330 = scalar_lea.vmem %s15, %s1329
        %p1331 = scmp.lt.s32.totalorder %s34, 1
        %s1332 = scalar_select %p1331, %s34, 1
        %s1333 = smul.addr %s1332, 2
        %s1334 = smul.addr %s1333, 4
        %s1335 = scalar_lea.vmem %s16, %s1334
        // Predicated region
        $region105: #{transformer_forward.2} parent=79 // pred_check
          %p1336 = pneg %p372
        $region106: #{transformer_forward.2} parent=79 // pred_check_branch
          %1338 = sbr.rel (%p1336) target = $region108
        $region107: #{transformer_forward.2} parent=79 // pred_region
          _
        $region108: #{transformer_forward.2} parent=79 // pred_fallthru
          _
        // Predicated region
        $region109: #{transformer_forward.2} parent=79 // pred_check
          %p1339 = pneg %p398
        $region110: #{transformer_forward.2} parent=79 // pred_check_branch
          %1341 = sbr.rel (%p1339) target = $region112
        $region111: #{transformer_forward.2} parent=79 // pred_region
          _
        $region112: #{transformer_forward.2} parent=79 // pred_fallthru
          _
      $region80: #{transformer_forward.2} parent=5 // pred_fallthru
        _
      %p1342 = scmp.le.s32.totalorder 2, %s29
      // Predicated region
      $region113: #{transformer_forward.2} parent=5 // pred_check
        %p1343 = pneg %p1342
      $region114: #{transformer_forward.2} parent=5 // pred_check_branch
        %1345 = sbr.rel (%p1343) target = $region116
      $region115: #{transformer_forward.2} parent=5 // pred_region
        %s1346 = ssub.s32 %s29, 2
        // Predicated region
        $region117: #{transformer_forward.2} parent=115 // pred_check
          %p1347 = pneg %p378
        $region118: #{transformer_forward.2} parent=115 // pred_check_branch
          %1349 = sbr.rel (%p1347) target = $region120
        $region119: #{transformer_forward.2} parent=115 // pred_region
          %p1350 = scmp.lt.s32.totalorder %s35, 1
          %s1351 = scalar_select %p1350, %s35, 1
          %s1352 = smul.addr %s1351, 4
          %s1353 = scalar_lea.vmem %s15, %s1352
        $region120: #{transformer_forward.2} parent=115 // pred_fallthru
          _
        // Predicated region
        $region121: #{transformer_forward.2} parent=115 // pred_check
          %p1354 = pneg %p404
        $region122: #{transformer_forward.2} parent=115 // pred_check_branch
          %1356 = sbr.rel (%p1354) target = $region124
        $region123: #{transformer_forward.2} parent=115 // pred_region
          %p1357 = scmp.lt.s32.totalorder %s35, 1
          %s1358 = scalar_select %p1357, %s35, 1
          %s1359 = smul.addr %s1358, 2
          %s1360 = smul.addr %s1359, 4
          %s1361 = scalar_lea.vmem %s16, %s1360
        $region124: #{transformer_forward.2} parent=115 // pred_fallthru
          _
      $region116: #{transformer_forward.2} parent=5 // pred_fallthru
        _
    $region6: #{transformer_forward.2} parent=1 // loop_footer
      %s33 = sadd.s32 1, %s29
    $region7: #{transformer_forward.2} parent=1 // loop_footer_branch
      %28 = sbr.rel target = $region3
    $region8: #{transformer_forward.2} parent=1 // loop_exit
      _
    %1362 = vsyncpa [#allocation3], 1
    %s1363 = scalar_lea.sflag [#allocation3], 1
    %1364 = vsyncpa %s1363, 1
    %1365 = vsyncpa [#allocation5], 1
    %1366 = vsyncpa [#allocation8], 1
    %1367 = vsyncpa [#allocation11], 1

</llo_original>
